<compile_context>
chip_gen: v6e
topology: v6e:2x2x1
jax: 0.10.0
libtpu: 0.0.40
codegen_flags: <defaults>
</compile_context>

<pallas_src>
import functools

import numpy as np
import jax
import jax.numpy as jnp
from jax.experimental import pallas as pl
from jax.experimental.pallas import tpu as pltpu

GN_EPS = 1e-5     # nn.GroupNorm default eps
WS_EPS = 1e-10    # StdConv2d weight-standardization eps
GROUPS = 32       # nn.GroupNorm(32, C)


# ----------------------------- host-side helpers -----------------------------

def _group_onehot(c, groups):
    """(C, GROUPS) one-hot matrix mapping each channel to its GroupNorm group."""
    cpg = c // groups
    m = np.zeros((c, groups), np.float32)
    for ch in range(c):
        m[ch, ch // cpg] = 1.0
    return m


def _standardize(w_oihw):
    """StdConv2d weight standardization: per-output-channel, biased variance."""
    m = jnp.mean(w_oihw, axis=(1, 2, 3), keepdims=True)
    v = jnp.var(w_oihw, axis=(1, 2, 3), keepdims=True)
    return (w_oihw - m) / jnp.sqrt(v + WS_EPS)


# --------------------------------- the kernel --------------------------------

def _bottleneck_kernel(x_ref, mg1_ref, mgt1_ref, gn1g_ref, gn1b_ref, w1_ref,
                       mg2_ref, mgt2_ref, gn2g_ref, gn2b_ref, w2_ref,
                       gn3g_ref, gn3b_ref, w3_ref, wd_ref, o_ref,
                       *, H, W, stride, has_downsample):
    s = stride
    Ho, Wo, Ws = H // s, W // s, W // s
    HW = H * W
    cin = x_ref.shape[-1]
    cmid = w1_ref.shape[-1]

    def gn_scale_shift(h2d, n_per_group, mg, mgt, gamma, beta):
        # Per-channel sums -> per-group stats via tiny one-hot matmuls, folded
        # into a per-channel (scale, shift).  All statistics in f32.
        s1 = jnp.sum(h2d, axis=0, keepdims=True)            # (1, C)
        s2 = jnp.sum(h2d * h2d, axis=0, keepdims=True)      # (1, C)
        gsum = jnp.dot(jnp.concatenate([s1, s2], axis=0), mg,
                       preferred_element_type=jnp.float32)  # (2, G)
        mean_g = gsum[0:1] * (1.0 / n_per_group)
        var_g = gsum[1:2] * (1.0 / n_per_group) - mean_g * mean_g
        inv_g = jax.lax.rsqrt(var_g + GN_EPS)
        back = jnp.dot(jnp.concatenate([mean_g, inv_g], axis=0), mgt,
                       preferred_element_type=jnp.float32)  # (2, C)
        mean_c, inv_c = back[0:1], back[1:2]
        scale = inv_c * gamma
        shift = beta - mean_c * scale
        return scale, shift

    # ---------------- GN1 + ReLU ----------------
    # x block layout: (s*H, W//s, Cin) with row q*H + i, col u  <->  x[i, s*u + q]
    x2d = x_ref[0].reshape(HW, cin)
    sc1, sh1 = gn_scale_shift(x2d, HW * (cin // GROUPS),
                              mg1_ref[...], mgt1_ref[...],
                              gn1g_ref[...], gn1b_ref[...])
    out1 = jnp.maximum(x2d * sc1 + sh1, 0.0)                 # (HW, Cin) f32

    # ---------------- residual path ----------------
    if has_downsample:
        # strided 1x1 conv: phase-0 columns, every s-th row, then a matmul.
        o3 = out1.reshape(s * H, Ws, cin)[0:H]               # columns x[:, ::s]
        if s > 1:
            o3 = o3.reshape(Ho, s, Ws, cin)[:, 0]            # rows x[::s, :]
        ds2d = o3.reshape(Ho * Wo, cin).astype(jnp.bfloat16)
        residual = jnp.dot(ds2d, wd_ref[...],
                           preferred_element_type=jnp.float32)
    else:
        residual = x2d                                       # stride==1, cin==cout

    # ---------------- conv1 (1x1) + GN2 + ReLU ----------------
    h = jnp.dot(out1.astype(jnp.bfloat16), w1_ref[...],
                preferred_element_type=jnp.float32)          # (HW, Cmid)
    sc2, sh2 = gn_scale_shift(h, HW * (cmid // GROUPS),
                              mg2_ref[...], mgt2_ref[...],
                              gn2g_ref[...], gn2b_ref[...])
    h = jnp.maximum(h * sc2 + sh2, 0.0).astype(jnp.bfloat16)
    h3 = h.reshape(s * H, Ws, cmid)                          # phase-packed

    # ---------------- conv2 (3x3, padding=1, stride s) ----------------
    # Padded per-phase views: P[p][a, u, :] == h_spatial[a-1, s*u + p - 1, :]
    # (zero outside), so every tap (dy, dx) at stride s is a static slice.
    P = []
    for p in range(s):
        q = (p - 1) % s
        hp = h3[q * H:(q + 1) * H]                           # (H, Ws, Cmid)
        if p == 0:
            hp = jnp.concatenate(
                [jnp.zeros((H, 1, cmid), hp.dtype), hp], axis=1)
        need = max(dx // s for dx in range(3) if dx % s == p) + Wo
        if need > hp.shape[1]:
            hp = jnp.concatenate(
                [hp, jnp.zeros((H, need - hp.shape[1], cmid), hp.dtype)],
                axis=1)
        zrow = jnp.zeros((1, hp.shape[1], cmid), hp.dtype)
        P.append(jnp.concatenate([zrow, hp, zrow], axis=0))  # (H+2, width, Cmid)

    taps = []
    for dy in range(3):
        for dx in range(3):
            pp = P[dx % s]
            rows = pp[dy:dy + s * Ho]                        # rows s*i + dy
            if s > 1:
                rows = rows.reshape(Ho, s, pp.shape[1], cmid)[:, 0]
            tap = rows[:, dx // s: dx // s + Wo, :]          # (Ho, Wo, Cmid)
            taps.append(tap.reshape(Ho * Wo, cmid))
    tap_cat = jnp.concatenate(taps, axis=1)                  # (HWout, 9*Cmid) bf16
    acc = jnp.dot(tap_cat, w2_ref[...],
                  preferred_element_type=jnp.float32)        # (HWout, Cmid) f32

    # ---------------- GN3 + ReLU + conv3 (1x1) + residual ----------------
    sc3, sh3 = gn_scale_shift(acc, Ho * Wo * (cmid // GROUPS),
                              mg2_ref[...], mgt2_ref[...],
                              gn3g_ref[...], gn3b_ref[...])
    h3n = jnp.maximum(acc * sc3 + sh3, 0.0).astype(jnp.bfloat16)
    out = jnp.dot(h3n, w3_ref[...],
                  preferred_element_type=jnp.float32) + residual
    o_ref[0] = out


# --------------------------------- the wrapper --------------------------------

def preact_bottleneck(x_nchw, params, stride=1):
    n, cin, h, w = x_nchw.shape
    cmid = params["conv1_w"].shape[0]
    cout = params["conv3_w"].shape[0]
    s = stride
    has_downsample = (stride != 1) or (cin != cout)
    assert h % s == 0 and w % s == 0, "spatial dims must be divisible by stride"
    assert cin % GROUPS == 0 and cmid % GROUPS == 0

    ho, wo, ws = h // s, w // s, w // s

    # NCHW -> NHWC, pack the `s` column phases along the row axis so the kernel
    # can express strided convs with static slices only.
    x_nhwc = jnp.transpose(x_nchw, (0, 2, 3, 1)).astype(jnp.float32)
    if s == 1:
        xk = x_nhwc
    else:
        xk = jnp.concatenate([x_nhwc[:, :, q::s, :] for q in range(s)], axis=1)
    # xk: (N, s*h, w//s, cin) with xk[n, q*h + i, u, :] = x[n, i, s*u + q, :]

    mg1_np = _group_onehot(cin, GROUPS)
    mg2_np = _group_onehot(cmid, GROUPS)
    mg1, mgt1 = jnp.asarray(mg1_np), jnp.asarray(mg1_np.T)
    mg2, mgt2 = jnp.asarray(mg2_np), jnp.asarray(mg2_np.T)

    # weight standardization in f32, then bf16 for the MXU.
    w1 = _standardize(params["conv1_w"])[:, :, 0, 0].T.astype(jnp.bfloat16)
    w2 = jnp.transpose(_standardize(params["conv2_w"]),
                       (2, 3, 1, 0)).reshape(9 * cmid, cmid).astype(jnp.bfloat16)
    w3 = _standardize(params["conv3_w"])[:, :, 0, 0].T.astype(jnp.bfloat16)
    if has_downsample:
        wd = _standardize(params["downsample_w"])[:, :, 0, 0].T.astype(jnp.bfloat16)
    else:
        wd = jnp.zeros((cin, cout), jnp.bfloat16)

    gn1g = params["gn1_gamma"][None, :].astype(jnp.float32)
    gn1b = params["gn1_beta"][None, :].astype(jnp.float32)
    gn2g = params["gn2_gamma"][None, :].astype(jnp.float32)
    gn2b = params["gn2_beta"][None, :].astype(jnp.float32)
    gn3g = params["gn3_gamma"][None, :].astype(jnp.float32)
    gn3b = params["gn3_beta"][None, :].astype(jnp.float32)

    kernel = functools.partial(_bottleneck_kernel, H=h, W=w, stride=s,
                               has_downsample=has_downsample)

    def full(arr):
        nd = arr.ndim
        return pl.BlockSpec(arr.shape, lambda i, nd=nd: (0,) * nd)

    flops = 2 * n * (h * w * cin * cmid
                     + ho * wo * 9 * cmid * cmid
                     + ho * wo * cmid * cout
                     + (ho * wo * cin * cout if has_downsample else 0))
    bytes_accessed = int(4 * (xk.size + n * ho * wo * cout)
                         + 2 * (w1.size + w2.size + w3.size + wd.size))

    out = pl.pallas_call(
        kernel,
        out_shape=jax.ShapeDtypeStruct((n, ho * wo, cout), jnp.float32),
        grid=(n,),
        in_specs=[
            pl.BlockSpec((1, s * h, ws, cin), lambda i: (i, 0, 0, 0)),  # x (phase-packed)
            full(mg1), full(mgt1),                                       # GN1 group maps
            full(gn1g), full(gn1b),                                      # GN1 gamma/beta
            full(w1),                                                    # conv1 weight
            full(mg2), full(mgt2),                                       # GN2/GN3 group maps
            full(gn2g), full(gn2b),                                      # GN2 gamma/beta
            full(w2),                                                    # conv2 weight (9*Cmid, Cmid)
            full(gn3g), full(gn3b),                                      # GN3 gamma/beta
            full(w3),                                                    # conv3 weight
            full(wd),                                                    # downsample weight
        ],
        out_specs=pl.BlockSpec((1, ho * wo, cout), lambda i: (i, 0, 0)),
        compiler_params=pltpu.CompilerParams(
            dimension_semantics=("parallel",),
            vmem_limit_bytes=56 * 1024 * 1024),
        cost_estimate=pl.CostEstimate(flops=int(flops), transcendentals=0,
                                      bytes_accessed=bytes_accessed),
    )(xk, mg1, mgt1, gn1g, gn1b, w1, mg2, mgt2, gn2g, gn2b, w2,
      gn3g, gn3b, w3, wd)

    # (N, HWout, Cout) -> NCHW
    return jnp.transpose(out.reshape(n, ho, wo, cout), (0, 3, 1, 2))


# ------------------------ deterministic parameter init ------------------------

def init_params(key, cin, cout, cmid):
    ks = jax.random.split(key, 10)
    p = {}
    p["gn1_gamma"] = 1.0 + 0.1 * jax.random.normal(ks[0], (cin,), jnp.float32)
    p["gn1_beta"] = 0.1 * jax.random.normal(ks[1], (cin,), jnp.float32)
    p["gn2_gamma"] = 1.0 + 0.1 * jax.random.normal(ks[2], (cmid,), jnp.float32)
    p["gn2_beta"] = 0.1 * jax.random.normal(ks[3], (cmid,), jnp.float32)
    p["gn3_gamma"] = 1.0 + 0.1 * jax.random.normal(ks[4], (cmid,), jnp.float32)
    p["gn3_beta"] = 0.1 * jax.random.normal(ks[5], (cmid,), jnp.float32)
    # conv weights in PyTorch OIHW layout, bias=False everywhere (matches module)
    p["conv1_w"] = jax.random.normal(ks[6], (cmid, cin, 1, 1), jnp.float32)
    p["conv2_w"] = jax.random.normal(ks[7], (cmid, cmid, 3, 3), jnp.float32)
    p["conv3_w"] = jax.random.normal(ks[8], (cout, cmid, 1, 1), jnp.float32)
    p["downsample_w"] = jax.random.normal(ks[9], (cout, cin, 1, 1), jnp.float32)
    return p


# ----------------------------- pure-JAX reference -----------------------------

def reference_forward(x_nchw, params, stride=1):
    def gn(x, gamma, beta):
        nb, c, hh, ww = x.shape
        xg = x.reshape(nb, GROUPS, c // GROUPS, hh, ww)
        m = jnp.mean(xg, axis=(2, 3, 4), keepdims=True)
        v = jnp.var(xg, axis=(2, 3, 4), keepdims=True)
        xn = ((xg - m) / jnp.sqrt(v + GN_EPS)).reshape(nb, c, hh, ww)
        return xn * gamma[None, :, None, None] + beta[None, :, None, None]

    def conv(x, w, st, pad):
        ws = _standardize(w)
        return jax.lax.conv_general_dilated(
            x, ws, window_strides=(st, st),
            padding=[(pad, pad), (pad, pad)],
            dimension_numbers=("NCHW", "OIHW", "NCHW"))

    cin, cout = x_nchw.shape[1], params["conv3_w"].shape[0]
    out = jax.nn.relu(gn(x_nchw, params["gn1_gamma"], params["gn1_beta"]))
    residual = x_nchw
    if stride != 1 or cin != cout:
        residual = conv(out, params["downsample_w"], stride, 0)
    out = conv(out, params["conv1_w"], 1, 0)
    out = conv(jax.nn.relu(gn(out, params["gn2_gamma"], params["gn2_beta"])),
               params["conv2_w"], stride, 1)
    out = conv(jax.nn.relu(gn(out, params["gn3_gamma"], params["gn3_beta"])),
               params["conv3_w"], 1, 0)
    return out + residual


if __name__ == "__main__":
    key = jax.random.PRNGKey(0)

    # (cin, cout, cmid, stride): projection shortcut, strided block, identity.
    configs = [
        (64, 128, 32, 1),
        (64, 128, 32, 2),
        (64, 64, 32, 1),
    ]
    N, H, W = 2, 16, 16

    for idx, (cin, cout, cmid, stride) in enumerate(configs):
        kx, kp, key = jax.random.split(key, 3)
        x = jax.random.normal(kx, (N, cin, H, W), jnp.float32)
        params = init_params(kp, cin, cout, cmid)

        y = jax.block_until_ready(preact_bottleneck(x, params, stride=stride))
        y_ref = reference_forward(x, params, stride=stride)

        assert y.shape == y_ref.shape, (idx, y.shape, y_ref.shape)
        rel_err = float(jnp.max(jnp.abs(y - y_ref)) /
                        (jnp.max(jnp.abs(y_ref)) + 1e-6))
        assert rel_err < 5e-2, f"config {idx}: kernel/reference mismatch {rel_err}"

    print("KERNEL_OK")
</pallas_src>

<mosaic_0001>
module attributes {stable_mosaic.version = 11 : i64} {
  func.func @_bottleneck_kernel(%arg0: i32, %arg1: memref<1x16x16x64xf32, #tpu.memory_space<vmem>>, %arg2: memref<64x32xf32, #tpu.memory_space<vmem>>, %arg3: memref<32x64xf32, #tpu.memory_space<vmem>>, %arg4: memref<1x64xf32, #tpu.memory_space<vmem>>, %arg5: memref<1x64xf32, #tpu.memory_space<vmem>>, %arg6: memref<64x32xbf16, #tpu.memory_space<vmem>>, %arg7: memref<32x32xf32, #tpu.memory_space<vmem>>, %arg8: memref<32x32xf32, #tpu.memory_space<vmem>>, %arg9: memref<1x32xf32, #tpu.memory_space<vmem>>, %arg10: memref<1x32xf32, #tpu.memory_space<vmem>>, %arg11: memref<288x32xbf16, #tpu.memory_space<vmem>>, %arg12: memref<1x32xf32, #tpu.memory_space<vmem>>, %arg13: memref<1x32xf32, #tpu.memory_space<vmem>>, %arg14: memref<32x128xbf16, #tpu.memory_space<vmem>>, %arg15: memref<64x128xbf16, #tpu.memory_space<vmem>>, %arg16: memref<1x256x128xf32, #tpu.memory_space<vmem>>) attributes {dimension_semantics = [#tpu.dimension_semantics<parallel>], iteration_bounds = array<i64: 2>, scalar_prefetch = 0 : i64, scratch_operands = 0 : i64, tpu.core_type = #tpu.core_type<tc>, window_params = [{transform_indices = @transform_0, window_bounds = array<i64: 1, 16, 16, 64>}, {pipeline_mode = #tpu.pipeline_mode<synchronous>, transform_indices = @transform_1, window_bounds = array<i64: 64, 32>}, {pipeline_mode = #tpu.pipeline_mode<synchronous>, transform_indices = @transform_2, window_bounds = array<i64: 32, 64>}, {pipeline_mode = #tpu.pipeline_mode<synchronous>, transform_indices = @transform_3, window_bounds = array<i64: 1, 64>}, {pipeline_mode = #tpu.pipeline_mode<synchronous>, transform_indices = @transform_4, window_bounds = array<i64: 1, 64>}, {pipeline_mode = #tpu.pipeline_mode<synchronous>, transform_indices = @transform_5, window_bounds = array<i64: 64, 32>}, {pipeline_mode = #tpu.pipeline_mode<synchronous>, transform_indices = @transform_6, window_bounds = array<i64: 32, 32>}, {pipeline_mode = #tpu.pipeline_mode<synchronous>, transform_indices = @transform_7, window_bounds = array<i64: 32, 32>}, {pipeline_mode = #tpu.pipeline_mode<synchronous>, transform_indices = @transform_8, window_bounds = array<i64: 1, 32>}, {pipeline_mode = #tpu.pipeline_mode<synchronous>, transform_indices = @transform_9, window_bounds = array<i64: 1, 32>}, {pipeline_mode = #tpu.pipeline_mode<synchronous>, transform_indices = @transform_10, window_bounds = array<i64: 288, 32>}, {pipeline_mode = #tpu.pipeline_mode<synchronous>, transform_indices = @transform_11, window_bounds = array<i64: 1, 32>}, {pipeline_mode = #tpu.pipeline_mode<synchronous>, transform_indices = @transform_12, window_bounds = array<i64: 1, 32>}, {pipeline_mode = #tpu.pipeline_mode<synchronous>, transform_indices = @transform_13, window_bounds = array<i64: 32, 128>}, {pipeline_mode = #tpu.pipeline_mode<synchronous>, transform_indices = @transform_14, window_bounds = array<i64: 64, 128>}, {transform_indices = @transform_15, window_bounds = array<i64: 1, 256, 128>}]} {
    %c0 = arith.constant 0 : index
    %c0_0 = arith.constant 0 : index
    %c0_1 = arith.constant 0 : index
    %c0_2 = arith.constant 0 : index
    %0 = vector.load %arg1[%c0, %c0_0, %c0_1, %c0_2] : memref<1x16x16x64xf32, #tpu.memory_space<vmem>>, vector<1x16x16x64xf32>
    %1 = vector.shape_cast %0 : vector<1x16x16x64xf32> to vector<16x16x64xf32>
    %2 = vector.shape_cast %1 : vector<16x16x64xf32> to vector<256x64xf32>
    %c0_3 = arith.constant 0 : index
    %c0_4 = arith.constant 0 : index
    %3 = vector.load %arg2[%c0_3, %c0_4] : memref<64x32xf32, #tpu.memory_space<vmem>>, vector<64x32xf32>
    %c0_5 = arith.constant 0 : index
    %c0_6 = arith.constant 0 : index
    %4 = vector.load %arg3[%c0_5, %c0_6] : memref<32x64xf32, #tpu.memory_space<vmem>>, vector<32x64xf32>
    %c0_7 = arith.constant 0 : index
    %c0_8 = arith.constant 0 : index
    %5 = vector.load %arg4[%c0_7, %c0_8] : memref<1x64xf32, #tpu.memory_space<vmem>>, vector<1x64xf32>
    %c0_9 = arith.constant 0 : index
    %c0_10 = arith.constant 0 : index
    %6 = vector.load %arg5[%c0_9, %c0_10] : memref<1x64xf32, #tpu.memory_space<vmem>>, vector<1x64xf32>
    %cst = arith.constant dense<0.000000e+00> : vector<64xf32>
    %7 = vector.multi_reduction <add>, %2, %cst [0] : vector<256x64xf32> to vector<64xf32>
    %8 = vector.shape_cast %7 : vector<64xf32> to vector<1x64xf32>
    %9 = arith.mulf %2, %2 : vector<256x64xf32>
    %cst_11 = arith.constant dense<0.000000e+00> : vector<64xf32>
    %10 = vector.multi_reduction <add>, %9, %cst_11 [0] : vector<256x64xf32> to vector<64xf32>
    %11 = vector.shape_cast %10 : vector<64xf32> to vector<1x64xf32>
    %12 = tpu.concatenate %8, %11 in 0 : vector<1x64xf32>, vector<1x64xf32> -> vector<2x64xf32>
    %cst_12 = arith.constant dense<0.000000e+00> : vector<2x32xf32>
    %13 = tpu.matmul %12, %3, %cst_12 {dimension_numbers = #tpu.dot_dimension_numbers<[1], [0], [0], [1], [0, 0, 1, 1], [], []>} : vector<2x64xf32>, vector<64x32xf32>, vector<2x32xf32> -> vector<2x32xf32>
    %14 = vector.extract_strided_slice %13 {offsets = [0, 0], sizes = [1, 32], strides = [1, 1]} : vector<2x32xf32> to vector<1x32xf32>
    %cst_13 = arith.constant 0.001953125 : f32
    %15 = vector.broadcast %cst_13 : f32 to vector<1x32xf32>
    %16 = arith.mulf %14, %15 : vector<1x32xf32>
    %17 = vector.extract_strided_slice %13 {offsets = [1, 0], sizes = [1, 32], strides = [1, 1]} : vector<2x32xf32> to vector<1x32xf32>
    %cst_14 = arith.constant 0.001953125 : f32
    %18 = vector.broadcast %cst_14 : f32 to vector<1x32xf32>
    %19 = arith.mulf %17, %18 : vector<1x32xf32>
    %20 = arith.mulf %16, %16 : vector<1x32xf32>
    %21 = arith.subf %19, %20 : vector<1x32xf32>
    %cst_15 = arith.constant 9.99999974E-6 : f32
    %22 = vector.broadcast %cst_15 : f32 to vector<1x32xf32>
    %23 = arith.addf %21, %22 : vector<1x32xf32>
    %24 = math.rsqrt %23 : vector<1x32xf32>
    %25 = tpu.concatenate %16, %24 in 0 : vector<1x32xf32>, vector<1x32xf32> -> vector<2x32xf32>
    %cst_16 = arith.constant dense<0.000000e+00> : vector<2x64xf32>
    %26 = tpu.matmul %25, %4, %cst_16 {dimension_numbers = #tpu.dot_dimension_numbers<[1], [0], [0], [1], [0, 0, 1, 1], [], []>} : vector<2x32xf32>, vector<32x64xf32>, vector<2x64xf32> -> vector<2x64xf32>
    %27 = vector.extract_strided_slice %26 {offsets = [0, 0], sizes = [1, 64], strides = [1, 1]} : vector<2x64xf32> to vector<1x64xf32>
    %28 = vector.extract_strided_slice %26 {offsets = [1, 0], sizes = [1, 64], strides = [1, 1]} : vector<2x64xf32> to vector<1x64xf32>
    %29 = arith.mulf %28, %5 : vector<1x64xf32>
    %30 = arith.mulf %27, %29 : vector<1x64xf32>
    %31 = arith.subf %6, %30 : vector<1x64xf32>
    %32 = vector.broadcast %29 : vector<1x64xf32> to vector<256x64xf32>
    %33 = arith.mulf %2, %32 : vector<256x64xf32>
    %34 = vector.broadcast %31 : vector<1x64xf32> to vector<256x64xf32>
    %35 = arith.addf %33, %34 : vector<256x64xf32>
    %cst_17 = arith.constant 0.000000e+00 : f32
    %36 = vector.broadcast %cst_17 : f32 to vector<256x64xf32>
    %37 = arith.maximumf %35, %36 : vector<256x64xf32>
    %38 = vector.shape_cast %37 : vector<256x64xf32> to vector<16x16x64xf32>
    %39 = vector.shape_cast %38 : vector<16x16x64xf32> to vector<256x64xf32>
    %40 = arith.truncf %39 : vector<256x64xf32> to vector<256x64xbf16>
    %c0_18 = arith.constant 0 : index
    %c0_19 = arith.constant 0 : index
    %41 = vector.load %arg15[%c0_18, %c0_19] : memref<64x128xbf16, #tpu.memory_space<vmem>>, vector<64x128xbf16>
    %cst_20 = arith.constant dense<0.000000e+00> : vector<256x128xf32>
    %42 = tpu.matmul %40, %41, %cst_20 {dimension_numbers = #tpu.dot_dimension_numbers<[1], [0], [0], [1], [0, 0, 1, 1], [], []>} : vector<256x64xbf16>, vector<64x128xbf16>, vector<256x128xf32> -> vector<256x128xf32>
    %43 = arith.truncf %37 : vector<256x64xf32> to vector<256x64xbf16>
    %c0_21 = arith.constant 0 : index
    %c0_22 = arith.constant 0 : index
    %44 = vector.load %arg6[%c0_21, %c0_22] : memref<64x32xbf16, #tpu.memory_space<vmem>>, vector<64x32xbf16>
    %cst_23 = arith.constant dense<0.000000e+00> : vector<256x32xf32>
    %45 = tpu.matmul %43, %44, %cst_23 {dimension_numbers = #tpu.dot_dimension_numbers<[1], [0], [0], [1], [0, 0, 1, 1], [], []>} : vector<256x64xbf16>, vector<64x32xbf16>, vector<256x32xf32> -> vector<256x32xf32>
    %c0_24 = arith.constant 0 : index
    %c0_25 = arith.constant 0 : index
    %46 = vector.load %arg7[%c0_24, %c0_25] : memref<32x32xf32, #tpu.memory_space<vmem>>, vector<32x32xf32>
    %c0_26 = arith.constant 0 : index
    %c0_27 = arith.constant 0 : index
    %47 = vector.load %arg8[%c0_26, %c0_27] : memref<32x32xf32, #tpu.memory_space<vmem>>, vector<32x32xf32>
    %c0_28 = arith.constant 0 : index
    %c0_29 = arith.constant 0 : index
    %48 = vector.load %arg9[%c0_28, %c0_29] : memref<1x32xf32, #tpu.memory_space<vmem>>, vector<1x32xf32>
    %c0_30 = arith.constant 0 : index
    %c0_31 = arith.constant 0 : index
    %49 = vector.load %arg10[%c0_30, %c0_31] : memref<1x32xf32, #tpu.memory_space<vmem>>, vector<1x32xf32>
    %cst_32 = arith.constant dense<0.000000e+00> : vector<32xf32>
    %50 = vector.multi_reduction <add>, %45, %cst_32 [0] : vector<256x32xf32> to vector<32xf32>
    %51 = vector.shape_cast %50 : vector<32xf32> to vector<1x32xf32>
    %52 = arith.mulf %45, %45 : vector<256x32xf32>
    %cst_33 = arith.constant dense<0.000000e+00> : vector<32xf32>
    %53 = vector.multi_reduction <add>, %52, %cst_33 [0] : vector<256x32xf32> to vector<32xf32>
    %54 = vector.shape_cast %53 : vector<32xf32> to vector<1x32xf32>
    %55 = tpu.concatenate %51, %54 in 0 : vector<1x32xf32>, vector<1x32xf32> -> vector<2x32xf32>
    %cst_34 = arith.constant dense<0.000000e+00> : vector<2x32xf32>
    %56 = tpu.matmul %55, %46, %cst_34 {dimension_numbers = #tpu.dot_dimension_numbers<[1], [0], [0], [1], [0, 0, 1, 1], [], []>} : vector<2x32xf32>, vector<32x32xf32>, vector<2x32xf32> -> vector<2x32xf32>
    %57 = vector.extract_strided_slice %56 {offsets = [0, 0], sizes = [1, 32], strides = [1, 1]} : vector<2x32xf32> to vector<1x32xf32>
    %cst_35 = arith.constant 3.906250e-03 : f32
    %58 = vector.broadcast %cst_35 : f32 to vector<1x32xf32>
    %59 = arith.mulf %57, %58 : vector<1x32xf32>
    %60 = vector.extract_strided_slice %56 {offsets = [1, 0], sizes = [1, 32], strides = [1, 1]} : vector<2x32xf32> to vector<1x32xf32>
    %cst_36 = arith.constant 3.906250e-03 : f32
    %61 = vector.broadcast %cst_36 : f32 to vector<1x32xf32>
    %62 = arith.mulf %60, %61 : vector<1x32xf32>
    %63 = arith.mulf %59, %59 : vector<1x32xf32>
    %64 = arith.subf %62, %63 : vector<1x32xf32>
    %cst_37 = arith.constant 9.99999974E-6 : f32
    %65 = vector.broadcast %cst_37 : f32 to vector<1x32xf32>
    %66 = arith.addf %64, %65 : vector<1x32xf32>
    %67 = math.rsqrt %66 : vector<1x32xf32>
    %68 = tpu.concatenate %59, %67 in 0 : vector<1x32xf32>, vector<1x32xf32> -> vector<2x32xf32>
    %cst_38 = arith.constant dense<0.000000e+00> : vector<2x32xf32>
    %69 = tpu.matmul %68, %47, %cst_38 {dimension_numbers = #tpu.dot_dimension_numbers<[1], [0], [0], [1], [0, 0, 1, 1], [], []>} : vector<2x32xf32>, vector<32x32xf32>, vector<2x32xf32> -> vector<2x32xf32>
    %70 = vector.extract_strided_slice %69 {offsets = [0, 0], sizes = [1, 32], strides = [1, 1]} : vector<2x32xf32> to vector<1x32xf32>
    %71 = vector.extract_strided_slice %69 {offsets = [1, 0], sizes = [1, 32], strides = [1, 1]} : vector<2x32xf32> to vector<1x32xf32>
    %72 = arith.mulf %71, %48 : vector<1x32xf32>
    %73 = arith.mulf %70, %72 : vector<1x32xf32>
    %74 = arith.subf %49, %73 : vector<1x32xf32>
    %75 = vector.broadcast %72 : vector<1x32xf32> to vector<256x32xf32>
    %76 = arith.mulf %45, %75 : vector<256x32xf32>
    %77 = vector.broadcast %74 : vector<1x32xf32> to vector<256x32xf32>
    %78 = arith.addf %76, %77 : vector<256x32xf32>
    %cst_39 = arith.constant 0.000000e+00 : f32
    %79 = vector.broadcast %cst_39 : f32 to vector<256x32xf32>
    %80 = arith.maximumf %78, %79 : vector<256x32xf32>
    %81 = arith.truncf %80 : vector<256x32xf32> to vector<256x32xbf16>
    %82 = vector.shape_cast %81 : vector<256x32xbf16> to vector<16x16x32xbf16>
    %cst_40 = arith.constant 0.000000e+00 : bf16
    %83 = vector.broadcast %cst_40 : bf16 to vector<16x1x32xbf16>
    %84 = tpu.concatenate %83, %82 in 1 : vector<16x1x32xbf16>, vector<16x16x32xbf16> -> vector<16x17x32xbf16>
    %cst_41 = arith.constant 0.000000e+00 : bf16
    %85 = vector.broadcast %cst_41 : bf16 to vector<16x1x32xbf16>
    %86 = tpu.concatenate %84, %85 in 1 : vector<16x17x32xbf16>, vector<16x1x32xbf16> -> vector<16x18x32xbf16>
    %cst_42 = arith.constant 0.000000e+00 : bf16
    %87 = vector.broadcast %cst_42 : bf16 to vector<1x18x32xbf16>
    %88 = tpu.concatenate %87, %86, %87 in 0 : vector<1x18x32xbf16>, vector<16x18x32xbf16>, vector<1x18x32xbf16> -> vector<18x18x32xbf16>
    %89 = vector.extract_strided_slice %88 {offsets = [0, 0, 0], sizes = [16, 18, 32], strides = [1, 1, 1]} : vector<18x18x32xbf16> to vector<16x18x32xbf16>
    %90 = vector.extract_strided_slice %89 {offsets = [0, 0, 0], sizes = [16, 16, 32], strides = [1, 1, 1]} : vector<16x18x32xbf16> to vector<16x16x32xbf16>
    %91 = vector.shape_cast %90 : vector<16x16x32xbf16> to vector<256x32xbf16>
    %92 = vector.extract_strided_slice %88 {offsets = [0, 0, 0], sizes = [16, 18, 32], strides = [1, 1, 1]} : vector<18x18x32xbf16> to vector<16x18x32xbf16>
    %93 = vector.extract_strided_slice %92 {offsets = [0, 1, 0], sizes = [16, 16, 32], strides = [1, 1, 1]} : vector<16x18x32xbf16> to vector<16x16x32xbf16>
    %94 = vector.shape_cast %93 : vector<16x16x32xbf16> to vector<256x32xbf16>
    %95 = vector.extract_strided_slice %88 {offsets = [0, 0, 0], sizes = [16, 18, 32], strides = [1, 1, 1]} : vector<18x18x32xbf16> to vector<16x18x32xbf16>
    %96 = vector.extract_strided_slice %95 {offsets = [0, 2, 0], sizes = [16, 16, 32], strides = [1, 1, 1]} : vector<16x18x32xbf16> to vector<16x16x32xbf16>
    %97 = vector.shape_cast %96 : vector<16x16x32xbf16> to vector<256x32xbf16>
    %98 = vector.extract_strided_slice %88 {offsets = [1, 0, 0], sizes = [16, 18, 32], strides = [1, 1, 1]} : vector<18x18x32xbf16> to vector<16x18x32xbf16>
    %99 = vector.extract_strided_slice %98 {offsets = [0, 0, 0], sizes = [16, 16, 32], strides = [1, 1, 1]} : vector<16x18x32xbf16> to vector<16x16x32xbf16>
    %100 = vector.shape_cast %99 : vector<16x16x32xbf16> to vector<256x32xbf16>
    %101 = vector.extract_strided_slice %88 {offsets = [1, 0, 0], sizes = [16, 18, 32], strides = [1, 1, 1]} : vector<18x18x32xbf16> to vector<16x18x32xbf16>
    %102 = vector.extract_strided_slice %101 {offsets = [0, 1, 0], sizes = [16, 16, 32], strides = [1, 1, 1]} : vector<16x18x32xbf16> to vector<16x16x32xbf16>
    %103 = vector.shape_cast %102 : vector<16x16x32xbf16> to vector<256x32xbf16>
    %104 = vector.extract_strided_slice %88 {offsets = [1, 0, 0], sizes = [16, 18, 32], strides = [1, 1, 1]} : vector<18x18x32xbf16> to vector<16x18x32xbf16>
    %105 = vector.extract_strided_slice %104 {offsets = [0, 2, 0], sizes = [16, 16, 32], strides = [1, 1, 1]} : vector<16x18x32xbf16> to vector<16x16x32xbf16>
    %106 = vector.shape_cast %105 : vector<16x16x32xbf16> to vector<256x32xbf16>
    %107 = vector.extract_strided_slice %88 {offsets = [2, 0, 0], sizes = [16, 18, 32], strides = [1, 1, 1]} : vector<18x18x32xbf16> to vector<16x18x32xbf16>
    %108 = vector.extract_strided_slice %107 {offsets = [0, 0, 0], sizes = [16, 16, 32], strides = [1, 1, 1]} : vector<16x18x32xbf16> to vector<16x16x32xbf16>
    %109 = vector.shape_cast %108 : vector<16x16x32xbf16> to vector<256x32xbf16>
    %110 = vector.extract_strided_slice %88 {offsets = [2, 0, 0], sizes = [16, 18, 32], strides = [1, 1, 1]} : vector<18x18x32xbf16> to vector<16x18x32xbf16>
    %111 = vector.extract_strided_slice %110 {offsets = [0, 1, 0], sizes = [16, 16, 32], strides = [1, 1, 1]} : vector<16x18x32xbf16> to vector<16x16x32xbf16>
    %112 = vector.shape_cast %111 : vector<16x16x32xbf16> to vector<256x32xbf16>
    %113 = vector.extract_strided_slice %88 {offsets = [2, 0, 0], sizes = [16, 18, 32], strides = [1, 1, 1]} : vector<18x18x32xbf16> to vector<16x18x32xbf16>
    %114 = vector.extract_strided_slice %113 {offsets = [0, 2, 0], sizes = [16, 16, 32], strides = [1, 1, 1]} : vector<16x18x32xbf16> to vector<16x16x32xbf16>
    %115 = vector.shape_cast %114 : vector<16x16x32xbf16> to vector<256x32xbf16>
    %116 = tpu.concatenate %91, %94, %97, %100, %103, %106, %109, %112, %115 in 1 : vector<256x32xbf16>, vector<256x32xbf16>, vector<256x32xbf16>, vector<256x32xbf16>, vector<256x32xbf16>, vector<256x32xbf16>, vector<256x32xbf16>, vector<256x32xbf16>, vector<256x32xbf16> -> vector<256x288xbf16>
    %c0_43 = arith.constant 0 : index
    %c0_44 = arith.constant 0 : index
    %117 = vector.load %arg11[%c0_43, %c0_44] : memref<288x32xbf16, #tpu.memory_space<vmem>>, vector<288x32xbf16>
    %cst_45 = arith.constant dense<0.000000e+00> : vector<256x32xf32>
    %118 = tpu.matmul %116, %117, %cst_45 {dimension_numbers = #tpu.dot_dimension_numbers<[1], [0], [0], [1], [0, 0, 1, 1], [], []>} : vector<256x288xbf16>, vector<288x32xbf16>, vector<256x32xf32> -> vector<256x32xf32>
    %c0_46 = arith.constant 0 : index
    %c0_47 = arith.constant 0 : index
    %119 = vector.load %arg7[%c0_46, %c0_47] : memref<32x32xf32, #tpu.memory_space<vmem>>, vector<32x32xf32>
    %c0_48 = arith.constant 0 : index
    %c0_49 = arith.constant 0 : index
    %120 = vector.load %arg8[%c0_48, %c0_49] : memref<32x32xf32, #tpu.memory_space<vmem>>, vector<32x32xf32>
    %c0_50 = arith.constant 0 : index
    %c0_51 = arith.constant 0 : index
    %121 = vector.load %arg12[%c0_50, %c0_51] : memref<1x32xf32, #tpu.memory_space<vmem>>, vector<1x32xf32>
    %c0_52 = arith.constant 0 : index
    %c0_53 = arith.constant 0 : index
    %122 = vector.load %arg13[%c0_52, %c0_53] : memref<1x32xf32, #tpu.memory_space<vmem>>, vector<1x32xf32>
    %cst_54 = arith.constant dense<0.000000e+00> : vector<32xf32>
    %123 = vector.multi_reduction <add>, %118, %cst_54 [0] : vector<256x32xf32> to vector<32xf32>
    %124 = vector.shape_cast %123 : vector<32xf32> to vector<1x32xf32>
    %125 = arith.mulf %118, %118 : vector<256x32xf32>
    %cst_55 = arith.constant dense<0.000000e+00> : vector<32xf32>
    %126 = vector.multi_reduction <add>, %125, %cst_55 [0] : vector<256x32xf32> to vector<32xf32>
    %127 = vector.shape_cast %126 : vector<32xf32> to vector<1x32xf32>
    %128 = tpu.concatenate %124, %127 in 0 : vector<1x32xf32>, vector<1x32xf32> -> vector<2x32xf32>
    %cst_56 = arith.constant dense<0.000000e+00> : vector<2x32xf32>
    %129 = tpu.matmul %128, %119, %cst_56 {dimension_numbers = #tpu.dot_dimension_numbers<[1], [0], [0], [1], [0, 0, 1, 1], [], []>} : vector<2x32xf32>, vector<32x32xf32>, vector<2x32xf32> -> vector<2x32xf32>
    %130 = vector.extract_strided_slice %129 {offsets = [0, 0], sizes = [1, 32], strides = [1, 1]} : vector<2x32xf32> to vector<1x32xf32>
    %cst_57 = arith.constant 3.906250e-03 : f32
    %131 = vector.broadcast %cst_57 : f32 to vector<1x32xf32>
    %132 = arith.mulf %130, %131 : vector<1x32xf32>
    %133 = vector.extract_strided_slice %129 {offsets = [1, 0], sizes = [1, 32], strides = [1, 1]} : vector<2x32xf32> to vector<1x32xf32>
    %cst_58 = arith.constant 3.906250e-03 : f32
    %134 = vector.broadcast %cst_58 : f32 to vector<1x32xf32>
    %135 = arith.mulf %133, %134 : vector<1x32xf32>
    %136 = arith.mulf %132, %132 : vector<1x32xf32>
    %137 = arith.subf %135, %136 : vector<1x32xf32>
    %cst_59 = arith.constant 9.99999974E-6 : f32
    %138 = vector.broadcast %cst_59 : f32 to vector<1x32xf32>
    %139 = arith.addf %137, %138 : vector<1x32xf32>
    %140 = math.rsqrt %139 : vector<1x32xf32>
    %141 = tpu.concatenate %132, %140 in 0 : vector<1x32xf32>, vector<1x32xf32> -> vector<2x32xf32>
    %cst_60 = arith.constant dense<0.000000e+00> : vector<2x32xf32>
    %142 = tpu.matmul %141, %120, %cst_60 {dimension_numbers = #tpu.dot_dimension_numbers<[1], [0], [0], [1], [0, 0, 1, 1], [], []>} : vector<2x32xf32>, vector<32x32xf32>, vector<2x32xf32> -> vector<2x32xf32>
    %143 = vector.extract_strided_slice %142 {offsets = [0, 0], sizes = [1, 32], strides = [1, 1]} : vector<2x32xf32> to vector<1x32xf32>
    %144 = vector.extract_strided_slice %142 {offsets = [1, 0], sizes = [1, 32], strides = [1, 1]} : vector<2x32xf32> to vector<1x32xf32>
    %145 = arith.mulf %144, %121 : vector<1x32xf32>
    %146 = arith.mulf %143, %145 : vector<1x32xf32>
    %147 = arith.subf %122, %146 : vector<1x32xf32>
    %148 = vector.broadcast %145 : vector<1x32xf32> to vector<256x32xf32>
    %149 = arith.mulf %118, %148 : vector<256x32xf32>
    %150 = vector.broadcast %147 : vector<1x32xf32> to vector<256x32xf32>
    %151 = arith.addf %149, %150 : vector<256x32xf32>
    %cst_61 = arith.constant 0.000000e+00 : f32
    %152 = vector.broadcast %cst_61 : f32 to vector<256x32xf32>
    %153 = arith.maximumf %151, %152 : vector<256x32xf32>
    %154 = arith.truncf %153 : vector<256x32xf32> to vector<256x32xbf16>
    %c0_62 = arith.constant 0 : index
    %c0_63 = arith.constant 0 : index
    %155 = vector.load %arg14[%c0_62, %c0_63] : memref<32x128xbf16, #tpu.memory_space<vmem>>, vector<32x128xbf16>
    %cst_64 = arith.constant dense<0.000000e+00> : vector<256x128xf32>
    %156 = tpu.matmul %154, %155, %cst_64 {dimension_numbers = #tpu.dot_dimension_numbers<[1], [0], [0], [1], [0, 0, 1, 1], [], []>} : vector<256x32xbf16>, vector<32x128xbf16>, vector<256x128xf32> -> vector<256x128xf32>
    %157 = arith.addf %156, %42 : vector<256x128xf32>
    %c0_65 = arith.constant 0 : index
    %c0_66 = arith.constant 0 : index
    %c0_67 = arith.constant 0 : index
    %158 = vector.load %arg16[%c0_65, %c0_66, %c0_67] : memref<1x256x128xf32, #tpu.memory_space<vmem>>, vector<1x256x128xf32>
    %159 = vector.shape_cast %158 : vector<1x256x128xf32> to vector<256x128xf32>
    %160 = vector.shape_cast %157 : vector<256x128xf32> to vector<1x256x128xf32>
    tpu.vector_store %arg16[%c0_65, %c0_66, %c0_67], %160 {strides = array<i32>} : memref<1x256x128xf32, #tpu.memory_space<vmem>>, vector<1x256x128xf32>,
    return
  }
  func.func @transform_0(%arg0: i32) -> (i32, i32, i32, i32) {
    %c0_i32 = arith.constant 0 : i32
    %c0_i32_0 = arith.constant 0 : i32
    %c0_i32_1 = arith.constant 0 : i32
    %c0_i32_2 = arith.constant 0 : i32
    return %arg0, %c0_i32, %c0_i32_0, %c0_i32_1 : i32, i32, i32, i32
  }
  func.func @transform_1(%arg0: i32) -> (i32, i32) {
    %c0_i32 = arith.constant 0 : i32
    %c0_i32_0 = arith.constant 0 : i32
    %c0_i32_1 = arith.constant 0 : i32
    return %c0_i32, %c0_i32_0 : i32, i32
  }
  func.func @transform_2(%arg0: i32) -> (i32, i32) {
    %c0_i32 = arith.constant 0 : i32
    %c0_i32_0 = arith.constant 0 : i32
    %c0_i32_1 = arith.constant 0 : i32
    return %c0_i32, %c0_i32_0 : i32, i32
  }
  func.func @transform_3(%arg0: i32) -> (i32, i32) {
    %c0_i32 = arith.constant 0 : i32
    %c0_i32_0 = arith.constant 0 : i32
    %c0_i32_1 = arith.constant 0 : i32
    return %c0_i32, %c0_i32_0 : i32, i32
  }
  func.func @transform_4(%arg0: i32) -> (i32, i32) {
    %c0_i32 = arith.constant 0 : i32
    %c0_i32_0 = arith.constant 0 : i32
    %c0_i32_1 = arith.constant 0 : i32
    return %c0_i32, %c0_i32_0 : i32, i32
  }
  func.func @transform_5(%arg0: i32) -> (i32, i32) {
    %c0_i32 = arith.constant 0 : i32
    %c0_i32_0 = arith.constant 0 : i32
    %c0_i32_1 = arith.constant 0 : i32
    return %c0_i32, %c0_i32_0 : i32, i32
  }
  func.func @transform_6(%arg0: i32) -> (i32, i32) {
    %c0_i32 = arith.constant 0 : i32
    %c0_i32_0 = arith.constant 0 : i32
    %c0_i32_1 = arith.constant 0 : i32
    return %c0_i32, %c0_i32_0 : i32, i32
  }
  func.func @transform_7(%arg0: i32) -> (i32, i32) {
    %c0_i32 = arith.constant 0 : i32
    %c0_i32_0 = arith.constant 0 : i32
    %c0_i32_1 = arith.constant 0 : i32
    return %c0_i32, %c0_i32_0 : i32, i32
  }
  func.func @transform_8(%arg0: i32) -> (i32, i32) {
    %c0_i32 = arith.constant 0 : i32
    %c0_i32_0 = arith.constant 0 : i32
    %c0_i32_1 = arith.constant 0 : i32
    return %c0_i32, %c0_i32_0 : i32, i32
  }
  func.func @transform_9(%arg0: i32) -> (i32, i32) {
    %c0_i32 = arith.constant 0 : i32
    %c0_i32_0 = arith.constant 0 : i32
    %c0_i32_1 = arith.constant 0 : i32
    return %c0_i32, %c0_i32_0 : i32, i32
  }
  func.func @transform_10(%arg0: i32) -> (i32, i32) {
    %c0_i32 = arith.constant 0 : i32
    %c0_i32_0 = arith.constant 0 : i32
    %c0_i32_1 = arith.constant 0 : i32
    return %c0_i32, %c0_i32_0 : i32, i32
  }
  func.func @transform_11(%arg0: i32) -> (i32, i32) {
    %c0_i32 = arith.constant 0 : i32
    %c0_i32_0 = arith.constant 0 : i32
    %c0_i32_1 = arith.constant 0 : i32
    return %c0_i32, %c0_i32_0 : i32, i32
  }
  func.func @transform_12(%arg0: i32) -> (i32, i32) {
    %c0_i32 = arith.constant 0 : i32
    %c0_i32_0 = arith.constant 0 : i32
    %c0_i32_1 = arith.constant 0 : i32
    return %c0_i32, %c0_i32_0 : i32, i32
  }
  func.func @transform_13(%arg0: i32) -> (i32, i32) {
    %c0_i32 = arith.constant 0 : i32
    %c0_i32_0 = arith.constant 0 : i32
    %c0_i32_1 = arith.constant 0 : i32
    return %c0_i32, %c0_i32_0 : i32, i32
  }
  func.func @transform_14(%arg0: i32) -> (i32, i32) {
    %c0_i32 = arith.constant 0 : i32
    %c0_i32_0 = arith.constant 0 : i32
    %c0_i32_1 = arith.constant 0 : i32
    return %c0_i32, %c0_i32_0 : i32, i32
  }
  func.func @transform_15(%arg0: i32) -> (i32, i32, i32) {
    %c0_i32 = arith.constant 0 : i32
    %c0_i32_0 = arith.constant 0 : i32
    %c0_i32_1 = arith.constant 0 : i32
    return %arg0, %c0_i32, %c0_i32_0 : i32, i32, i32
  }
}

</mosaic_0001>

<llo_original>
// kernel: tpu_custom_call.1
$region0: #{tpu_custom_call.1}
  #allocation0 [shape = 'u32[]', space=smem, size = 0x4, offset = 0x4, fixed_abs, tag = 'smem constant byte address 0x4 - core index']
  #allocation1 [shape = 'u32[144,128]{1,0:T(1,128)}', space=vmem, size = 0x12000, scoped, tag = 'internal scratch']
  %s0 = inlined_call_operand.hbm [shape: f32[2,16,16,64], index: 0, kind: input, shape index: {}]
  %s1 = inlined_call_operand.vmem [shape: f32[64,32], index: 1, kind: input, shape index: {}]
  %s2 = inlined_call_operand.vmem [shape: f32[32,64], index: 2, kind: input, shape index: {}]
  %s3 = inlined_call_operand.vmem [shape: f32[1,64], index: 3, kind: input, shape index: {}]
  %s4 = inlined_call_operand.vmem [shape: f32[1,64], index: 4, kind: input, shape index: {}]
  %s5 = inlined_call_operand.vmem [shape: bf16[64,32], index: 5, kind: input, shape index: {}]
  %s6 = inlined_call_operand.vmem [shape: f32[32,32], index: 6, kind: input, shape index: {}]
  %s7 = inlined_call_operand.vmem [shape: f32[32,32], index: 7, kind: input, shape index: {}]
  %s8 = inlined_call_operand.vmem [shape: f32[1,32], index: 8, kind: input, shape index: {}]
  %s9 = inlined_call_operand.vmem [shape: f32[1,32], index: 9, kind: input, shape index: {}]
  %s10 = inlined_call_operand.vmem [shape: bf16[288,32], index: 10, kind: input, shape index: {}]
  %s11 = inlined_call_operand.vmem [shape: f32[1,32], index: 11, kind: input, shape index: {}]
  %s12 = inlined_call_operand.vmem [shape: f32[1,32], index: 12, kind: input, shape index: {}]
  %s13 = inlined_call_operand.vmem [shape: bf16[32,128], index: 13, kind: input, shape index: {}]
  %s14 = inlined_call_operand.vmem [shape: bf16[64,128], index: 14, kind: input, shape index: {}]
  %s15 = inlined_call_operand.hbm [shape: f32[2,256,128], index: 15, kind: output, shape index: {}]
  %s16 = sld [smem:[#allocation0]]
  $region97: #{tpu_custom_call.1} parent=0
    _
  %s18 = ssub.s32 1, %s16
  %s19 = scalar_select 0, %s18, %s16
  $region1: #{tpu_custom_call.1} parent=0
    #allocation2 [shape = 'u8[262144]{0}', space=vmem, size = 0x40000, scoped, tag = 'input window, operand 0']
    #allocation3 [shape = 's32[2]{0}', space=sflag, size = 0x8, scoped, tag = 'scoped memory for tpu_custom_call.1']
    #allocation4 [shape = 's32[2]{0}', space=sflag, size = 0x8, scoped, tag = 'scoped memory for tpu_custom_call.1']
    #allocation5 [shape = 'u8[262144]{0}', space=vmem, size = 0x40000, scoped, tag = 'output window, operand 0']
    %20 = vsyncpa [#allocation3], 0
    %s21 = scalar_lea.sflag [#allocation3], 1
    %22 = vsyncpa %s21, 0
    %23 = vsyncpa [#allocation4], 0
    %s24 = scalar_lea.sflag [#allocation4], 1
    %25 = vsyncpa %s24, 0
    loop: start=0, step=1, limit=4
    $region2: #{tpu_custom_call.1} parent=1 // loop_pre_header
      _
    $region3: #{tpu_custom_call.1} parent=1 // loop_header
      %s27 = sphi 0, %s31
      %p28 = scmp.ge.s32.totalorder %s27, 4
      %s37 = sphi 0, %s39
      %s40 = sphi 0, %s37
      %s41 = sphi 0, %s40
      %s57 = sphi 0, %s41
      %s61 = sphi 0, %s61
      %s63 = sphi 0, %s61
      %s64 = sphi 0, %s63
      %s78 = sphi 0, %s64
      %s82 = sphi 0, %s82
      %s84 = sphi 0, %s82
      %s85 = sphi 0, %s84
      %s99 = sphi 0, %s85
      %s103 = sphi 0, %s103
      %s105 = sphi 0, %s103
      %s106 = sphi 0, %s105
      %s120 = sphi 0, %s106
      %s124 = sphi 0, %s124
      %s126 = sphi 0, %s124
      %s127 = sphi 0, %s126
      %s141 = sphi 0, %s127
      %s145 = sphi 0, %s145
      %s147 = sphi 0, %s145
      %s148 = sphi 0, %s147
      %s162 = sphi 0, %s148
      %s166 = sphi 0, %s166
      %s168 = sphi 0, %s166
      %s169 = sphi 0, %s168
      %s183 = sphi 0, %s169
      %s187 = sphi 0, %s187
      %s189 = sphi 0, %s187
      %s190 = sphi 0, %s189
      %s204 = sphi 0, %s190
      %s208 = sphi 0, %s208
      %s210 = sphi 0, %s208
      %s211 = sphi 0, %s210
      %s225 = sphi 0, %s211
      %s229 = sphi 0, %s229
      %s231 = sphi 0, %s229
      %s232 = sphi 0, %s231
      %s246 = sphi 0, %s232
      %s250 = sphi 0, %s250
      %s252 = sphi 0, %s250
      %s253 = sphi 0, %s252
      %s267 = sphi 0, %s253
      %s271 = sphi 0, %s271
      %s273 = sphi 0, %s271
      %s274 = sphi 0, %s273
      %s288 = sphi 0, %s274
      %s292 = sphi 0, %s292
      %s294 = sphi 0, %s292
      %s295 = sphi 0, %s294
      %s309 = sphi 0, %s295
      %s313 = sphi 0, %s313
      %s315 = sphi 0, %s313
      %s316 = sphi 0, %s315
      %s330 = sphi 0, %s316
      %s334 = sphi 0, %s334
      %s336 = sphi 0, %s334
      %s337 = sphi 0, %s336
      %s351 = sphi 0, %s337
      %s357 = sphi 0, %s359
      %s360 = sphi 0, %s357
      %s361 = sphi 0, %s360
      %s377 = sphi 0, %s361
    $region4: #{tpu_custom_call.1} parent=1 // loop_header_branch
      %30 = sbr.rel (%p28) target = $region8
    $region5: #{tpu_custom_call.1} parent=1 // loop_body
      %s32 = ssub.s32 %s27, 1
      %s33 = ssub.s32 %s27, 2
      %s34 = sadd.s32 %s27, 1
      %s35 = ssub.s32 %s27, %s34
      %p36 = scmp.eq.s32.totalorder %s35, 0
      %s38 = sadd.s32 %s37, 1
      %s39 = scalar_select %p36, %s37, %s38
      %p42 = pneg %p36
      %p43 = scmp.eq.s32.totalorder %s27, 1
      %p44 = por %p42, %p43
      %p45 = scmp.ne.s32.totalorder %s37, %s40
      %p46 = scmp.eq.s32.totalorder %s27, 0
      %p47 = por %p45, %p46
      %p48 = scmp.ne.s32.totalorder %s37, %s40
      %p49 = scmp.eq.s32.totalorder %s32, 1
      %p50 = por %p48, %p49
      %p51 = scmp.ne.s32.totalorder %s40, %s41
      %p52 = scmp.eq.s32.totalorder %s32, 0
      %p53 = por %p51, %p52
      %p54 = scmp.ne.s32.totalorder %s40, %s41
      %p55 = scmp.eq.s32.totalorder %s33, 1
      %p56 = por %p54, %p55
      %p58 = scmp.ne.s32.totalorder %s41, %s57
      %p59 = scmp.eq.s32.totalorder %s33, 0
      %p60 = por %p58, %p59
      %s62 = sadd.s32 %s61, 1
      %p65 = scmp.eq.s32.totalorder %s27, 1
      %p66 = scmp.ne.s32.totalorder %s61, %s63
      %p67 = scmp.eq.s32.totalorder %s27, 0
      %p68 = por %p66, %p67
      %p69 = scmp.ne.s32.totalorder %s61, %s63
      %p70 = scmp.eq.s32.totalorder %s32, 1
      %p71 = por %p69, %p70
      %p72 = scmp.ne.s32.totalorder %s63, %s64
      %p73 = scmp.eq.s32.totalorder %s32, 0
      %p74 = por %p72, %p73
      %p75 = scmp.ne.s32.totalorder %s63, %s64
      %p76 = scmp.eq.s32.totalorder %s33, 1
      %p77 = por %p75, %p76
      %p79 = scmp.ne.s32.totalorder %s64, %s78
      %p80 = scmp.eq.s32.totalorder %s33, 0
      %p81 = por %p79, %p80
      %s83 = sadd.s32 %s82, 1
      %p86 = scmp.eq.s32.totalorder %s27, 1
      %p87 = scmp.ne.s32.totalorder %s82, %s84
      %p88 = scmp.eq.s32.totalorder %s27, 0
      %p89 = por %p87, %p88
      %p90 = scmp.ne.s32.totalorder %s82, %s84
      %p91 = scmp.eq.s32.totalorder %s32, 1
      %p92 = por %p90, %p91
      %p93 = scmp.ne.s32.totalorder %s84, %s85
      %p94 = scmp.eq.s32.totalorder %s32, 0
      %p95 = por %p93, %p94
      %p96 = scmp.ne.s32.totalorder %s84, %s85
      %p97 = scmp.eq.s32.totalorder %s33, 1
      %p98 = por %p96, %p97
      %p100 = scmp.ne.s32.totalorder %s85, %s99
      %p101 = scmp.eq.s32.totalorder %s33, 0
      %p102 = por %p100, %p101
      %s104 = sadd.s32 %s103, 1
      %p107 = scmp.eq.s32.totalorder %s27, 1
      %p108 = scmp.ne.s32.totalorder %s103, %s105
      %p109 = scmp.eq.s32.totalorder %s27, 0
      %p110 = por %p108, %p109
      %p111 = scmp.ne.s32.totalorder %s103, %s105
      %p112 = scmp.eq.s32.totalorder %s32, 1
      %p113 = por %p111, %p112
      %p114 = scmp.ne.s32.totalorder %s105, %s106
      %p115 = scmp.eq.s32.totalorder %s32, 0
      %p116 = por %p114, %p115
      %p117 = scmp.ne.s32.totalorder %s105, %s106
      %p118 = scmp.eq.s32.totalorder %s33, 1
      %p119 = por %p117, %p118
      %p121 = scmp.ne.s32.totalorder %s106, %s120
      %p122 = scmp.eq.s32.totalorder %s33, 0
      %p123 = por %p121, %p122
      %s125 = sadd.s32 %s124, 1
      %p128 = scmp.eq.s32.totalorder %s27, 1
      %p129 = scmp.ne.s32.totalorder %s124, %s126
      %p130 = scmp.eq.s32.totalorder %s27, 0
      %p131 = por %p129, %p130
      %p132 = scmp.ne.s32.totalorder %s124, %s126
      %p133 = scmp.eq.s32.totalorder %s32, 1
      %p134 = por %p132, %p133
      %p135 = scmp.ne.s32.totalorder %s126, %s127
      %p136 = scmp.eq.s32.totalorder %s32, 0
      %p137 = por %p135, %p136
      %p138 = scmp.ne.s32.totalorder %s126, %s127
      %p139 = scmp.eq.s32.totalorder %s33, 1
      %p140 = por %p138, %p139
      %p142 = scmp.ne.s32.totalorder %s127, %s141
      %p143 = scmp.eq.s32.totalorder %s33, 0
      %p144 = por %p142, %p143
      %s146 = sadd.s32 %s145, 1
      %p149 = scmp.eq.s32.totalorder %s27, 1
      %p150 = scmp.ne.s32.totalorder %s145, %s147
      %p151 = scmp.eq.s32.totalorder %s27, 0
      %p152 = por %p150, %p151
      %p153 = scmp.ne.s32.totalorder %s145, %s147
      %p154 = scmp.eq.s32.totalorder %s32, 1
      %p155 = por %p153, %p154
      %p156 = scmp.ne.s32.totalorder %s147, %s148
      %p157 = scmp.eq.s32.totalorder %s32, 0
      %p158 = por %p156, %p157
      %p159 = scmp.ne.s32.totalorder %s147, %s148
      %p160 = scmp.eq.s32.totalorder %s33, 1
      %p161 = por %p159, %p160
      %p163 = scmp.ne.s32.totalorder %s148, %s162
      %p164 = scmp.eq.s32.totalorder %s33, 0
      %p165 = por %p163, %p164
      %s167 = sadd.s32 %s166, 1
      %p170 = scmp.eq.s32.totalorder %s27, 1
      %p171 = scmp.ne.s32.totalorder %s166, %s168
      %p172 = scmp.eq.s32.totalorder %s27, 0
      %p173 = por %p171, %p172
      %p174 = scmp.ne.s32.totalorder %s166, %s168
      %p175 = scmp.eq.s32.totalorder %s32, 1
      %p176 = por %p174, %p175
      %p177 = scmp.ne.s32.totalorder %s168, %s169
      %p178 = scmp.eq.s32.totalorder %s32, 0
      %p179 = por %p177, %p178
      %p180 = scmp.ne.s32.totalorder %s168, %s169
      %p181 = scmp.eq.s32.totalorder %s33, 1
      %p182 = por %p180, %p181
      %p184 = scmp.ne.s32.totalorder %s169, %s183
      %p185 = scmp.eq.s32.totalorder %s33, 0
      %p186 = por %p184, %p185
      %s188 = sadd.s32 %s187, 1
      %p191 = scmp.eq.s32.totalorder %s27, 1
      %p192 = scmp.ne.s32.totalorder %s187, %s189
      %p193 = scmp.eq.s32.totalorder %s27, 0
      %p194 = por %p192, %p193
      %p195 = scmp.ne.s32.totalorder %s187, %s189
      %p196 = scmp.eq.s32.totalorder %s32, 1
      %p197 = por %p195, %p196
      %p198 = scmp.ne.s32.totalorder %s189, %s190
      %p199 = scmp.eq.s32.totalorder %s32, 0
      %p200 = por %p198, %p199
      %p201 = scmp.ne.s32.totalorder %s189, %s190
      %p202 = scmp.eq.s32.totalorder %s33, 1
      %p203 = por %p201, %p202
      %p205 = scmp.ne.s32.totalorder %s190, %s204
      %p206 = scmp.eq.s32.totalorder %s33, 0
      %p207 = por %p205, %p206
      %s209 = sadd.s32 %s208, 1
      %p212 = scmp.eq.s32.totalorder %s27, 1
      %p213 = scmp.ne.s32.totalorder %s208, %s210
      %p214 = scmp.eq.s32.totalorder %s27, 0
      %p215 = por %p213, %p214
      %p216 = scmp.ne.s32.totalorder %s208, %s210
      %p217 = scmp.eq.s32.totalorder %s32, 1
      %p218 = por %p216, %p217
      %p219 = scmp.ne.s32.totalorder %s210, %s211
      %p220 = scmp.eq.s32.totalorder %s32, 0
      %p221 = por %p219, %p220
      %p222 = scmp.ne.s32.totalorder %s210, %s211
      %p223 = scmp.eq.s32.totalorder %s33, 1
      %p224 = por %p222, %p223
      %p226 = scmp.ne.s32.totalorder %s211, %s225
      %p227 = scmp.eq.s32.totalorder %s33, 0
      %p228 = por %p226, %p227
      %s230 = sadd.s32 %s229, 1
      %p233 = scmp.eq.s32.totalorder %s27, 1
      %p234 = scmp.ne.s32.totalorder %s229, %s231
      %p235 = scmp.eq.s32.totalorder %s27, 0
      %p236 = por %p234, %p235
      %p237 = scmp.ne.s32.totalorder %s229, %s231
      %p238 = scmp.eq.s32.totalorder %s32, 1
      %p239 = por %p237, %p238
      %p240 = scmp.ne.s32.totalorder %s231, %s232
      %p241 = scmp.eq.s32.totalorder %s32, 0
      %p242 = por %p240, %p241
      %p243 = scmp.ne.s32.totalorder %s231, %s232
      %p244 = scmp.eq.s32.totalorder %s33, 1
      %p245 = por %p243, %p244
      %p247 = scmp.ne.s32.totalorder %s232, %s246
      %p248 = scmp.eq.s32.totalorder %s33, 0
      %p249 = por %p247, %p248
      %s251 = sadd.s32 %s250, 1
      %p254 = scmp.eq.s32.totalorder %s27, 1
      %p255 = scmp.ne.s32.totalorder %s250, %s252
      %p256 = scmp.eq.s32.totalorder %s27, 0
      %p257 = por %p255, %p256
      %p258 = scmp.ne.s32.totalorder %s250, %s252
      %p259 = scmp.eq.s32.totalorder %s32, 1
      %p260 = por %p258, %p259
      %p261 = scmp.ne.s32.totalorder %s252, %s253
      %p262 = scmp.eq.s32.totalorder %s32, 0
      %p263 = por %p261, %p262
      %p264 = scmp.ne.s32.totalorder %s252, %s253
      %p265 = scmp.eq.s32.totalorder %s33, 1
      %p266 = por %p264, %p265
      %p268 = scmp.ne.s32.totalorder %s253, %s267
      %p269 = scmp.eq.s32.totalorder %s33, 0
      %p270 = por %p268, %p269
      %s272 = sadd.s32 %s271, 1
      %p275 = scmp.eq.s32.totalorder %s27, 1
      %p276 = scmp.ne.s32.totalorder %s271, %s273
      %p277 = scmp.eq.s32.totalorder %s27, 0
      %p278 = por %p276, %p277
      %p279 = scmp.ne.s32.totalorder %s271, %s273
      %p280 = scmp.eq.s32.totalorder %s32, 1
      %p281 = por %p279, %p280
      %p282 = scmp.ne.s32.totalorder %s273, %s274
      %p283 = scmp.eq.s32.totalorder %s32, 0
      %p284 = por %p282, %p283
      %p285 = scmp.ne.s32.totalorder %s273, %s274
      %p286 = scmp.eq.s32.totalorder %s33, 1
      %p287 = por %p285, %p286
      %p289 = scmp.ne.s32.totalorder %s274, %s288
      %p290 = scmp.eq.s32.totalorder %s33, 0
      %p291 = por %p289, %p290
      %s293 = sadd.s32 %s292, 1
      %p296 = scmp.eq.s32.totalorder %s27, 1
      %p297 = scmp.ne.s32.totalorder %s292, %s294
      %p298 = scmp.eq.s32.totalorder %s27, 0
      %p299 = por %p297, %p298
      %p300 = scmp.ne.s32.totalorder %s292, %s294
      %p301 = scmp.eq.s32.totalorder %s32, 1
      %p302 = por %p300, %p301
      %p303 = scmp.ne.s32.totalorder %s294, %s295
      %p304 = scmp.eq.s32.totalorder %s32, 0
      %p305 = por %p303, %p304
      %p306 = scmp.ne.s32.totalorder %s294, %s295
      %p307 = scmp.eq.s32.totalorder %s33, 1
      %p308 = por %p306, %p307
      %p310 = scmp.ne.s32.totalorder %s295, %s309
      %p311 = scmp.eq.s32.totalorder %s33, 0
      %p312 = por %p310, %p311
      %s314 = sadd.s32 %s313, 1
      %p317 = scmp.eq.s32.totalorder %s27, 1
      %p318 = scmp.ne.s32.totalorder %s313, %s315
      %p319 = scmp.eq.s32.totalorder %s27, 0
      %p320 = por %p318, %p319
      %p321 = scmp.ne.s32.totalorder %s313, %s315
      %p322 = scmp.eq.s32.totalorder %s32, 1
      %p323 = por %p321, %p322
      %p324 = scmp.ne.s32.totalorder %s315, %s316
      %p325 = scmp.eq.s32.totalorder %s32, 0
      %p326 = por %p324, %p325
      %p327 = scmp.ne.s32.totalorder %s315, %s316
      %p328 = scmp.eq.s32.totalorder %s33, 1
      %p329 = por %p327, %p328
      %p331 = scmp.ne.s32.totalorder %s316, %s330
      %p332 = scmp.eq.s32.totalorder %s33, 0
      %p333 = por %p331, %p332
      %s335 = sadd.s32 %s334, 1
      %p338 = scmp.eq.s32.totalorder %s27, 1
      %p339 = scmp.ne.s32.totalorder %s334, %s336
      %p340 = scmp.eq.s32.totalorder %s27, 0
      %p341 = por %p339, %p340
      %p342 = scmp.ne.s32.totalorder %s334, %s336
      %p343 = scmp.eq.s32.totalorder %s32, 1
      %p344 = por %p342, %p343
      %p345 = scmp.ne.s32.totalorder %s336, %s337
      %p346 = scmp.eq.s32.totalorder %s32, 0
      %p347 = por %p345, %p346
      %p348 = scmp.ne.s32.totalorder %s336, %s337
      %p349 = scmp.eq.s32.totalorder %s33, 1
      %p350 = por %p348, %p349
      %p352 = scmp.ne.s32.totalorder %s337, %s351
      %p353 = scmp.eq.s32.totalorder %s33, 0
      %p354 = por %p352, %p353
      %s355 = ssub.s32 %s27, %s34
      %p356 = scmp.eq.s32.totalorder %s355, 0
      %s358 = sadd.s32 %s357, 1
      %s359 = scalar_select %p356, %s357, %s358
      %p362 = pneg %p356
      %p363 = scmp.eq.s32.totalorder %s27, 1
      %p364 = por %p362, %p363
      %p365 = scmp.ne.s32.totalorder %s357, %s360
      %p366 = scmp.eq.s32.totalorder %s27, 0
      %p367 = por %p365, %p366
      %p368 = scmp.ne.s32.totalorder %s357, %s360
      %p369 = scmp.eq.s32.totalorder %s32, 1
      %p370 = por %p368, %p369
      %p371 = scmp.ne.s32.totalorder %s360, %s361
      %p372 = scmp.eq.s32.totalorder %s32, 0
      %p373 = por %p371, %p372
      %p374 = scmp.ne.s32.totalorder %s360, %s361
      %p375 = scmp.eq.s32.totalorder %s33, 1
      %p376 = por %p374, %p375
      %p378 = scmp.ne.s32.totalorder %s361, %s377
      %p379 = scmp.eq.s32.totalorder %s33, 0
      %p380 = por %p378, %p379
      %p381 = scmp.le.s32.totalorder 1, %s27
      %p382 = scmp.lt.s32.totalorder %s27, 3
      %p383 = pnand %p381, %p382
      %p384 = pneg %p383
      // Predicated region
      $region9: #{tpu_custom_call.1} parent=5 // pred_check
        _
      $region10: #{tpu_custom_call.1} parent=5 // pred_check_branch
        %386 = sbr.rel (%p383) target = $region12
      $region11: #{tpu_custom_call.1} parent=5 // pred_region
        %s387 = ssub.s32 %s27, 1
        // Predicated region
        $region13: #{tpu_custom_call.1} parent=11 // pred_check
          %p388 = pneg %p74
        $region14: #{tpu_custom_call.1} parent=11 // pred_check_branch
          %390 = sbr.rel (%p388) target = $region16
        $region15: #{tpu_custom_call.1} parent=11 // pred_region
          _
        $region16: #{tpu_custom_call.1} parent=11 // pred_fallthru
          _
        // Predicated region
        $region17: #{tpu_custom_call.1} parent=11 // pred_check
          %p391 = pneg %p95
        $region18: #{tpu_custom_call.1} parent=11 // pred_check_branch
          %393 = sbr.rel (%p391) target = $region20
        $region19: #{tpu_custom_call.1} parent=11 // pred_region
          _
        $region20: #{tpu_custom_call.1} parent=11 // pred_fallthru
          _
        // Predicated region
        $region21: #{tpu_custom_call.1} parent=11 // pred_check
          %p394 = pneg %p116
        $region22: #{tpu_custom_call.1} parent=11 // pred_check_branch
          %396 = sbr.rel (%p394) target = $region24
        $region23: #{tpu_custom_call.1} parent=11 // pred_region
          _
        $region24: #{tpu_custom_call.1} parent=11 // pred_fallthru
          _
        // Predicated region
        $region25: #{tpu_custom_call.1} parent=11 // pred_check
          %p397 = pneg %p137
        $region26: #{tpu_custom_call.1} parent=11 // pred_check_branch
          %399 = sbr.rel (%p397) target = $region28
        $region27: #{tpu_custom_call.1} parent=11 // pred_region
          _
        $region28: #{tpu_custom_call.1} parent=11 // pred_fallthru
          _
        // Predicated region
        $region29: #{tpu_custom_call.1} parent=11 // pred_check
          %p400 = pneg %p158
        $region30: #{tpu_custom_call.1} parent=11 // pred_check_branch
          %402 = sbr.rel (%p400) target = $region32
        $region31: #{tpu_custom_call.1} parent=11 // pred_region
          _
        $region32: #{tpu_custom_call.1} parent=11 // pred_fallthru
          _
        // Predicated region
        $region33: #{tpu_custom_call.1} parent=11 // pred_check
          %p403 = pneg %p179
        $region34: #{tpu_custom_call.1} parent=11 // pred_check_branch
          %405 = sbr.rel (%p403) target = $region36
        $region35: #{tpu_custom_call.1} parent=11 // pred_region
          _
        $region36: #{tpu_custom_call.1} parent=11 // pred_fallthru
          _
        // Predicated region
        $region37: #{tpu_custom_call.1} parent=11 // pred_check
          %p406 = pneg %p200
        $region38: #{tpu_custom_call.1} parent=11 // pred_check_branch
          %408 = sbr.rel (%p406) target = $region40
        $region39: #{tpu_custom_call.1} parent=11 // pred_region
          _
        $region40: #{tpu_custom_call.1} parent=11 // pred_fallthru
          _
        // Predicated region
        $region41: #{tpu_custom_call.1} parent=11 // pred_check
          %p409 = pneg %p221
        $region42: #{tpu_custom_call.1} parent=11 // pred_check_branch
          %411 = sbr.rel (%p409) target = $region44
        $region43: #{tpu_custom_call.1} parent=11 // pred_region
          _
        $region44: #{tpu_custom_call.1} parent=11 // pred_fallthru
          _
        // Predicated region
        $region45: #{tpu_custom_call.1} parent=11 // pred_check
          %p412 = pneg %p242
        $region46: #{tpu_custom_call.1} parent=11 // pred_check_branch
          %414 = sbr.rel (%p412) target = $region48
        $region47: #{tpu_custom_call.1} parent=11 // pred_region
          _
        $region48: #{tpu_custom_call.1} parent=11 // pred_fallthru
          _
        // Predicated region
        $region49: #{tpu_custom_call.1} parent=11 // pred_check
          %p415 = pneg %p263
        $region50: #{tpu_custom_call.1} parent=11 // pred_check_branch
          %417 = sbr.rel (%p415) target = $region52
        $region51: #{tpu_custom_call.1} parent=11 // pred_region
          _
        $region52: #{tpu_custom_call.1} parent=11 // pred_fallthru
          _
        // Predicated region
        $region53: #{tpu_custom_call.1} parent=11 // pred_check
          %p418 = pneg %p284
        $region54: #{tpu_custom_call.1} parent=11 // pred_check_branch
          %420 = sbr.rel (%p418) target = $region56
        $region55: #{tpu_custom_call.1} parent=11 // pred_region
          _
        $region56: #{tpu_custom_call.1} parent=11 // pred_fallthru
          _
        // Predicated region
        $region57: #{tpu_custom_call.1} parent=11 // pred_check
          %p421 = pneg %p305
        $region58: #{tpu_custom_call.1} parent=11 // pred_check_branch
          %423 = sbr.rel (%p421) target = $region60
        $region59: #{tpu_custom_call.1} parent=11 // pred_region
          _
        $region60: #{tpu_custom_call.1} parent=11 // pred_fallthru
          _
        // Predicated region
        $region61: #{tpu_custom_call.1} parent=11 // pred_check
          %p424 = pneg %p326
        $region62: #{tpu_custom_call.1} parent=11 // pred_check_branch
          %426 = sbr.rel (%p424) target = $region64
        $region63: #{tpu_custom_call.1} parent=11 // pred_region
          _
        $region64: #{tpu_custom_call.1} parent=11 // pred_fallthru
          _
        // Predicated region
        $region65: #{tpu_custom_call.1} parent=11 // pred_check
          %p427 = pneg %p347
        $region66: #{tpu_custom_call.1} parent=11 // pred_check_branch
          %429 = sbr.rel (%p427) target = $region68
        $region67: #{tpu_custom_call.1} parent=11 // pred_region
          _
        $region68: #{tpu_custom_call.1} parent=11 // pred_fallthru
          _
      $region12: #{tpu_custom_call.1} parent=5 // pred_fallthru
        _
      %p430 = scmp.lt.s32.totalorder %s27, 2
      // Predicated region
      $region69: #{tpu_custom_call.1} parent=5 // pred_check
        %p431 = pneg %p430
      $region70: #{tpu_custom_call.1} parent=5 // pred_check_branch
        %433 = sbr.rel (%p431) target = $region72
      $region71: #{tpu_custom_call.1} parent=5 // pred_region
        // Predicated region
        $region73: #{tpu_custom_call.1} parent=71 // pred_check
          %p434 = pneg %p47
        $region74: #{tpu_custom_call.1} parent=71 // pred_check_branch
          %436 = sbr.rel (%p434) target = $region76
        $region75: #{tpu_custom_call.1} parent=71 // pred_region
          %s437 = sand.u32 %s37, 1
          %s438 = scalar_lea.sflag [#allocation3], %s437
          %s439 = sand.u32 %s37, 1
          %s440 = smul.addr %s439, 256
          %s441 = scalar_lea.vmem [#allocation2], %s440
          %s443 = ssub.s32 4096, 4096
          %444 = vsyncadd %s438, %s443
          %s445 = smul.addr %s27, 32
          %s446 = smul.addr %s445, 128
          %s447 = scalar_lea.hbm %s0, %s446
          %s448 = sshll.u32 %s441, 4
          %s449 = int_to_ptr.vmem [resolvable:$true] %s448
          %454 = dma.hbm_to_vmem [thread:$0]  %s447, 4096, %s449, %s438, 128, 128, 8
        $region76: #{tpu_custom_call.1} parent=71 // pred_fallthru
          _
      $region72: #{tpu_custom_call.1} parent=5 // pred_fallthru
        _
      %p455 = scmp.le.s32.totalorder 1, %s27
      %p456 = scmp.lt.s32.totalorder %s27, 3
      %p457 = pnand %p455, %p456
      %p458 = pneg %p457
      // Predicated region
      $region77: #{tpu_custom_call.1} parent=5 // pred_check
        _
      $region78: #{tpu_custom_call.1} parent=5 // pred_check_branch
        %460 = sbr.rel (%p457) target = $region80
      $region79: #{tpu_custom_call.1} parent=5 // pred_region
        %s461 = ssub.s32 %s27, 1
        %s462 = sand.u32 %s40, 1
        %s463 = scalar_lea.sflag [#allocation3], %s462
        %s464 = sand.u32 %s40, 1
        %s465 = smul.addr %s464, 256
        %s466 = scalar_lea.vmem [#allocation2], %s465
        // Predicated region
        $region81: #{tpu_custom_call.1} parent=79 // pred_check
          %p467 = pneg %p53
        $region82: #{tpu_custom_call.1} parent=79 // pred_check_branch
          %469 = sbr.rel (%p467) target = $region84
        $region83: #{tpu_custom_call.1} parent=79 // pred_region
          %470 = dma.done %s463, 4096
        $region84: #{tpu_custom_call.1} parent=79 // pred_fallthru
          _
        %s471 = sand.u32 %s40, 1
        %s472 = scalar_lea.sflag [#allocation3], %s471
        %s473 = sand.u32 %s40, 1
        %s474 = smul.addr %s473, 256
        %s475 = scalar_lea.vmem [#allocation2], %s474
        %p476 = pneg %p53
        %p477 = pneg %p50
        %p478 = pneg %p74
        %p479 = pneg %p71
        %p480 = pneg %p95
        %p481 = pneg %p92
        %p482 = pneg %p116
        %p483 = pneg %p113
        %p484 = pneg %p137
        %p485 = pneg %p134
        %p486 = pneg %p158
        %p487 = pneg %p155
        %p488 = pneg %p179
        %p489 = pneg %p176
        %p490 = pneg %p200
        %p491 = pneg %p197
        %p492 = pneg %p221
        %p493 = pneg %p218
        %p494 = pneg %p242
        %p495 = pneg %p239
        %p496 = pneg %p263
        %p497 = pneg %p260
        %p498 = pneg %p284
        %p499 = pneg %p281
        %p500 = pneg %p305
        %p501 = pneg %p302
        %p502 = pneg %p326
        %p503 = pneg %p323
        %p504 = pneg %p347
        %p505 = pneg %p344
        %p506 = pneg %p373
        %p507 = pneg %p370
        %s508 = sand.u32 %s360, 1
        %s509 = scalar_lea.sflag [#allocation4], %s508
        %s510 = sand.u32 %s360, 1
        %s511 = smul.addr %s510, 256
        %s512 = scalar_lea.vmem [#allocation5], %s511
        %v514 = vld [vmem:[%s466] sm:$0xff]
        %v515 = vld [vmem:[%s466 + $0x8] sm:$0xff]
        %v516 = vld [vmem:[%s466 + $0x10] sm:$0xff]
        %v517 = vld [vmem:[%s466 + $0x18] sm:$0xff]
        %v518 = vld [vmem:[%s466 + $0x20] sm:$0xff]
        %v519 = vld [vmem:[%s466 + $0x28] sm:$0xff]
        %v520 = vld [vmem:[%s466 + $0x30] sm:$0xff]
        %v521 = vld [vmem:[%s466 + $0x38] sm:$0xff]
        %v522 = vld [vmem:[%s466 + $0x40] sm:$0xff]
        %v523 = vld [vmem:[%s466 + $0x48] sm:$0xff]
        %v524 = vld [vmem:[%s466 + $0x50] sm:$0xff]
        %v525 = vld [vmem:[%s466 + $0x58] sm:$0xff]
        %v526 = vld [vmem:[%s466 + $0x60] sm:$0xff]
        %v527 = vld [vmem:[%s466 + $0x68] sm:$0xff]
        %v528 = vld [vmem:[%s466 + $0x70] sm:$0xff]
        %v529 = vld [vmem:[%s466 + $0x78] sm:$0xff]
        %v530 = vld [vmem:[%s466 + $0x80] sm:$0xff]
        %v531 = vld [vmem:[%s466 + $0x88] sm:$0xff]
        %v532 = vld [vmem:[%s466 + $0x90] sm:$0xff]
        %v533 = vld [vmem:[%s466 + $0x98] sm:$0xff]
        %v534 = vld [vmem:[%s466 + $0xa0] sm:$0xff]
        %v535 = vld [vmem:[%s466 + $0xa8] sm:$0xff]
        %v536 = vld [vmem:[%s466 + $0xb0] sm:$0xff]
        %v537 = vld [vmem:[%s466 + $0xb8] sm:$0xff]
        %v538 = vld [vmem:[%s466 + $0xc0] sm:$0xff]
        %v539 = vld [vmem:[%s466 + $0xc8] sm:$0xff]
        %v540 = vld [vmem:[%s466 + $0xd0] sm:$0xff]
        %v541 = vld [vmem:[%s466 + $0xd8] sm:$0xff]
        %v542 = vld [vmem:[%s466 + $0xe0] sm:$0xff]
        %v543 = vld [vmem:[%s466 + $0xe8] sm:$0xff]
        %v544 = vld [vmem:[%s466 + $0xf0] sm:$0xff]
        %v545 = vld [vmem:[%s466 + $0xf8] sm:$0xff]
        %v546 = vld [vmem:[%s1] sm:$0xff]
        %v547 = vld [vmem:[%s1 + $0x8] sm:$0xff]
        %v548 = vld [vmem:[%s1 + $0x10] sm:$0xff]
        %v549 = vld [vmem:[%s1 + $0x18] sm:$0xff]
        %v550 = vld [vmem:[%s1 + $0x20] sm:$0xff]
        %v551 = vld [vmem:[%s1 + $0x28] sm:$0xff]
        %v552 = vld [vmem:[%s1 + $0x30] sm:$0xff]
        %v553 = vld [vmem:[%s1 + $0x38] sm:$0xff]
        %v554 = vld [vmem:[%s2] sm:$0xff]
        %v555 = vld [vmem:[%s2 + $0x8] sm:$0xff]
        %v556 = vld [vmem:[%s2 + $0x10] sm:$0xff]
        %v557 = vld [vmem:[%s2 + $0x18] sm:$0xff]
        %v558 = vld [vmem:[%s3] sm:$0x1]
        %v559 = vld [vmem:[%s4] sm:$0x1]
        %vm560 = vcmask 523264
        %v561 = vsel %vm560, %v514, 0.0
        %v562 = vsel %vm560, %v515, 0.0
        %v563 = vadd.f32 %v561, %v562
        %v564 = vsel %vm560, %v516, 0.0
        %v565 = vadd.f32 %v563, %v564
        %v566 = vsel %vm560, %v517, 0.0
        %v567 = vadd.f32 %v565, %v566
        %v568 = vsel %vm560, %v518, 0.0
        %v569 = vadd.f32 %v567, %v568
        %v570 = vsel %vm560, %v519, 0.0
        %v571 = vadd.f32 %v569, %v570
        %v572 = vsel %vm560, %v520, 0.0
        %v573 = vadd.f32 %v571, %v572
        %v574 = vsel %vm560, %v521, 0.0
        %v575 = vadd.f32 %v573, %v574
        %v576 = vsel %vm560, %v522, 0.0
        %v577 = vadd.f32 %v575, %v576
        %v578 = vsel %vm560, %v523, 0.0
        %v579 = vadd.f32 %v577, %v578
        %v580 = vsel %vm560, %v524, 0.0
        %v581 = vadd.f32 %v579, %v580
        %v582 = vsel %vm560, %v525, 0.0
        %v583 = vadd.f32 %v581, %v582
        %v584 = vsel %vm560, %v526, 0.0
        %v585 = vadd.f32 %v583, %v584
        %v586 = vsel %vm560, %v527, 0.0
        %v587 = vadd.f32 %v585, %v586
        %v588 = vsel %vm560, %v528, 0.0
        %v589 = vadd.f32 %v587, %v588
        %v590 = vsel %vm560, %v529, 0.0
        %v591 = vadd.f32 %v589, %v590
        %v592 = vsel %vm560, %v530, 0.0
        %v593 = vadd.f32 %v591, %v592
        %v594 = vsel %vm560, %v531, 0.0
        %v595 = vadd.f32 %v593, %v594
        %v596 = vsel %vm560, %v532, 0.0
        %v597 = vadd.f32 %v595, %v596
        %v598 = vsel %vm560, %v533, 0.0
        %v599 = vadd.f32 %v597, %v598
        %v600 = vsel %vm560, %v534, 0.0
        %v601 = vadd.f32 %v599, %v600
        %v602 = vsel %vm560, %v535, 0.0
        %v603 = vadd.f32 %v601, %v602
        %v604 = vsel %vm560, %v536, 0.0
        %v605 = vadd.f32 %v603, %v604
        %v606 = vsel %vm560, %v537, 0.0
        %v607 = vadd.f32 %v605, %v606
        %v608 = vsel %vm560, %v538, 0.0
        %v609 = vadd.f32 %v607, %v608
        %v610 = vsel %vm560, %v539, 0.0
        %v611 = vadd.f32 %v609, %v610
        %v612 = vsel %vm560, %v540, 0.0
        %v613 = vadd.f32 %v611, %v612
        %v614 = vsel %vm560, %v541, 0.0
        %v615 = vadd.f32 %v613, %v614
        %v616 = vsel %vm560, %v542, 0.0
        %v617 = vadd.f32 %v615, %v616
        %v618 = vsel %vm560, %v543, 0.0
        %v619 = vadd.f32 %v617, %v618
        %v620 = vsel %vm560, %v544, 0.0
        %v621 = vadd.f32 %v619, %v620
        %v622 = vsel %vm560, %v545, 0.0
        %v623 = vadd.f32 %v621, %v622
        %v624 = vrot.slane %v623, 4
        %v625 = vadd.f32 %v623, %v624
        %v626 = vrot.slane %v625, 2
        %v627 = vadd.f32 %v625, %v626
        %v628 = vrot.slane %v627, 1
        %v629 = vadd.f32 %v627, %v628
        %v630 = vmul.f32 %v514, %v514
        %v631 = vmul.f32 %v515, %v515
        %v632 = vmul.f32 %v516, %v516
        %v633 = vmul.f32 %v517, %v517
        %v634 = vmul.f32 %v518, %v518
        %v635 = vmul.f32 %v519, %v519
        %v636 = vmul.f32 %v520, %v520
        %v637 = vmul.f32 %v521, %v521
        %v638 = vmul.f32 %v522, %v522
        %v639 = vmul.f32 %v523, %v523
        %v640 = vmul.f32 %v524, %v524
        %v641 = vmul.f32 %v525, %v525
        %v642 = vmul.f32 %v526, %v526
        %v643 = vmul.f32 %v527, %v527
        %v644 = vmul.f32 %v528, %v528
        %v645 = vmul.f32 %v529, %v529
        %v646 = vmul.f32 %v530, %v530
        %v647 = vmul.f32 %v531, %v531
        %v648 = vmul.f32 %v532, %v532
        %v649 = vmul.f32 %v533, %v533
        %v650 = vmul.f32 %v534, %v534
        %v651 = vmul.f32 %v535, %v535
        %v652 = vmul.f32 %v536, %v536
        %v653 = vmul.f32 %v537, %v537
        %v654 = vmul.f32 %v538, %v538
        %v655 = vmul.f32 %v539, %v539
        %v656 = vmul.f32 %v540, %v540
        %v657 = vmul.f32 %v541, %v541
        %v658 = vmul.f32 %v542, %v542
        %v659 = vmul.f32 %v543, %v543
        %v660 = vmul.f32 %v544, %v544
        %v661 = vmul.f32 %v545, %v545
        %v662 = vsel %vm560, %v630, 0.0
        %v663 = vsel %vm560, %v631, 0.0
        %v664 = vadd.f32 %v662, %v663
        %v665 = vsel %vm560, %v632, 0.0
        %v666 = vadd.f32 %v664, %v665
        %v667 = vsel %vm560, %v633, 0.0
        %v668 = vadd.f32 %v666, %v667
        %v669 = vsel %vm560, %v634, 0.0
        %v670 = vadd.f32 %v668, %v669
        %v671 = vsel %vm560, %v635, 0.0
        %v672 = vadd.f32 %v670, %v671
        %v673 = vsel %vm560, %v636, 0.0
        %v674 = vadd.f32 %v672, %v673
        %v675 = vsel %vm560, %v637, 0.0
        %v676 = vadd.f32 %v674, %v675
        %v677 = vsel %vm560, %v638, 0.0
        %v678 = vadd.f32 %v676, %v677
        %v679 = vsel %vm560, %v639, 0.0
        %v680 = vadd.f32 %v678, %v679
        %v681 = vsel %vm560, %v640, 0.0
        %v682 = vadd.f32 %v680, %v681
        %v683 = vsel %vm560, %v641, 0.0
        %v684 = vadd.f32 %v682, %v683
        %v685 = vsel %vm560, %v642, 0.0
        %v686 = vadd.f32 %v684, %v685
        %v687 = vsel %vm560, %v643, 0.0
        %v688 = vadd.f32 %v686, %v687
        %v689 = vsel %vm560, %v644, 0.0
        %v690 = vadd.f32 %v688, %v689
        %v691 = vsel %vm560, %v645, 0.0
        %v692 = vadd.f32 %v690, %v691
        %v693 = vsel %vm560, %v646, 0.0
        %v694 = vadd.f32 %v692, %v693
        %v695 = vsel %vm560, %v647, 0.0
        %v696 = vadd.f32 %v694, %v695
        %v697 = vsel %vm560, %v648, 0.0
        %v698 = vadd.f32 %v696, %v697
        %v699 = vsel %vm560, %v649, 0.0
        %v700 = vadd.f32 %v698, %v699
        %v701 = vsel %vm560, %v650, 0.0
        %v702 = vadd.f32 %v700, %v701
        %v703 = vsel %vm560, %v651, 0.0
        %v704 = vadd.f32 %v702, %v703
        %v705 = vsel %vm560, %v652, 0.0
        %v706 = vadd.f32 %v704, %v705
        %v707 = vsel %vm560, %v653, 0.0
        %v708 = vadd.f32 %v706, %v707
        %v709 = vsel %vm560, %v654, 0.0
        %v710 = vadd.f32 %v708, %v709
        %v711 = vsel %vm560, %v655, 0.0
        %v712 = vadd.f32 %v710, %v711
        %v713 = vsel %vm560, %v656, 0.0
        %v714 = vadd.f32 %v712, %v713
        %v715 = vsel %vm560, %v657, 0.0
        %v716 = vadd.f32 %v714, %v715
        %v717 = vsel %vm560, %v658, 0.0
        %v718 = vadd.f32 %v716, %v717
        %v719 = vsel %vm560, %v659, 0.0
        %v720 = vadd.f32 %v718, %v719
        %v721 = vsel %vm560, %v660, 0.0
        %v722 = vadd.f32 %v720, %v721
        %v723 = vsel %vm560, %v661, 0.0
        %v724 = vadd.f32 %v722, %v723
        %v725 = vrot.slane %v724, 4
        %v726 = vadd.f32 %v724, %v725
        %v727 = vrot.slane %v726, 2
        %v728 = vadd.f32 %v726, %v727
        %v729 = vrot.slane %v728, 1
        %v730 = vadd.f32 %v728, %v729
        %vm731 = vcmask 1040384
        %v732 = vsel %vm731, %v629, %v730
        %v734 = vsel %vm560, %v732, 0
        %736 = vmatprep.subr.mxu0 0.0
        %737 = vmatpush1.msra.mxu0 0.0
        %738 = vmatprep.subr.mxu0 0.0
        %739 = vmatpush1.msra.mxu0 0.0
        %740 = vmatprep.subr.mxu0 0.0
        %741 = vmatpush1.msra.mxu0 0.0
        %742 = vmatprep.subr.mxu0 0.0
        %743 = vmatpush1.msra.mxu0 0.0
        %744 = vmatprep.subr.mxu0 0.0
        %745 = vmatpush1.msra.mxu0 0.0
        %746 = vmatprep.subr.mxu0 0.0
        %747 = vmatpush1.msra.mxu0 0.0
        %748 = vmatprep.subr.mxu0 0.0
        %749 = vmatpush1.msra.mxu0 0.0
        %750 = vmatprep.subr.mxu0 0.0
        %751 = vmatpush1.msra.mxu0 0.0
        %752 = vmatprep.subr.mxu0 0.0
        %753 = vmatpush1.msra.mxu0 %v553
        %754 = vmatprep.subr.mxu0 0.0
        %755 = vmatpush1.msra.mxu0 %v552
        %756 = vmatprep.subr.mxu0 0.0
        %757 = vmatpush1.msra.mxu0 %v551
        %758 = vmatprep.subr.mxu0 0.0
        %759 = vmatpush1.msra.mxu0 %v550
        %760 = vmatprep.subr.mxu0 0.0
        %761 = vmatpush1.msra.mxu0 %v549
        %762 = vmatprep.subr.mxu0 0.0
        %763 = vmatpush1.msra.mxu0 %v548
        %764 = vmatprep.subr.mxu0 0.0
        %765 = vmatpush1.msra.mxu0 %v547
        %766 = vmatprep.subr.mxu0 0.0
        %767 = vmatpush1.msra.mxu0 %v546
        %768 = vmatprep.subr.mxu0 0.0
        %769 = vmatpush2.msra.mxu0 0.0
        %770 = vmatprep.subr.mxu0 0.0
        %771 = vmatpush2.msra.mxu0 0.0
        %772 = vmatprep.subr.mxu0 0.0
        %773 = vmatpush2.msra.mxu0 0.0
        %774 = vmatprep.subr.mxu0 0.0
        %775 = vmatpush2.msra.mxu0 0.0
        %776 = vmatprep.subr.mxu0 0.0
        %777 = vmatpush2.msra.mxu0 0.0
        %778 = vmatprep.subr.mxu0 0.0
        %779 = vmatpush2.msra.mxu0 0.0
        %780 = vmatprep.subr.mxu0 0.0
        %781 = vmatpush2.msra.mxu0 0.0
        %782 = vmatprep.subr.mxu0 0.0
        %783 = vmatpush2.msra.mxu0 0.0
        %784 = vmatprep.subr.mxu0 0.0
        %785 = vmatpush2.msra.mxu0 0.0
        %786 = vmatprep.subr.mxu0 0.0
        %787 = vmatpush2.msra.mxu0 0.0
        %788 = vmatprep.subr.mxu0 0.0
        %789 = vmatpush2.msra.mxu0 0.0
        %790 = vmatprep.subr.mxu0 0.0
        %791 = vmatpush2.msra.mxu0 0.0
        %792 = vmatprep.subr.mxu0 0.0
        %793 = vmatpush2.msra.mxu0 0.0
        %794 = vmatprep.subr.mxu0 0.0
        %795 = vmatpush2.msra.mxu0 0.0
        %796 = vmatprep.subr.mxu0 0.0
        %797 = vmatpush2.msra.mxu0 0.0
        %798 = vmatprep.subr.mxu0 0.0
        %799 = vmatpush2.msra.mxu0 0.0
        %800 = vmatprep.mubr.f32.mxu0 0.0
        %801 = vmatmul.mubr.f32.gmra.mxu0 %v734
        %v802 = vpop.f32.mrf.mxu0
        %v803 = vadd.f32 0.0, %v802
        %v804 = vpop.f32.mrf.mxu0
        %805 = vdwg.mxu0
        %v806 = vmul.f32 %v803, 0.001953125
        %v807 = vmul.f32 %v806, %v806
        %v809 = vrot.slane %v807, 7
        %v811 = vsub.f32 %v806, %v809
        %v812 = vadd.f32 %v811, 1e-05
        %v813 = vrsqrt.pop %v812
        %v814 = vsel %vm731, %v806, %v813
        %vm815 = vcmask 261120
        %v817 = vsel %vm815, %v814, 0
        %819 = vmatprep.subr.mxu0 0.0
        %820 = vmatpush1.msra.mxu0 0.0
        %821 = vmatprep.subr.mxu0 0.0
        %822 = vmatpush1.msra.mxu0 0.0
        %823 = vmatprep.subr.mxu0 0.0
        %824 = vmatpush1.msra.mxu0 0.0
        %825 = vmatprep.subr.mxu0 0.0
        %826 = vmatpush1.msra.mxu0 0.0
        %827 = vmatprep.subr.mxu0 0.0
        %828 = vmatpush1.msra.mxu0 0.0
        %829 = vmatprep.subr.mxu0 0.0
        %830 = vmatpush1.msra.mxu0 0.0
        %831 = vmatprep.subr.mxu0 0.0
        %832 = vmatpush1.msra.mxu0 0.0
        %833 = vmatprep.subr.mxu0 0.0
        %834 = vmatpush1.msra.mxu0 0.0
        %835 = vmatprep.subr.mxu0 0.0
        %836 = vmatpush1.msra.mxu0 0.0
        %837 = vmatprep.subr.mxu0 0.0
        %838 = vmatpush1.msra.mxu0 0.0
        %839 = vmatprep.subr.mxu0 0.0
        %840 = vmatpush1.msra.mxu0 0.0
        %841 = vmatprep.subr.mxu0 0.0
        %842 = vmatpush1.msra.mxu0 0.0
        %843 = vmatprep.subr.mxu0 0.0
        %844 = vmatpush1.msra.mxu0 %v557
        %845 = vmatprep.subr.mxu0 0.0
        %846 = vmatpush1.msra.mxu0 %v556
        %847 = vmatprep.subr.mxu0 0.0
        %848 = vmatpush1.msra.mxu0 %v555
        %849 = vmatprep.subr.mxu0 0.0
        %850 = vmatpush1.msra.mxu0 %v554
        %851 = vmatprep.subr.mxu0 0.0
        %852 = vmatpush2.msra.mxu0 0.0
        %853 = vmatprep.subr.mxu0 0.0
        %854 = vmatpush2.msra.mxu0 0.0
        %855 = vmatprep.subr.mxu0 0.0
        %856 = vmatpush2.msra.mxu0 0.0
        %857 = vmatprep.subr.mxu0 0.0
        %858 = vmatpush2.msra.mxu0 0.0
        %859 = vmatprep.subr.mxu0 0.0
        %860 = vmatpush2.msra.mxu0 0.0
        %861 = vmatprep.subr.mxu0 0.0
        %862 = vmatpush2.msra.mxu0 0.0
        %863 = vmatprep.subr.mxu0 0.0
        %864 = vmatpush2.msra.mxu0 0.0
        %865 = vmatprep.subr.mxu0 0.0
        %866 = vmatpush2.msra.mxu0 0.0
        %867 = vmatprep.subr.mxu0 0.0
        %868 = vmatpush2.msra.mxu0 0.0
        %869 = vmatprep.subr.mxu0 0.0
        %870 = vmatpush2.msra.mxu0 0.0
        %871 = vmatprep.subr.mxu0 0.0
        %872 = vmatpush2.msra.mxu0 0.0
        %873 = vmatprep.subr.mxu0 0.0
        %874 = vmatpush2.msra.mxu0 0.0
        %875 = vmatprep.subr.mxu0 0.0
        %876 = vmatpush2.msra.mxu0 0.0
        %877 = vmatprep.subr.mxu0 0.0
        %878 = vmatpush2.msra.mxu0 0.0
        %879 = vmatprep.subr.mxu0 0.0
        %880 = vmatpush2.msra.mxu0 0.0
        %881 = vmatprep.subr.mxu0 0.0
        %882 = vmatpush2.msra.mxu0 0.0
        %883 = vmatprep.mubr.f32.mxu0 0.0
        %884 = vmatmul.mubr.f32.gmra.mxu0 %v817
        %v885 = vpop.f32.mrf.mxu0
        %v886 = vadd.f32 0.0, %v885
        %v887 = vpop.f32.mrf.mxu0
        %888 = vdwg.mxu0
        %v890 = vlaneseq
        %v891 = vshrl.u32 %v890, 7
        %v892 = vsub.s32 0, %v891
        %v893 = vrot.slane %v558, %v892
        %v895 = vmul.f32 %v886, %v893
        %v897 = vrot.slane %v895, 1
        %v899 = vmul.f32 %v886, %v897
        %v900 = vsub.f32 %v559, %v899
        %v901 = vlaneseq
        %v902 = vshrl.u32 %v901, 7
        %v903 = vsub.s32 1, %v902
        %v904 = vrot.slane %v895, %v903
        %v905 = vmul.f32 %v514, %v904
        %v906 = vmul.f32 %v515, %v904
        %v907 = vmul.f32 %v516, %v904
        %v908 = vmul.f32 %v517, %v904
        %v909 = vmul.f32 %v518, %v904
        %v910 = vmul.f32 %v519, %v904
        %v911 = vmul.f32 %v520, %v904
        %v912 = vmul.f32 %v521, %v904
        %v913 = vmul.f32 %v522, %v904
        %v914 = vmul.f32 %v523, %v904
        %v915 = vmul.f32 %v524, %v904
        %v916 = vmul.f32 %v525, %v904
        %v917 = vmul.f32 %v526, %v904
        %v918 = vmul.f32 %v527, %v904
        %v919 = vmul.f32 %v528, %v904
        %v920 = vmul.f32 %v529, %v904
        %v921 = vmul.f32 %v530, %v904
        %v922 = vmul.f32 %v531, %v904
        %v923 = vmul.f32 %v532, %v904
        %v924 = vmul.f32 %v533, %v904
        %v925 = vmul.f32 %v534, %v904
        %v926 = vmul.f32 %v535, %v904
        %v927 = vmul.f32 %v536, %v904
        %v928 = vmul.f32 %v537, %v904
        %v929 = vmul.f32 %v538, %v904
        %v930 = vmul.f32 %v539, %v904
        %v931 = vmul.f32 %v540, %v904
        %v932 = vmul.f32 %v541, %v904
        %v933 = vmul.f32 %v542, %v904
        %v934 = vmul.f32 %v543, %v904
        %v935 = vmul.f32 %v544, %v904
        %v936 = vmul.f32 %v545, %v904
        %v938 = vlaneseq
        %v939 = vshrl.u32 %v938, 7
        %v940 = vsub.s32 0, %v939
        %v941 = vrot.slane %v900, %v940
        %v943 = vadd.f32 %v905, %v941
        %v944 = vadd.f32 %v906, %v941
        %v945 = vadd.f32 %v907, %v941
        %v946 = vadd.f32 %v908, %v941
        %v947 = vadd.f32 %v909, %v941
        %v948 = vadd.f32 %v910, %v941
        %v949 = vadd.f32 %v911, %v941
        %v950 = vadd.f32 %v912, %v941
        %v951 = vadd.f32 %v913, %v941
        %v952 = vadd.f32 %v914, %v941
        %v953 = vadd.f32 %v915, %v941
        %v954 = vadd.f32 %v916, %v941
        %v955 = vadd.f32 %v917, %v941
        %v956 = vadd.f32 %v918, %v941
        %v957 = vadd.f32 %v919, %v941
        %v958 = vadd.f32 %v920, %v941
        %v959 = vadd.f32 %v921, %v941
        %v960 = vadd.f32 %v922, %v941
        %v961 = vadd.f32 %v923, %v941
        %v962 = vadd.f32 %v924, %v941
        %v963 = vadd.f32 %v925, %v941
        %v964 = vadd.f32 %v926, %v941
        %v965 = vadd.f32 %v927, %v941
        %v966 = vadd.f32 %v928, %v941
        %v967 = vadd.f32 %v929, %v941
        %v968 = vadd.f32 %v930, %v941
        %v969 = vadd.f32 %v931, %v941
        %v970 = vadd.f32 %v932, %v941
        %v971 = vadd.f32 %v933, %v941
        %v972 = vadd.f32 %v934, %v941
        %v973 = vadd.f32 %v935, %v941
        %v974 = vadd.f32 %v936, %v941
        %v975 = vmax.f32 %v943, 0.0
        %v976 = vmax.f32 %v944, 0.0
        %v977 = vmax.f32 %v945, 0.0
        %v978 = vmax.f32 %v946, 0.0
        %v979 = vmax.f32 %v947, 0.0
        %v980 = vmax.f32 %v948, 0.0
        %v981 = vmax.f32 %v949, 0.0
        %v982 = vmax.f32 %v950, 0.0
        %v983 = vmax.f32 %v951, 0.0
        %v984 = vmax.f32 %v952, 0.0
        %v985 = vmax.f32 %v953, 0.0
        %v986 = vmax.f32 %v954, 0.0
        %v987 = vmax.f32 %v955, 0.0
        %v988 = vmax.f32 %v956, 0.0
        %v989 = vmax.f32 %v957, 0.0
        %v990 = vmax.f32 %v958, 0.0
        %v991 = vmax.f32 %v959, 0.0
        %v992 = vmax.f32 %v960, 0.0
        %v993 = vmax.f32 %v961, 0.0
        %v994 = vmax.f32 %v962, 0.0
        %v995 = vmax.f32 %v963, 0.0
        %v996 = vmax.f32 %v964, 0.0
        %v997 = vmax.f32 %v965, 0.0
        %v998 = vmax.f32 %v966, 0.0
        %v999 = vmax.f32 %v967, 0.0
        %v1000 = vmax.f32 %v968, 0.0
        %v1001 = vmax.f32 %v969, 0.0
        %v1002 = vmax.f32 %v970, 0.0
        %v1003 = vmax.f32 %v971, 0.0
        %v1004 = vmax.f32 %v972, 0.0
        %v1005 = vmax.f32 %v973, 0.0
        %v1006 = vmax.f32 %v974, 0.0
        %v1007 = vpack.c.bf16 %v976, %v975
        %v1008 = vpack.c.bf16 %v978, %v977
        %v1009 = vpack.c.bf16 %v980, %v979
        %v1010 = vpack.c.bf16 %v982, %v981
        %v1011 = vpack.c.bf16 %v984, %v983
        %v1012 = vpack.c.bf16 %v986, %v985
        %v1013 = vpack.c.bf16 %v988, %v987
        %v1014 = vpack.c.bf16 %v990, %v989
        %v1015 = vpack.c.bf16 %v992, %v991
        %v1016 = vpack.c.bf16 %v994, %v993
        %v1017 = vpack.c.bf16 %v996, %v995
        %v1018 = vpack.c.bf16 %v998, %v997
        %v1019 = vpack.c.bf16 %v1000, %v999
        %v1020 = vpack.c.bf16 %v1002, %v1001
        %v1021 = vpack.c.bf16 %v1004, %v1003
        %v1022 = vpack.c.bf16 %v1006, %v1005
        %v1023 = vld [vmem:[%s14] sm:$0xf]
        %v1024 = vld [vmem:[%s14 + $0x4] sm:$0xf]
        %v1025 = vld [vmem:[%s14 + $0x8] sm:$0xf]
        %v1026 = vld [vmem:[%s14 + $0xc] sm:$0xf]
        %v1027 = vld [vmem:[%s14 + $0x10] sm:$0xf]
        %v1028 = vld [vmem:[%s14 + $0x14] sm:$0xf]
        %v1029 = vld [vmem:[%s14 + $0x18] sm:$0xf]
        %v1030 = vld [vmem:[%s14 + $0x1c] sm:$0xf]
        %v1039 = vunpack.c.l.b16 %v1023
        %v1040 = vunpack.c.l.b16 %v1024
        %v1041 = vunpack.c.l.b16 %v1025
        %v1042 = vunpack.c.l.b16 %v1026
        %v1043 = vunpack.c.l.b16 %v1027
        %v1044 = vunpack.c.l.b16 %v1028
        %v1045 = vunpack.c.l.b16 %v1029
        %v1046 = vunpack.c.l.b16 %v1030
        %v1047 = vpack.c.b16 %v1040, %v1039
        %v1048 = vpack.c.b16 %v1042, %v1041
        %v1049 = vpack.c.b16 %v1044, %v1043
        %v1050 = vpack.c.b16 %v1046, %v1045
        %v1056 = vsel %vm560, %v1007, 0
        %v1059 = vsel %vm560, %v1008, 0
        %v1062 = vsel %vm560, %v1009, 0
        %v1065 = vsel %vm560, %v1010, 0
        %v1068 = vsel %vm560, %v1011, 0
        %v1071 = vsel %vm560, %v1012, 0
        %v1074 = vsel %vm560, %v1013, 0
        %v1077 = vsel %vm560, %v1014, 0
        %v1080 = vsel %vm560, %v1015, 0
        %v1083 = vsel %vm560, %v1016, 0
        %v1086 = vsel %vm560, %v1017, 0
        %v1089 = vsel %vm560, %v1018, 0
        %v1092 = vsel %vm560, %v1019, 0
        %v1095 = vsel %vm560, %v1020, 0
        %v1098 = vsel %vm560, %v1021, 0
        %v1101 = vsel %vm560, %v1022, 0
        %1103 = vmatprep.subr.bf16.mxu0 0
        %1104 = vmatpush1.bf16.msra.mxu0 0
        %1105 = vmatprep.subr.bf16.mxu0 0
        %1106 = vmatpush1.bf16.msra.mxu0 0
        %1107 = vmatprep.subr.bf16.mxu0 0
        %1108 = vmatpush1.bf16.msra.mxu0 0
        %1109 = vmatprep.subr.bf16.mxu0 0
        %1110 = vmatpush1.bf16.msra.mxu0 0
        %1111 = vmatprep.subr.bf16.mxu0 0
        %1112 = vmatpush1.bf16.msra.mxu0 %v1050
        %1113 = vmatprep.subr.bf16.mxu0 0
        %1114 = vmatpush1.bf16.msra.mxu0 %v1049
        %1115 = vmatprep.subr.bf16.mxu0 0
        %1116 = vmatpush1.bf16.msra.mxu0 %v1048
        %1117 = vmatprep.subr.bf16.mxu0 0
        %1118 = vmatpush1.bf16.msra.mxu0 %v1047
        %1119 = vmatprep.subr.bf16.mxu0 0
        %1120 = vmatpush2.bf16.msra.mxu0 0
        %1121 = vmatprep.subr.bf16.mxu0 0
        %1122 = vmatpush2.bf16.msra.mxu0 0
        %1123 = vmatprep.subr.bf16.mxu0 0
        %1124 = vmatpush2.bf16.msra.mxu0 0
        %1125 = vmatprep.subr.bf16.mxu0 0
        %1126 = vmatpush2.bf16.msra.mxu0 0
        %1127 = vmatprep.subr.bf16.mxu0 0
        %1128 = vmatpush2.bf16.msra.mxu0 0
        %1129 = vmatprep.subr.bf16.mxu0 0
        %1130 = vmatpush2.bf16.msra.mxu0 0
        %1131 = vmatprep.subr.bf16.mxu0 0
        %1132 = vmatpush2.bf16.msra.mxu0 0
        %1133 = vmatprep.subr.bf16.mxu0 0
        %1134 = vmatpush2.bf16.msra.mxu0 0
        %1135 = vmatprep.mubr.bf16.mxu0 0
        %1136 = vmatmul.mubr.bf16.gmra.mxu0 %v1056
        %v1137 = vpop.f32.mrf.mxu0
        %v1138 = vadd.f32 0.0, %v1137
        %v1139 = vpop.f32.mrf.mxu0
        %v1140 = vpop.f32.mrf.mxu0
        %v1141 = vadd.f32 0.0, %v1140
        %v1142 = vpop.f32.mrf.mxu0
        %1143 = vmatprep.mubr.bf16.mxu0 0
        %1144 = vmatmul.mubr.bf16.gmra.mxu0 %v1059
        %v1145 = vpop.f32.mrf.mxu0
        %v1146 = vadd.f32 0.0, %v1145
        %v1147 = vpop.f32.mrf.mxu0
        %v1148 = vpop.f32.mrf.mxu0
        %v1149 = vadd.f32 0.0, %v1148
        %v1150 = vpop.f32.mrf.mxu0
        %1151 = vmatprep.mubr.bf16.mxu0 0
        %1152 = vmatmul.mubr.bf16.gmra.mxu0 %v1062
        %v1153 = vpop.f32.mrf.mxu0
        %v1154 = vadd.f32 0.0, %v1153
        %v1155 = vpop.f32.mrf.mxu0
        %v1156 = vpop.f32.mrf.mxu0
        %v1157 = vadd.f32 0.0, %v1156
        %v1158 = vpop.f32.mrf.mxu0
        %1159 = vmatprep.mubr.bf16.mxu0 0
        %1160 = vmatmul.mubr.bf16.gmra.mxu0 %v1065
        %v1161 = vpop.f32.mrf.mxu0
        %v1162 = vadd.f32 0.0, %v1161
        %v1163 = vpop.f32.mrf.mxu0
        %v1164 = vpop.f32.mrf.mxu0
        %v1165 = vadd.f32 0.0, %v1164
        %v1166 = vpop.f32.mrf.mxu0
        %1167 = vmatprep.mubr.bf16.mxu0 0
        %1168 = vmatmul.mubr.bf16.gmra.mxu0 %v1068
        %v1169 = vpop.f32.mrf.mxu0
        %v1170 = vadd.f32 0.0, %v1169
        %v1171 = vpop.f32.mrf.mxu0
        %v1172 = vpop.f32.mrf.mxu0
        %v1173 = vadd.f32 0.0, %v1172
        %v1174 = vpop.f32.mrf.mxu0
        %1175 = vmatprep.mubr.bf16.mxu0 0
        %1176 = vmatmul.mubr.bf16.gmra.mxu0 %v1071
        %v1177 = vpop.f32.mrf.mxu0
        %v1178 = vadd.f32 0.0, %v1177
        %v1179 = vpop.f32.mrf.mxu0
        %v1180 = vpop.f32.mrf.mxu0
        %v1181 = vadd.f32 0.0, %v1180
        %v1182 = vpop.f32.mrf.mxu0
        %1183 = vmatprep.mubr.bf16.mxu0 0
        %1184 = vmatmul.mubr.bf16.gmra.mxu0 %v1074
        %v1185 = vpop.f32.mrf.mxu0
        %v1186 = vadd.f32 0.0, %v1185
        %v1187 = vpop.f32.mrf.mxu0
        %v1188 = vpop.f32.mrf.mxu0
        %v1189 = vadd.f32 0.0, %v1188
        %v1190 = vpop.f32.mrf.mxu0
        %1191 = vmatprep.mubr.bf16.mxu0 0
        %1192 = vmatmul.mubr.bf16.gmra.mxu0 %v1077
        %v1193 = vpop.f32.mrf.mxu0
        %v1194 = vadd.f32 0.0, %v1193
        %v1195 = vpop.f32.mrf.mxu0
        %v1196 = vpop.f32.mrf.mxu0
        %v1197 = vadd.f32 0.0, %v1196
        %v1198 = vpop.f32.mrf.mxu0
        %1199 = vmatprep.mubr.bf16.mxu0 0
        %1200 = vmatmul.mubr.bf16.gmra.mxu0 %v1080
        %v1201 = vpop.f32.mrf.mxu0
        %v1202 = vadd.f32 0.0, %v1201
        %v1203 = vpop.f32.mrf.mxu0
        %v1204 = vpop.f32.mrf.mxu0
        %v1205 = vadd.f32 0.0, %v1204
        %v1206 = vpop.f32.mrf.mxu0
        %1207 = vmatprep.mubr.bf16.mxu0 0
        %1208 = vmatmul.mubr.bf16.gmra.mxu0 %v1083
        %v1209 = vpop.f32.mrf.mxu0
        %v1210 = vadd.f32 0.0, %v1209
        %v1211 = vpop.f32.mrf.mxu0
        %v1212 = vpop.f32.mrf.mxu0
        %v1213 = vadd.f32 0.0, %v1212
        %v1214 = vpop.f32.mrf.mxu0
        %1215 = vmatprep.mubr.bf16.mxu0 0
        %1216 = vmatmul.mubr.bf16.gmra.mxu0 %v1086
        %v1217 = vpop.f32.mrf.mxu0
        %v1218 = vadd.f32 0.0, %v1217
        %v1219 = vpop.f32.mrf.mxu0
        %v1220 = vpop.f32.mrf.mxu0
        %v1221 = vadd.f32 0.0, %v1220
        %v1222 = vpop.f32.mrf.mxu0
        %1223 = vmatprep.mubr.bf16.mxu0 0
        %1224 = vmatmul.mubr.bf16.gmra.mxu0 %v1089
        %v1225 = vpop.f32.mrf.mxu0
        %v1226 = vadd.f32 0.0, %v1225
        %v1227 = vpop.f32.mrf.mxu0
        %v1228 = vpop.f32.mrf.mxu0
        %v1229 = vadd.f32 0.0, %v1228
        %v1230 = vpop.f32.mrf.mxu0
        %1231 = vmatprep.mubr.bf16.mxu0 0
        %1232 = vmatmul.mubr.bf16.gmra.mxu0 %v1092
        %v1233 = vpop.f32.mrf.mxu0
        %v1234 = vadd.f32 0.0, %v1233
        %v1235 = vpop.f32.mrf.mxu0
        %v1236 = vpop.f32.mrf.mxu0
        %v1237 = vadd.f32 0.0, %v1236
        %v1238 = vpop.f32.mrf.mxu0
        %1239 = vmatprep.mubr.bf16.mxu0 0
        %1240 = vmatmul.mubr.bf16.gmra.mxu0 %v1095
        %v1241 = vpop.f32.mrf.mxu0
        %v1242 = vadd.f32 0.0, %v1241
        %v1243 = vpop.f32.mrf.mxu0
        %v1244 = vpop.f32.mrf.mxu0
        %v1245 = vadd.f32 0.0, %v1244
        %v1246 = vpop.f32.mrf.mxu0
        %1247 = vmatprep.mubr.bf16.mxu0 0
        %1248 = vmatmul.mubr.bf16.gmra.mxu0 %v1098
        %v1249 = vpop.f32.mrf.mxu0
        %v1250 = vadd.f32 0.0, %v1249
        %v1251 = vpop.f32.mrf.mxu0
        %v1252 = vpop.f32.mrf.mxu0
        %v1253 = vadd.f32 0.0, %v1252
        %v1254 = vpop.f32.mrf.mxu0
        %1255 = vmatprep.mubr.bf16.mxu0 0
        %1256 = vmatmul.mubr.bf16.gmra.mxu0 %v1101
        %v1257 = vpop.f32.mrf.mxu0
        %v1258 = vadd.f32 0.0, %v1257
        %v1259 = vpop.f32.mrf.mxu0
        %v1260 = vpop.f32.mrf.mxu0
        %v1261 = vadd.f32 0.0, %v1260
        %v1262 = vpop.f32.mrf.mxu0
        %1263 = vdwg.mxu0
        %v1264 = vld [vmem:[%s5] sm:$0xf]
        %v1265 = vld [vmem:[%s5 + $0x4] sm:$0xf]
        %v1266 = vld [vmem:[%s5 + $0x8] sm:$0xf]
        %v1267 = vld [vmem:[%s5 + $0xc] sm:$0xf]
        %v1268 = vld [vmem:[%s5 + $0x10] sm:$0xf]
        %v1269 = vld [vmem:[%s5 + $0x14] sm:$0xf]
        %v1270 = vld [vmem:[%s5 + $0x18] sm:$0xf]
        %v1271 = vld [vmem:[%s5 + $0x1c] sm:$0xf]
        %v1280 = vunpack.c.l.b16 %v1264
        %v1281 = vunpack.c.l.b16 %v1265
        %v1282 = vunpack.c.l.b16 %v1266
        %v1283 = vunpack.c.l.b16 %v1267
        %v1284 = vunpack.c.l.b16 %v1268
        %v1285 = vunpack.c.l.b16 %v1269
        %v1286 = vunpack.c.l.b16 %v1270
        %v1287 = vunpack.c.l.b16 %v1271
        %v1288 = vpack.c.b16 %v1281, %v1280
        %v1289 = vpack.c.b16 %v1283, %v1282
        %v1290 = vpack.c.b16 %v1285, %v1284
        %v1291 = vpack.c.b16 %v1287, %v1286
        %1296 = vmatprep.subr.bf16.mxu0 0
        %1297 = vmatpush1.bf16.msra.mxu0 0
        %1298 = vmatprep.subr.bf16.mxu0 0
        %1299 = vmatpush1.bf16.msra.mxu0 0
        %1300 = vmatprep.subr.bf16.mxu0 0
        %1301 = vmatpush1.bf16.msra.mxu0 0
        %1302 = vmatprep.subr.bf16.mxu0 0
        %1303 = vmatpush1.bf16.msra.mxu0 0
        %1304 = vmatprep.subr.bf16.mxu0 0
        %1305 = vmatpush1.bf16.msra.mxu0 %v1291
        %1306 = vmatprep.subr.bf16.mxu0 0
        %1307 = vmatpush1.bf16.msra.mxu0 %v1290
        %1308 = vmatprep.subr.bf16.mxu0 0
        %1309 = vmatpush1.bf16.msra.mxu0 %v1289
        %1310 = vmatprep.subr.bf16.mxu0 0
        %1311 = vmatpush1.bf16.msra.mxu0 %v1288
        %1312 = vmatprep.subr.bf16.mxu0 0
        %1313 = vmatpush2.bf16.msra.mxu0 0
        %1314 = vmatprep.subr.bf16.mxu0 0
        %1315 = vmatpush2.bf16.msra.mxu0 0
        %1316 = vmatprep.subr.bf16.mxu0 0
        %1317 = vmatpush2.bf16.msra.mxu0 0
        %1318 = vmatprep.subr.bf16.mxu0 0
        %1319 = vmatpush2.bf16.msra.mxu0 0
        %1320 = vmatprep.subr.bf16.mxu0 0
        %1321 = vmatpush2.bf16.msra.mxu0 0
        %1322 = vmatprep.subr.bf16.mxu0 0
        %1323 = vmatpush2.bf16.msra.mxu0 0
        %1324 = vmatprep.subr.bf16.mxu0 0
        %1325 = vmatpush2.bf16.msra.mxu0 0
        %1326 = vmatprep.subr.bf16.mxu0 0
        %1327 = vmatpush2.bf16.msra.mxu0 0
        %1328 = vmatprep.mubr.bf16.mxu0 0
        %1329 = vmatmul.mubr.bf16.gmra.mxu0 %v1056
        %v1330 = vpop.f32.mrf.mxu0
        %v1331 = vadd.f32 0.0, %v1330
        %v1332 = vpop.f32.mrf.mxu0
        %v1333 = vpop.f32.mrf.mxu0
        %v1334 = vadd.f32 0.0, %v1333
        %v1335 = vpop.f32.mrf.mxu0
        %1336 = vmatprep.mubr.bf16.mxu0 0
        %1337 = vmatmul.mubr.bf16.gmra.mxu0 %v1059
        %v1338 = vpop.f32.mrf.mxu0
        %v1339 = vadd.f32 0.0, %v1338
        %v1340 = vpop.f32.mrf.mxu0
        %v1341 = vpop.f32.mrf.mxu0
        %v1342 = vadd.f32 0.0, %v1341
        %v1343 = vpop.f32.mrf.mxu0
        %1344 = vmatprep.mubr.bf16.mxu0 0
        %1345 = vmatmul.mubr.bf16.gmra.mxu0 %v1062
        %v1346 = vpop.f32.mrf.mxu0
        %v1347 = vadd.f32 0.0, %v1346
        %v1348 = vpop.f32.mrf.mxu0
        %v1349 = vpop.f32.mrf.mxu0
        %v1350 = vadd.f32 0.0, %v1349
        %v1351 = vpop.f32.mrf.mxu0
        %1352 = vmatprep.mubr.bf16.mxu0 0
        %1353 = vmatmul.mubr.bf16.gmra.mxu0 %v1065
        %v1354 = vpop.f32.mrf.mxu0
        %v1355 = vadd.f32 0.0, %v1354
        %v1356 = vpop.f32.mrf.mxu0
        %v1357 = vpop.f32.mrf.mxu0
        %v1358 = vadd.f32 0.0, %v1357
        %v1359 = vpop.f32.mrf.mxu0
        %1360 = vmatprep.mubr.bf16.mxu0 0
        %1361 = vmatmul.mubr.bf16.gmra.mxu0 %v1068
        %v1362 = vpop.f32.mrf.mxu0
        %v1363 = vadd.f32 0.0, %v1362
        %v1364 = vpop.f32.mrf.mxu0
        %v1365 = vpop.f32.mrf.mxu0
        %v1366 = vadd.f32 0.0, %v1365
        %v1367 = vpop.f32.mrf.mxu0
        %1368 = vmatprep.mubr.bf16.mxu0 0
        %1369 = vmatmul.mubr.bf16.gmra.mxu0 %v1071
        %v1370 = vpop.f32.mrf.mxu0
        %v1371 = vadd.f32 0.0, %v1370
        %v1372 = vpop.f32.mrf.mxu0
        %v1373 = vpop.f32.mrf.mxu0
        %v1374 = vadd.f32 0.0, %v1373
        %v1375 = vpop.f32.mrf.mxu0
        %1376 = vmatprep.mubr.bf16.mxu0 0
        %1377 = vmatmul.mubr.bf16.gmra.mxu0 %v1074
        %v1378 = vpop.f32.mrf.mxu0
        %v1379 = vadd.f32 0.0, %v1378
        %v1380 = vpop.f32.mrf.mxu0
        %v1381 = vpop.f32.mrf.mxu0
        %v1382 = vadd.f32 0.0, %v1381
        %v1383 = vpop.f32.mrf.mxu0
        %1384 = vmatprep.mubr.bf16.mxu0 0
        %1385 = vmatmul.mubr.bf16.gmra.mxu0 %v1077
        %v1386 = vpop.f32.mrf.mxu0
        %v1387 = vadd.f32 0.0, %v1386
        %v1388 = vpop.f32.mrf.mxu0
        %v1389 = vpop.f32.mrf.mxu0
        %v1390 = vadd.f32 0.0, %v1389
        %v1391 = vpop.f32.mrf.mxu0
        %1392 = vmatprep.mubr.bf16.mxu0 0
        %1393 = vmatmul.mubr.bf16.gmra.mxu0 %v1080
        %v1394 = vpop.f32.mrf.mxu0
        %v1395 = vadd.f32 0.0, %v1394
        %v1396 = vpop.f32.mrf.mxu0
        %v1397 = vpop.f32.mrf.mxu0
        %v1398 = vadd.f32 0.0, %v1397
        %v1399 = vpop.f32.mrf.mxu0
        %1400 = vmatprep.mubr.bf16.mxu0 0
        %1401 = vmatmul.mubr.bf16.gmra.mxu0 %v1083
        %v1402 = vpop.f32.mrf.mxu0
        %v1403 = vadd.f32 0.0, %v1402
        %v1404 = vpop.f32.mrf.mxu0
        %v1405 = vpop.f32.mrf.mxu0
        %v1406 = vadd.f32 0.0, %v1405
        %v1407 = vpop.f32.mrf.mxu0
        %1408 = vmatprep.mubr.bf16.mxu0 0
        %1409 = vmatmul.mubr.bf16.gmra.mxu0 %v1086
        %v1410 = vpop.f32.mrf.mxu0
        %v1411 = vadd.f32 0.0, %v1410
        %v1412 = vpop.f32.mrf.mxu0
        %v1413 = vpop.f32.mrf.mxu0
        %v1414 = vadd.f32 0.0, %v1413
        %v1415 = vpop.f32.mrf.mxu0
        %1416 = vmatprep.mubr.bf16.mxu0 0
        %1417 = vmatmul.mubr.bf16.gmra.mxu0 %v1089
        %v1418 = vpop.f32.mrf.mxu0
        %v1419 = vadd.f32 0.0, %v1418
        %v1420 = vpop.f32.mrf.mxu0
        %v1421 = vpop.f32.mrf.mxu0
        %v1422 = vadd.f32 0.0, %v1421
        %v1423 = vpop.f32.mrf.mxu0
        %1424 = vmatprep.mubr.bf16.mxu0 0
        %1425 = vmatmul.mubr.bf16.gmra.mxu0 %v1092
        %v1426 = vpop.f32.mrf.mxu0
        %v1427 = vadd.f32 0.0, %v1426
        %v1428 = vpop.f32.mrf.mxu0
        %v1429 = vpop.f32.mrf.mxu0
        %v1430 = vadd.f32 0.0, %v1429
        %v1431 = vpop.f32.mrf.mxu0
        %1432 = vmatprep.mubr.bf16.mxu0 0
        %1433 = vmatmul.mubr.bf16.gmra.mxu0 %v1095
        %v1434 = vpop.f32.mrf.mxu0
        %v1435 = vadd.f32 0.0, %v1434
        %v1436 = vpop.f32.mrf.mxu0
        %v1437 = vpop.f32.mrf.mxu0
        %v1438 = vadd.f32 0.0, %v1437
        %v1439 = vpop.f32.mrf.mxu0
        %1440 = vmatprep.mubr.bf16.mxu0 0
        %1441 = vmatmul.mubr.bf16.gmra.mxu0 %v1098
        %v1442 = vpop.f32.mrf.mxu0
        %v1443 = vadd.f32 0.0, %v1442
        %v1444 = vpop.f32.mrf.mxu0
        %v1445 = vpop.f32.mrf.mxu0
        %v1446 = vadd.f32 0.0, %v1445
        %v1447 = vpop.f32.mrf.mxu0
        %1448 = vmatprep.mubr.bf16.mxu0 0
        %1449 = vmatmul.mubr.bf16.gmra.mxu0 %v1101
        %v1450 = vpop.f32.mrf.mxu0
        %v1451 = vadd.f32 0.0, %v1450
        %v1452 = vpop.f32.mrf.mxu0
        %v1453 = vpop.f32.mrf.mxu0
        %v1454 = vadd.f32 0.0, %v1453
        %v1455 = vpop.f32.mrf.mxu0
        %1456 = vdwg.mxu0
        %v1457 = vld [vmem:[%s6] sm:$0xff]
        %v1458 = vld [vmem:[%s6 + $0x8] sm:$0xff]
        %v1459 = vld [vmem:[%s6 + $0x10] sm:$0xff]
        %v1460 = vld [vmem:[%s6 + $0x18] sm:$0xff]
        %v1461 = vld [vmem:[%s7] sm:$0xff]
        %v1462 = vld [vmem:[%s7 + $0x8] sm:$0xff]
        %v1463 = vld [vmem:[%s7 + $0x10] sm:$0xff]
        %v1464 = vld [vmem:[%s7 + $0x18] sm:$0xff]
        %v1465 = vld [vmem:[%s8] sm:$0x1]
        %v1466 = vld [vmem:[%s9] sm:$0x1]
        %v1467 = vsel %vm815, %v1331, 0.0
        %v1468 = vsel %vm815, %v1334, 0.0
        %v1469 = vadd.f32 %v1467, %v1468
        %v1470 = vsel %vm815, %v1339, 0.0
        %v1471 = vadd.f32 %v1469, %v1470
        %v1472 = vsel %vm815, %v1342, 0.0
        %v1473 = vadd.f32 %v1471, %v1472
        %v1474 = vsel %vm815, %v1347, 0.0
        %v1475 = vadd.f32 %v1473, %v1474
        %v1476 = vsel %vm815, %v1350, 0.0
        %v1477 = vadd.f32 %v1475, %v1476
        %v1478 = vsel %vm815, %v1355, 0.0
        %v1479 = vadd.f32 %v1477, %v1478
        %v1480 = vsel %vm815, %v1358, 0.0
        %v1481 = vadd.f32 %v1479, %v1480
        %v1482 = vsel %vm815, %v1363, 0.0
        %v1483 = vadd.f32 %v1481, %v1482
        %v1484 = vsel %vm815, %v1366, 0.0
        %v1485 = vadd.f32 %v1483, %v1484
        %v1486 = vsel %vm815, %v1371, 0.0
        %v1487 = vadd.f32 %v1485, %v1486
        %v1488 = vsel %vm815, %v1374, 0.0
        %v1489 = vadd.f32 %v1487, %v1488
        %v1490 = vsel %vm815, %v1379, 0.0
        %v1491 = vadd.f32 %v1489, %v1490
        %v1492 = vsel %vm815, %v1382, 0.0
        %v1493 = vadd.f32 %v1491, %v1492
        %v1494 = vsel %vm815, %v1387, 0.0
        %v1495 = vadd.f32 %v1493, %v1494
        %v1496 = vsel %vm815, %v1390, 0.0
        %v1497 = vadd.f32 %v1495, %v1496
        %v1498 = vsel %vm815, %v1395, 0.0
        %v1499 = vadd.f32 %v1497, %v1498
        %v1500 = vsel %vm815, %v1398, 0.0
        %v1501 = vadd.f32 %v1499, %v1500
        %v1502 = vsel %vm815, %v1403, 0.0
        %v1503 = vadd.f32 %v1501, %v1502
        %v1504 = vsel %vm815, %v1406, 0.0
        %v1505 = vadd.f32 %v1503, %v1504
        %v1506 = vsel %vm815, %v1411, 0.0
        %v1507 = vadd.f32 %v1505, %v1506
        %v1508 = vsel %vm815, %v1414, 0.0
        %v1509 = vadd.f32 %v1507, %v1508
        %v1510 = vsel %vm815, %v1419, 0.0
        %v1511 = vadd.f32 %v1509, %v1510
        %v1512 = vsel %vm815, %v1422, 0.0
        %v1513 = vadd.f32 %v1511, %v1512
        %v1514 = vsel %vm815, %v1427, 0.0
        %v1515 = vadd.f32 %v1513, %v1514
        %v1516 = vsel %vm815, %v1430, 0.0
        %v1517 = vadd.f32 %v1515, %v1516
        %v1518 = vsel %vm815, %v1435, 0.0
        %v1519 = vadd.f32 %v1517, %v1518
        %v1520 = vsel %vm815, %v1438, 0.0
        %v1521 = vadd.f32 %v1519, %v1520
        %v1522 = vsel %vm815, %v1443, 0.0
        %v1523 = vadd.f32 %v1521, %v1522
        %v1524 = vsel %vm815, %v1446, 0.0
        %v1525 = vadd.f32 %v1523, %v1524
        %v1526 = vsel %vm815, %v1451, 0.0
        %v1527 = vadd.f32 %v1525, %v1526
        %v1528 = vsel %vm815, %v1454, 0.0
        %v1529 = vadd.f32 %v1527, %v1528
        %v1530 = vrot.slane %v1529, 4
        %v1531 = vadd.f32 %v1529, %v1530
        %v1532 = vrot.slane %v1531, 2
        %v1533 = vadd.f32 %v1531, %v1532
        %v1534 = vrot.slane %v1533, 1
        %v1535 = vadd.f32 %v1533, %v1534
        %v1536 = vmul.f32 %v1331, %v1331
        %v1537 = vmul.f32 %v1334, %v1334
        %v1538 = vmul.f32 %v1339, %v1339
        %v1539 = vmul.f32 %v1342, %v1342
        %v1540 = vmul.f32 %v1347, %v1347
        %v1541 = vmul.f32 %v1350, %v1350
        %v1542 = vmul.f32 %v1355, %v1355
        %v1543 = vmul.f32 %v1358, %v1358
        %v1544 = vmul.f32 %v1363, %v1363
        %v1545 = vmul.f32 %v1366, %v1366
        %v1546 = vmul.f32 %v1371, %v1371
        %v1547 = vmul.f32 %v1374, %v1374
        %v1548 = vmul.f32 %v1379, %v1379
        %v1549 = vmul.f32 %v1382, %v1382
        %v1550 = vmul.f32 %v1387, %v1387
        %v1551 = vmul.f32 %v1390, %v1390
        %v1552 = vmul.f32 %v1395, %v1395
        %v1553 = vmul.f32 %v1398, %v1398
        %v1554 = vmul.f32 %v1403, %v1403
        %v1555 = vmul.f32 %v1406, %v1406
        %v1556 = vmul.f32 %v1411, %v1411
        %v1557 = vmul.f32 %v1414, %v1414
        %v1558 = vmul.f32 %v1419, %v1419
        %v1559 = vmul.f32 %v1422, %v1422
        %v1560 = vmul.f32 %v1427, %v1427
        %v1561 = vmul.f32 %v1430, %v1430
        %v1562 = vmul.f32 %v1435, %v1435
        %v1563 = vmul.f32 %v1438, %v1438
        %v1564 = vmul.f32 %v1443, %v1443
        %v1565 = vmul.f32 %v1446, %v1446
        %v1566 = vmul.f32 %v1451, %v1451
        %v1567 = vmul.f32 %v1454, %v1454
        %v1568 = vsel %vm815, %v1536, 0.0
        %v1569 = vsel %vm815, %v1537, 0.0
        %v1570 = vadd.f32 %v1568, %v1569
        %v1571 = vsel %vm815, %v1538, 0.0
        %v1572 = vadd.f32 %v1570, %v1571
        %v1573 = vsel %vm815, %v1539, 0.0
        %v1574 = vadd.f32 %v1572, %v1573
        %v1575 = vsel %vm815, %v1540, 0.0
        %v1576 = vadd.f32 %v1574, %v1575
        %v1577 = vsel %vm815, %v1541, 0.0
        %v1578 = vadd.f32 %v1576, %v1577
        %v1579 = vsel %vm815, %v1542, 0.0
        %v1580 = vadd.f32 %v1578, %v1579
        %v1581 = vsel %vm815, %v1543, 0.0
        %v1582 = vadd.f32 %v1580, %v1581
        %v1583 = vsel %vm815, %v1544, 0.0
        %v1584 = vadd.f32 %v1582, %v1583
        %v1585 = vsel %vm815, %v1545, 0.0
        %v1586 = vadd.f32 %v1584, %v1585
        %v1587 = vsel %vm815, %v1546, 0.0
        %v1588 = vadd.f32 %v1586, %v1587
        %v1589 = vsel %vm815, %v1547, 0.0
        %v1590 = vadd.f32 %v1588, %v1589
        %v1591 = vsel %vm815, %v1548, 0.0
        %v1592 = vadd.f32 %v1590, %v1591
        %v1593 = vsel %vm815, %v1549, 0.0
        %v1594 = vadd.f32 %v1592, %v1593
        %v1595 = vsel %vm815, %v1550, 0.0
        %v1596 = vadd.f32 %v1594, %v1595
        %v1597 = vsel %vm815, %v1551, 0.0
        %v1598 = vadd.f32 %v1596, %v1597
        %v1599 = vsel %vm815, %v1552, 0.0
        %v1600 = vadd.f32 %v1598, %v1599
        %v1601 = vsel %vm815, %v1553, 0.0
        %v1602 = vadd.f32 %v1600, %v1601
        %v1603 = vsel %vm815, %v1554, 0.0
        %v1604 = vadd.f32 %v1602, %v1603
        %v1605 = vsel %vm815, %v1555, 0.0
        %v1606 = vadd.f32 %v1604, %v1605
        %v1607 = vsel %vm815, %v1556, 0.0
        %v1608 = vadd.f32 %v1606, %v1607
        %v1609 = vsel %vm815, %v1557, 0.0
        %v1610 = vadd.f32 %v1608, %v1609
        %v1611 = vsel %vm815, %v1558, 0.0
        %v1612 = vadd.f32 %v1610, %v1611
        %v1613 = vsel %vm815, %v1559, 0.0
        %v1614 = vadd.f32 %v1612, %v1613
        %v1615 = vsel %vm815, %v1560, 0.0
        %v1616 = vadd.f32 %v1614, %v1615
        %v1617 = vsel %vm815, %v1561, 0.0
        %v1618 = vadd.f32 %v1616, %v1617
        %v1619 = vsel %vm815, %v1562, 0.0
        %v1620 = vadd.f32 %v1618, %v1619
        %v1621 = vsel %vm815, %v1563, 0.0
        %v1622 = vadd.f32 %v1620, %v1621
        %v1623 = vsel %vm815, %v1564, 0.0
        %v1624 = vadd.f32 %v1622, %v1623
        %v1625 = vsel %vm815, %v1565, 0.0
        %v1626 = vadd.f32 %v1624, %v1625
        %v1627 = vsel %vm815, %v1566, 0.0
        %v1628 = vadd.f32 %v1626, %v1627
        %v1629 = vsel %vm815, %v1567, 0.0
        %v1630 = vadd.f32 %v1628, %v1629
        %v1631 = vrot.slane %v1630, 4
        %v1632 = vadd.f32 %v1630, %v1631
        %v1633 = vrot.slane %v1632, 2
        %v1634 = vadd.f32 %v1632, %v1633
        %v1635 = vrot.slane %v1634, 1
        %v1636 = vadd.f32 %v1634, %v1635
        %v1637 = vsel %vm731, %v1535, %v1636
        %v1639 = vsel %vm815, %v1637, 0
        %1641 = vmatprep.subr.mxu0 0.0
        %1642 = vmatpush1.msra.mxu0 0.0
        %1643 = vmatprep.subr.mxu0 0.0
        %1644 = vmatpush1.msra.mxu0 0.0
        %1645 = vmatprep.subr.mxu0 0.0
        %1646 = vmatpush1.msra.mxu0 0.0
        %1647 = vmatprep.subr.mxu0 0.0
        %1648 = vmatpush1.msra.mxu0 0.0
        %1649 = vmatprep.subr.mxu0 0.0
        %1650 = vmatpush1.msra.mxu0 0.0
        %1651 = vmatprep.subr.mxu0 0.0
        %1652 = vmatpush1.msra.mxu0 0.0
        %1653 = vmatprep.subr.mxu0 0.0
        %1654 = vmatpush1.msra.mxu0 0.0
        %1655 = vmatprep.subr.mxu0 0.0
        %1656 = vmatpush1.msra.mxu0 0.0
        %1657 = vmatprep.subr.mxu0 0.0
        %1658 = vmatpush1.msra.mxu0 0.0
        %1659 = vmatprep.subr.mxu0 0.0
        %1660 = vmatpush1.msra.mxu0 0.0
        %1661 = vmatprep.subr.mxu0 0.0
        %1662 = vmatpush1.msra.mxu0 0.0
        %1663 = vmatprep.subr.mxu0 0.0
        %1664 = vmatpush1.msra.mxu0 0.0
        %1665 = vmatprep.subr.mxu0 0.0
        %1666 = vmatpush1.msra.mxu0 %v1460
        %1667 = vmatprep.subr.mxu0 0.0
        %1668 = vmatpush1.msra.mxu0 %v1459
        %1669 = vmatprep.subr.mxu0 0.0
        %1670 = vmatpush1.msra.mxu0 %v1458
        %1671 = vmatprep.subr.mxu0 0.0
        %1672 = vmatpush1.msra.mxu0 %v1457
        %1673 = vmatprep.subr.mxu0 0.0
        %1674 = vmatpush2.msra.mxu0 0.0
        %1675 = vmatprep.subr.mxu0 0.0
        %1676 = vmatpush2.msra.mxu0 0.0
        %1677 = vmatprep.subr.mxu0 0.0
        %1678 = vmatpush2.msra.mxu0 0.0
        %1679 = vmatprep.subr.mxu0 0.0
        %1680 = vmatpush2.msra.mxu0 0.0
        %1681 = vmatprep.subr.mxu0 0.0
        %1682 = vmatpush2.msra.mxu0 0.0
        %1683 = vmatprep.subr.mxu0 0.0
        %1684 = vmatpush2.msra.mxu0 0.0
        %1685 = vmatprep.subr.mxu0 0.0
        %1686 = vmatpush2.msra.mxu0 0.0
        %1687 = vmatprep.subr.mxu0 0.0
        %1688 = vmatpush2.msra.mxu0 0.0
        %1689 = vmatprep.subr.mxu0 0.0
        %1690 = vmatpush2.msra.mxu0 0.0
        %1691 = vmatprep.subr.mxu0 0.0
        %1692 = vmatpush2.msra.mxu0 0.0
        %1693 = vmatprep.subr.mxu0 0.0
        %1694 = vmatpush2.msra.mxu0 0.0
        %1695 = vmatprep.subr.mxu0 0.0
        %1696 = vmatpush2.msra.mxu0 0.0
        %1697 = vmatprep.subr.mxu0 0.0
        %1698 = vmatpush2.msra.mxu0 0.0
        %1699 = vmatprep.subr.mxu0 0.0
        %1700 = vmatpush2.msra.mxu0 0.0
        %1701 = vmatprep.subr.mxu0 0.0
        %1702 = vmatpush2.msra.mxu0 0.0
        %1703 = vmatprep.subr.mxu0 0.0
        %1704 = vmatpush2.msra.mxu0 0.0
        %1705 = vmatprep.mubr.f32.mxu0 0.0
        %1706 = vmatmul.mubr.f32.gmra.mxu0 %v1639
        %v1707 = vpop.f32.mrf.mxu0
        %v1708 = vadd.f32 0.0, %v1707
        %v1709 = vpop.f32.mrf.mxu0
        %1710 = vdwg.mxu0
        %v1711 = vmul.f32 %v1708, 0.00390625
        %v1712 = vmul.f32 %v1711, %v1711
        %v1714 = vrot.slane %v1712, 7
        %v1716 = vsub.f32 %v1711, %v1714
        %v1717 = vadd.f32 %v1716, 1e-05
        %v1718 = vrsqrt.pop %v1717
        %v1719 = vsel %vm731, %v1711, %v1718
        %v1721 = vsel %vm815, %v1719, 0
        %1723 = vmatprep.subr.mxu0 0.0
        %1724 = vmatpush1.msra.mxu0 0.0
        %1725 = vmatprep.subr.mxu0 0.0
        %1726 = vmatpush1.msra.mxu0 0.0
        %1727 = vmatprep.subr.mxu0 0.0
        %1728 = vmatpush1.msra.mxu0 0.0
        %1729 = vmatprep.subr.mxu0 0.0
        %1730 = vmatpush1.msra.mxu0 0.0
        %1731 = vmatprep.subr.mxu0 0.0
        %1732 = vmatpush1.msra.mxu0 0.0
        %1733 = vmatprep.subr.mxu0 0.0
        %1734 = vmatpush1.msra.mxu0 0.0
        %1735 = vmatprep.subr.mxu0 0.0
        %1736 = vmatpush1.msra.mxu0 0.0
        %1737 = vmatprep.subr.mxu0 0.0
        %1738 = vmatpush1.msra.mxu0 0.0
        %1739 = vmatprep.subr.mxu0 0.0
        %1740 = vmatpush1.msra.mxu0 0.0
        %1741 = vmatprep.subr.mxu0 0.0
        %1742 = vmatpush1.msra.mxu0 0.0
        %1743 = vmatprep.subr.mxu0 0.0
        %1744 = vmatpush1.msra.mxu0 0.0
        %1745 = vmatprep.subr.mxu0 0.0
        %1746 = vmatpush1.msra.mxu0 0.0
        %1747 = vmatprep.subr.mxu0 0.0
        %1748 = vmatpush1.msra.mxu0 %v1464
        %1749 = vmatprep.subr.mxu0 0.0
        %1750 = vmatpush1.msra.mxu0 %v1463
        %1751 = vmatprep.subr.mxu0 0.0
        %1752 = vmatpush1.msra.mxu0 %v1462
        %1753 = vmatprep.subr.mxu0 0.0
        %1754 = vmatpush1.msra.mxu0 %v1461
        %1755 = vmatprep.subr.mxu0 0.0
        %1756 = vmatpush2.msra.mxu0 0.0
        %1757 = vmatprep.subr.mxu0 0.0
        %1758 = vmatpush2.msra.mxu0 0.0
        %1759 = vmatprep.subr.mxu0 0.0
        %1760 = vmatpush2.msra.mxu0 0.0
        %1761 = vmatprep.subr.mxu0 0.0
        %1762 = vmatpush2.msra.mxu0 0.0
        %1763 = vmatprep.subr.mxu0 0.0
        %1764 = vmatpush2.msra.mxu0 0.0
        %1765 = vmatprep.subr.mxu0 0.0
        %1766 = vmatpush2.msra.mxu0 0.0
        %1767 = vmatprep.subr.mxu0 0.0
        %1768 = vmatpush2.msra.mxu0 0.0
        %1769 = vmatprep.subr.mxu0 0.0
        %1770 = vmatpush2.msra.mxu0 0.0
        %1771 = vmatprep.subr.mxu0 0.0
        %1772 = vmatpush2.msra.mxu0 0.0
        %1773 = vmatprep.subr.mxu0 0.0
        %1774 = vmatpush2.msra.mxu0 0.0
        %1775 = vmatprep.subr.mxu0 0.0
        %1776 = vmatpush2.msra.mxu0 0.0
        %1777 = vmatprep.subr.mxu0 0.0
        %1778 = vmatpush2.msra.mxu0 0.0
        %1779 = vmatprep.subr.mxu0 0.0
        %1780 = vmatpush2.msra.mxu0 0.0
        %1781 = vmatprep.subr.mxu0 0.0
        %1782 = vmatpush2.msra.mxu0 0.0
        %1783 = vmatprep.subr.mxu0 0.0
        %1784 = vmatpush2.msra.mxu0 0.0
        %1785 = vmatprep.subr.mxu0 0.0
        %1786 = vmatpush2.msra.mxu0 0.0
        %1787 = vmatprep.mubr.f32.mxu0 0.0
        %1788 = vmatmul.mubr.f32.gmra.mxu0 %v1721
        %v1789 = vpop.f32.mrf.mxu0
        %v1790 = vadd.f32 0.0, %v1789
        %v1791 = vpop.f32.mrf.mxu0
        %1792 = vdwg.mxu0
        %v1794 = vlaneseq
        %v1795 = vshrl.u32 %v1794, 7
        %v1796 = vsub.s32 0, %v1795
        %v1797 = vrot.slane %v1465, %v1796
        %v1799 = vmul.f32 %v1790, %v1797
        %v1801 = vrot.slane %v1799, 1
        %v1803 = vmul.f32 %v1790, %v1801
        %v1804 = vsub.f32 %v1466, %v1803
        %v1805 = vlaneseq
        %v1806 = vshrl.u32 %v1805, 7
        %v1807 = vsub.s32 1, %v1806
        %v1808 = vrot.slane %v1799, %v1807
        %v1809 = vmul.f32 %v1331, %v1808
        %v1810 = vmul.f32 %v1334, %v1808
        %v1811 = vmul.f32 %v1339, %v1808
        %v1812 = vmul.f32 %v1342, %v1808
        %v1813 = vmul.f32 %v1347, %v1808
        %v1814 = vmul.f32 %v1350, %v1808
        %v1815 = vmul.f32 %v1355, %v1808
        %v1816 = vmul.f32 %v1358, %v1808
        %v1817 = vmul.f32 %v1363, %v1808
        %v1818 = vmul.f32 %v1366, %v1808
        %v1819 = vmul.f32 %v1371, %v1808
        %v1820 = vmul.f32 %v1374, %v1808
        %v1821 = vmul.f32 %v1379, %v1808
        %v1822 = vmul.f32 %v1382, %v1808
        %v1823 = vmul.f32 %v1387, %v1808
        %v1824 = vmul.f32 %v1390, %v1808
        %v1825 = vmul.f32 %v1395, %v1808
        %v1826 = vmul.f32 %v1398, %v1808
        %v1827 = vmul.f32 %v1403, %v1808
        %v1828 = vmul.f32 %v1406, %v1808
        %v1829 = vmul.f32 %v1411, %v1808
        %v1830 = vmul.f32 %v1414, %v1808
        %v1831 = vmul.f32 %v1419, %v1808
        %v1832 = vmul.f32 %v1422, %v1808
        %v1833 = vmul.f32 %v1427, %v1808
        %v1834 = vmul.f32 %v1430, %v1808
        %v1835 = vmul.f32 %v1435, %v1808
        %v1836 = vmul.f32 %v1438, %v1808
        %v1837 = vmul.f32 %v1443, %v1808
        %v1838 = vmul.f32 %v1446, %v1808
        %v1839 = vmul.f32 %v1451, %v1808
        %v1840 = vmul.f32 %v1454, %v1808
        %v1842 = vlaneseq
        %v1843 = vshrl.u32 %v1842, 7
        %v1844 = vsub.s32 0, %v1843
        %v1845 = vrot.slane %v1804, %v1844
        %v1847 = vadd.f32 %v1809, %v1845
        %v1848 = vadd.f32 %v1810, %v1845
        %v1849 = vadd.f32 %v1811, %v1845
        %v1850 = vadd.f32 %v1812, %v1845
        %v1851 = vadd.f32 %v1813, %v1845
        %v1852 = vadd.f32 %v1814, %v1845
        %v1853 = vadd.f32 %v1815, %v1845
        %v1854 = vadd.f32 %v1816, %v1845
        %v1855 = vadd.f32 %v1817, %v1845
        %v1856 = vadd.f32 %v1818, %v1845
        %v1857 = vadd.f32 %v1819, %v1845
        %v1858 = vadd.f32 %v1820, %v1845
        %v1859 = vadd.f32 %v1821, %v1845
        %v1860 = vadd.f32 %v1822, %v1845
        %v1861 = vadd.f32 %v1823, %v1845
        %v1862 = vadd.f32 %v1824, %v1845
        %v1863 = vadd.f32 %v1825, %v1845
        %v1864 = vadd.f32 %v1826, %v1845
        %v1865 = vadd.f32 %v1827, %v1845
        %v1866 = vadd.f32 %v1828, %v1845
        %v1867 = vadd.f32 %v1829, %v1845
        %v1868 = vadd.f32 %v1830, %v1845
        %v1869 = vadd.f32 %v1831, %v1845
        %v1870 = vadd.f32 %v1832, %v1845
        %v1871 = vadd.f32 %v1833, %v1845
        %v1872 = vadd.f32 %v1834, %v1845
        %v1873 = vadd.f32 %v1835, %v1845
        %v1874 = vadd.f32 %v1836, %v1845
        %v1875 = vadd.f32 %v1837, %v1845
        %v1876 = vadd.f32 %v1838, %v1845
        %v1877 = vadd.f32 %v1839, %v1845
        %v1878 = vadd.f32 %v1840, %v1845
        %v1879 = vmax.f32 %v1847, 0.0
        %v1880 = vmax.f32 %v1848, 0.0
        %v1881 = vmax.f32 %v1849, 0.0
        %v1882 = vmax.f32 %v1850, 0.0
        %v1883 = vmax.f32 %v1851, 0.0
        %v1884 = vmax.f32 %v1852, 0.0
        %v1885 = vmax.f32 %v1853, 0.0
        %v1886 = vmax.f32 %v1854, 0.0
        %v1887 = vmax.f32 %v1855, 0.0
        %v1888 = vmax.f32 %v1856, 0.0
        %v1889 = vmax.f32 %v1857, 0.0
        %v1890 = vmax.f32 %v1858, 0.0
        %v1891 = vmax.f32 %v1859, 0.0
        %v1892 = vmax.f32 %v1860, 0.0
        %v1893 = vmax.f32 %v1861, 0.0
        %v1894 = vmax.f32 %v1862, 0.0
        %v1895 = vmax.f32 %v1863, 0.0
        %v1896 = vmax.f32 %v1864, 0.0
        %v1897 = vmax.f32 %v1865, 0.0
        %v1898 = vmax.f32 %v1866, 0.0
        %v1899 = vmax.f32 %v1867, 0.0
        %v1900 = vmax.f32 %v1868, 0.0
        %v1901 = vmax.f32 %v1869, 0.0
        %v1902 = vmax.f32 %v1870, 0.0
        %v1903 = vmax.f32 %v1871, 0.0
        %v1904 = vmax.f32 %v1872, 0.0
        %v1905 = vmax.f32 %v1873, 0.0
        %v1906 = vmax.f32 %v1874, 0.0
        %v1907 = vmax.f32 %v1875, 0.0
        %v1908 = vmax.f32 %v1876, 0.0
        %v1909 = vmax.f32 %v1877, 0.0
        %v1910 = vmax.f32 %v1878, 0.0
        %v1911 = vpack.c.bf16 %v1880, %v1879
        %v1912 = vpack.c.bf16 %v1882, %v1881
        %v1913 = vpack.c.bf16 %v1884, %v1883
        %v1914 = vpack.c.bf16 %v1886, %v1885
        %v1915 = vpack.c.bf16 %v1888, %v1887
        %v1916 = vpack.c.bf16 %v1890, %v1889
        %v1917 = vpack.c.bf16 %v1892, %v1891
        %v1918 = vpack.c.bf16 %v1894, %v1893
        %v1919 = vpack.c.bf16 %v1896, %v1895
        %v1920 = vpack.c.bf16 %v1898, %v1897
        %v1921 = vpack.c.bf16 %v1900, %v1899
        %v1922 = vpack.c.bf16 %v1902, %v1901
        %v1923 = vpack.c.bf16 %v1904, %v1903
        %v1924 = vpack.c.bf16 %v1906, %v1905
        %v1925 = vpack.c.bf16 %v1908, %v1907
        %v1926 = vpack.c.bf16 %v1910, %v1909
        %v1928 = vshrl.u32 %v1911, 16
        %v1930 = vrot.slane %v1928, 7
        %v1931 = vshll.u32 %v1911, 16
        %v1933 = vor.u32 %v1930, %v1931
        %v1935 = vshrl.u32 %v1912, 16
        %v1937 = vrot.slane %v1935, 7
        %v1938 = vshll.u32 %v1912, 16
        %v1940 = vor.u32 %v1937, %v1938
        %v1942 = vshrl.u32 %v1913, 16
        %v1944 = vrot.slane %v1942, 7
        %v1945 = vshll.u32 %v1913, 16
        %v1947 = vor.u32 %v1944, %v1945
        %v1949 = vshrl.u32 %v1914, 16
        %v1951 = vrot.slane %v1949, 7
        %v1952 = vshll.u32 %v1914, 16
        %v1954 = vor.u32 %v1951, %v1952
        %v1956 = vshrl.u32 %v1915, 16
        %v1958 = vrot.slane %v1956, 7
        %v1959 = vshll.u32 %v1915, 16
        %v1961 = vor.u32 %v1958, %v1959
        %v1963 = vshrl.u32 %v1916, 16
        %v1965 = vrot.slane %v1963, 7
        %v1966 = vshll.u32 %v1916, 16
        %v1968 = vor.u32 %v1965, %v1966
        %v1970 = vshrl.u32 %v1917, 16
        %v1972 = vrot.slane %v1970, 7
        %v1973 = vshll.u32 %v1917, 16
        %v1975 = vor.u32 %v1972, %v1973
        %v1977 = vshrl.u32 %v1918, 16
        %v1979 = vrot.slane %v1977, 7
        %v1980 = vshll.u32 %v1918, 16
        %v1982 = vor.u32 %v1979, %v1980
        %v1984 = vshrl.u32 %v1919, 16
        %v1986 = vrot.slane %v1984, 7
        %v1987 = vshll.u32 %v1919, 16
        %v1989 = vor.u32 %v1986, %v1987
        %v1991 = vshrl.u32 %v1920, 16
        %v1993 = vrot.slane %v1991, 7
        %v1994 = vshll.u32 %v1920, 16
        %v1996 = vor.u32 %v1993, %v1994
        %v1998 = vshrl.u32 %v1921, 16
        %v2000 = vrot.slane %v1998, 7
        %v2001 = vshll.u32 %v1921, 16
        %v2003 = vor.u32 %v2000, %v2001
        %v2005 = vshrl.u32 %v1922, 16
        %v2007 = vrot.slane %v2005, 7
        %v2008 = vshll.u32 %v1922, 16
        %v2010 = vor.u32 %v2007, %v2008
        %v2012 = vshrl.u32 %v1923, 16
        %v2014 = vrot.slane %v2012, 7
        %v2015 = vshll.u32 %v1923, 16
        %v2017 = vor.u32 %v2014, %v2015
        %v2019 = vshrl.u32 %v1924, 16
        %v2021 = vrot.slane %v2019, 7
        %v2022 = vshll.u32 %v1924, 16
        %v2024 = vor.u32 %v2021, %v2022
        %v2026 = vshrl.u32 %v1925, 16
        %v2028 = vrot.slane %v2026, 7
        %v2029 = vshll.u32 %v1925, 16
        %v2031 = vor.u32 %v2028, %v2029
        %v2033 = vshrl.u32 %v1926, 16
        %v2035 = vrot.slane %v2033, 7
        %v2036 = vshll.u32 %v1926, 16
        %v2038 = vor.u32 %v2035, %v2036
        %vm2071 = vcmask 1040384
        %vm2072 = vsmask.f32 256
        %vm2073 = vmand %vm2071, %vm2072
        %v2074 = vsel %vm2073, 0, %v1933
        %v2075 = vsel %vm2073, 0, %v1940
        %v2076 = vsel %vm2073, 0, %v1947
        %v2077 = vsel %vm2073, 0, %v1954
        %v2078 = vsel %vm2073, 0, %v1961
        %v2079 = vsel %vm2073, 0, %v1968
        %v2080 = vsel %vm2073, 0, %v1975
        %v2081 = vsel %vm2073, 0, %v1982
        %v2082 = vsel %vm2073, 0, %v1989
        %v2083 = vsel %vm2073, 0, %v1996
        %v2084 = vsel %vm2073, 0, %v2003
        %v2085 = vsel %vm2073, 0, %v2010
        %v2086 = vsel %vm2073, 0, %v2017
        %v2087 = vsel %vm2073, 0, %v2024
        %v2088 = vsel %vm2073, 0, %v2031
        %v2089 = vsel %vm2073, 0, %v2038
        %v2090 = vsel %vm2073, %v1930, 0
        %v2091 = vsel %vm2073, %v1937, 0
        %v2092 = vsel %vm2073, %v1944, 0
        %v2093 = vsel %vm2073, %v1951, 0
        %v2094 = vsel %vm2073, %v1958, 0
        %v2095 = vsel %vm2073, %v1965, 0
        %v2096 = vsel %vm2073, %v1972, 0
        %v2097 = vsel %vm2073, %v1979, 0
        %v2098 = vsel %vm2073, %v1986, 0
        %v2099 = vsel %vm2073, %v1993, 0
        %v2100 = vsel %vm2073, %v2000, 0
        %v2101 = vsel %vm2073, %v2007, 0
        %v2102 = vsel %vm2073, %v2014, 0
        %v2103 = vsel %vm2073, %v2021, 0
        %v2104 = vsel %vm2073, %v2028, 0
        %v2105 = vsel %vm2073, %v2035, 0
        %vm2106 = vsmask.f32 7424
        %v2108 = vshrl.u32 0, 16
        %v2110 = vshll.u32 0, 16
        %v2112 = vrot.slane %v2110, 1
        %v2113 = vor.u32 %v2108, %v2112
        %v2114 = vsel %vm2106, %v2113, %v2112
        %v2116 = vshrl.u32 %v2074, 16
        %v2118 = vshll.u32 %v2074, 16
        %v2120 = vrot.slane %v2118, 1
        %v2121 = vor.u32 %v2116, %v2120
        %v2123 = vshll.u32 %v2090, 16
        %v2125 = vrot.slane %v2123, 1
        %v2126 = vsel %vm2106, %v2121, %v2125
        %v2128 = vshrl.u32 %v2075, 16
        %v2130 = vshll.u32 %v2075, 16
        %v2132 = vrot.slane %v2130, 1
        %v2133 = vor.u32 %v2128, %v2132
        %v2135 = vshll.u32 %v2091, 16
        %v2137 = vrot.slane %v2135, 1
        %v2138 = vsel %vm2106, %v2133, %v2137
        %v2140 = vshrl.u32 %v2076, 16
        %v2142 = vshll.u32 %v2076, 16
        %v2144 = vrot.slane %v2142, 1
        %v2145 = vor.u32 %v2140, %v2144
        %v2147 = vshll.u32 %v2092, 16
        %v2149 = vrot.slane %v2147, 1
        %v2150 = vsel %vm2106, %v2145, %v2149
        %v2152 = vshrl.u32 %v2077, 16
        %v2154 = vshll.u32 %v2077, 16
        %v2156 = vrot.slane %v2154, 1
        %v2157 = vor.u32 %v2152, %v2156
        %v2159 = vshll.u32 %v2093, 16
        %v2161 = vrot.slane %v2159, 1
        %v2162 = vsel %vm2106, %v2157, %v2161
        %v2164 = vshrl.u32 %v2078, 16
        %v2166 = vshll.u32 %v2078, 16
        %v2168 = vrot.slane %v2166, 1
        %v2169 = vor.u32 %v2164, %v2168
        %v2171 = vshll.u32 %v2094, 16
        %v2173 = vrot.slane %v2171, 1
        %v2174 = vsel %vm2106, %v2169, %v2173
        %v2176 = vshrl.u32 %v2079, 16
        %v2178 = vshll.u32 %v2079, 16
        %v2180 = vrot.slane %v2178, 1
        %v2181 = vor.u32 %v2176, %v2180
        %v2183 = vshll.u32 %v2095, 16
        %v2185 = vrot.slane %v2183, 1
        %v2186 = vsel %vm2106, %v2181, %v2185
        %v2188 = vshrl.u32 %v2080, 16
        %v2190 = vshll.u32 %v2080, 16
        %v2192 = vrot.slane %v2190, 1
        %v2193 = vor.u32 %v2188, %v2192
        %v2195 = vshll.u32 %v2096, 16
        %v2197 = vrot.slane %v2195, 1
        %v2198 = vsel %vm2106, %v2193, %v2197
        %v2200 = vshrl.u32 %v2081, 16
        %v2202 = vshll.u32 %v2081, 16
        %v2204 = vrot.slane %v2202, 1
        %v2205 = vor.u32 %v2200, %v2204
        %v2207 = vshll.u32 %v2097, 16
        %v2209 = vrot.slane %v2207, 1
        %v2210 = vsel %vm2106, %v2205, %v2209
        %v2212 = vshrl.u32 %v2082, 16
        %v2214 = vshll.u32 %v2082, 16
        %v2216 = vrot.slane %v2214, 1
        %v2217 = vor.u32 %v2212, %v2216
        %v2219 = vshll.u32 %v2098, 16
        %v2221 = vrot.slane %v2219, 1
        %v2222 = vsel %vm2106, %v2217, %v2221
        %v2224 = vshrl.u32 %v2083, 16
        %v2226 = vshll.u32 %v2083, 16
        %v2228 = vrot.slane %v2226, 1
        %v2229 = vor.u32 %v2224, %v2228
        %v2231 = vshll.u32 %v2099, 16
        %v2233 = vrot.slane %v2231, 1
        %v2234 = vsel %vm2106, %v2229, %v2233
        %v2236 = vshrl.u32 %v2084, 16
        %v2238 = vshll.u32 %v2084, 16
        %v2240 = vrot.slane %v2238, 1
        %v2241 = vor.u32 %v2236, %v2240
        %v2243 = vshll.u32 %v2100, 16
        %v2245 = vrot.slane %v2243, 1
        %v2246 = vsel %vm2106, %v2241, %v2245
        %v2248 = vshrl.u32 %v2085, 16
        %v2250 = vshll.u32 %v2085, 16
        %v2252 = vrot.slane %v2250, 1
        %v2253 = vor.u32 %v2248, %v2252
        %v2255 = vshll.u32 %v2101, 16
        %v2257 = vrot.slane %v2255, 1
        %v2258 = vsel %vm2106, %v2253, %v2257
        %v2260 = vshrl.u32 %v2086, 16
        %v2262 = vshll.u32 %v2086, 16
        %v2264 = vrot.slane %v2262, 1
        %v2265 = vor.u32 %v2260, %v2264
        %v2267 = vshll.u32 %v2102, 16
        %v2269 = vrot.slane %v2267, 1
        %v2270 = vsel %vm2106, %v2265, %v2269
        %v2272 = vshrl.u32 %v2087, 16
        %v2274 = vshll.u32 %v2087, 16
        %v2276 = vrot.slane %v2274, 1
        %v2277 = vor.u32 %v2272, %v2276
        %v2279 = vshll.u32 %v2103, 16
        %v2281 = vrot.slane %v2279, 1
        %v2282 = vsel %vm2106, %v2277, %v2281
        %v2284 = vshrl.u32 %v2088, 16
        %v2286 = vshll.u32 %v2088, 16
        %v2288 = vrot.slane %v2286, 1
        %v2289 = vor.u32 %v2284, %v2288
        %v2291 = vshll.u32 %v2104, 16
        %v2293 = vrot.slane %v2291, 1
        %v2294 = vsel %vm2106, %v2289, %v2293
        %vm2326 = vcmask 1046528
        %v2327 = vrot.slane 0, 1
        %v2328 = vsel %vm2326, %v2327, %v2327
        %v2329 = vrot.slane %v2074, 1
        %v2330 = vrot.slane %v2090, 1
        %v2331 = vsel %vm2326, %v2329, %v2330
        %v2332 = vrot.slane %v2075, 1
        %v2333 = vrot.slane %v2091, 1
        %v2334 = vsel %vm2326, %v2332, %v2333
        %v2335 = vrot.slane %v2076, 1
        %v2336 = vrot.slane %v2092, 1
        %v2337 = vsel %vm2326, %v2335, %v2336
        %v2338 = vrot.slane %v2077, 1
        %v2339 = vrot.slane %v2093, 1
        %v2340 = vsel %vm2326, %v2338, %v2339
        %v2341 = vrot.slane %v2078, 1
        %v2342 = vrot.slane %v2094, 1
        %v2343 = vsel %vm2326, %v2341, %v2342
        %v2344 = vrot.slane %v2079, 1
        %v2345 = vrot.slane %v2095, 1
        %v2346 = vsel %vm2326, %v2344, %v2345
        %v2347 = vrot.slane %v2080, 1
        %v2348 = vrot.slane %v2096, 1
        %v2349 = vsel %vm2326, %v2347, %v2348
        %v2350 = vrot.slane %v2081, 1
        %v2351 = vrot.slane %v2097, 1
        %v2352 = vsel %vm2326, %v2350, %v2351
        %v2353 = vrot.slane %v2082, 1
        %v2354 = vrot.slane %v2098, 1
        %v2355 = vsel %vm2326, %v2353, %v2354
        %v2356 = vrot.slane %v2083, 1
        %v2357 = vrot.slane %v2099, 1
        %v2358 = vsel %vm2326, %v2356, %v2357
        %v2359 = vrot.slane %v2084, 1
        %v2360 = vrot.slane %v2100, 1
        %v2361 = vsel %vm2326, %v2359, %v2360
        %v2362 = vrot.slane %v2085, 1
        %v2363 = vrot.slane %v2101, 1
        %v2364 = vsel %vm2326, %v2362, %v2363
        %v2365 = vrot.slane %v2086, 1
        %v2366 = vrot.slane %v2102, 1
        %v2367 = vsel %vm2326, %v2365, %v2366
        %v2368 = vrot.slane %v2087, 1
        %v2369 = vrot.slane %v2103, 1
        %v2370 = vsel %vm2326, %v2368, %v2369
        %v2371 = vrot.slane %v2088, 1
        %v2372 = vrot.slane %v2104, 1
        %v2373 = vsel %vm2326, %v2371, %v2372
        %v2375 = vshrl.u32 %v2089, 16
        %v2377 = vshll.u32 %v2089, 16
        %v2379 = vrot.slane %v2377, 1
        %v2380 = vor.u32 %v2375, %v2379
        %v2382 = vshll.u32 %v2105, 16
        %v2384 = vrot.slane %v2382, 1
        %v2385 = vsel %vm2106, %v2380, %v2384
        %v2388 = vrot.slane %v2089, 1
        %v2389 = vrot.slane %v2105, 1
        %v2390 = vsel %vm2326, %v2388, %v2389
        %2391 = vrot.lane.b32.xlu0 %v2114, 32
        %v2392 = vpop.permute.xlu0 %2391
        %2393 = vrot.lane.b32.xlu0 %v2126, 32
        %v2394 = vpop.permute.xlu0 %2393
        %2395 = vrot.lane.b32.xlu0 %v2138, 32
        %v2396 = vpop.permute.xlu0 %2395
        %2397 = vrot.lane.b32.xlu0 %v2150, 32
        %v2398 = vpop.permute.xlu0 %2397
        %2399 = vrot.lane.b32.xlu0 %v2162, 32
        %v2400 = vpop.permute.xlu0 %2399
        %2401 = vrot.lane.b32.xlu0 %v2174, 32
        %v2402 = vpop.permute.xlu0 %2401
        %2403 = vrot.lane.b32.xlu0 %v2186, 32
        %v2404 = vpop.permute.xlu0 %2403
        %2405 = vrot.lane.b32.xlu0 %v2198, 32
        %v2406 = vpop.permute.xlu0 %2405
        %2407 = vrot.lane.b32.xlu0 %v2210, 32
        %v2408 = vpop.permute.xlu0 %2407
        %2409 = vrot.lane.b32.xlu0 %v2222, 32
        %v2410 = vpop.permute.xlu0 %2409
        %2411 = vrot.lane.b32.xlu0 %v2234, 32
        %v2412 = vpop.permute.xlu0 %2411
        %2413 = vrot.lane.b32.xlu0 %v2246, 32
        %v2414 = vpop.permute.xlu0 %2413
        %2415 = vrot.lane.b32.xlu0 %v2258, 32
        %v2416 = vpop.permute.xlu0 %2415
        %2417 = vrot.lane.b32.xlu0 %v2270, 32
        %v2418 = vpop.permute.xlu0 %2417
        %2419 = vrot.lane.b32.xlu0 %v2282, 32
        %v2420 = vpop.permute.xlu0 %2419
        %2421 = vrot.lane.b32.xlu0 %v2294, 32
        %v2422 = vpop.permute.xlu0 %2421
        %2423 = vrot.lane.b32.xlu0 %v2328, 64
        %v2424 = vpop.permute.xlu0 %2423
        %2425 = vrot.lane.b32.xlu0 %v2331, 64
        %v2426 = vpop.permute.xlu0 %2425
        %2427 = vrot.lane.b32.xlu0 %v2334, 64
        %v2428 = vpop.permute.xlu0 %2427
        %2429 = vrot.lane.b32.xlu0 %v2337, 64
        %v2430 = vpop.permute.xlu0 %2429
        %2431 = vrot.lane.b32.xlu0 %v2340, 64
        %v2432 = vpop.permute.xlu0 %2431
        %2433 = vrot.lane.b32.xlu0 %v2343, 64
        %v2434 = vpop.permute.xlu0 %2433
        %2435 = vrot.lane.b32.xlu0 %v2346, 64
        %v2436 = vpop.permute.xlu0 %2435
        %2437 = vrot.lane.b32.xlu0 %v2349, 64
        %v2438 = vpop.permute.xlu0 %2437
        %2439 = vrot.lane.b32.xlu0 %v2352, 64
        %v2440 = vpop.permute.xlu0 %2439
        %2441 = vrot.lane.b32.xlu0 %v2355, 64
        %v2442 = vpop.permute.xlu0 %2441
        %2443 = vrot.lane.b32.xlu0 %v2358, 64
        %v2444 = vpop.permute.xlu0 %2443
        %2445 = vrot.lane.b32.xlu0 %v2361, 64
        %v2446 = vpop.permute.xlu0 %2445
        %2447 = vrot.lane.b32.xlu0 %v2364, 64
        %v2448 = vpop.permute.xlu0 %2447
        %2449 = vrot.lane.b32.xlu0 %v2367, 64
        %v2450 = vpop.permute.xlu0 %2449
        %2451 = vrot.lane.b32.xlu0 %v2370, 64
        %v2452 = vpop.permute.xlu0 %2451
        %2453 = vrot.lane.b32.xlu0 %v2373, 64
        %v2454 = vpop.permute.xlu0 %2453
        %2455 = vrot.lane.b32.xlu0 %v2074, 96
        %v2456 = vpop.permute.xlu0 %2455
        %2457 = vrot.lane.b32.xlu0 %v2075, 96
        %v2458 = vpop.permute.xlu0 %2457
        %2459 = vrot.lane.b32.xlu0 %v2076, 96
        %v2460 = vpop.permute.xlu0 %2459
        %2461 = vrot.lane.b32.xlu0 %v2077, 96
        %v2462 = vpop.permute.xlu0 %2461
        %2463 = vrot.lane.b32.xlu0 %v2078, 96
        %v2464 = vpop.permute.xlu0 %2463
        %2465 = vrot.lane.b32.xlu0 %v2079, 96
        %v2466 = vpop.permute.xlu0 %2465
        %2467 = vrot.lane.b32.xlu0 %v2080, 96
        %v2468 = vpop.permute.xlu0 %2467
        %2469 = vrot.lane.b32.xlu0 %v2081, 96
        %v2470 = vpop.permute.xlu0 %2469
        %2471 = vrot.lane.b32.xlu0 %v2082, 96
        %v2472 = vpop.permute.xlu0 %2471
        %2473 = vrot.lane.b32.xlu0 %v2083, 96
        %v2474 = vpop.permute.xlu0 %2473
        %2475 = vrot.lane.b32.xlu0 %v2084, 96
        %v2476 = vpop.permute.xlu0 %2475
        %2477 = vrot.lane.b32.xlu0 %v2085, 96
        %v2478 = vpop.permute.xlu0 %2477
        %2479 = vrot.lane.b32.xlu0 %v2086, 96
        %v2480 = vpop.permute.xlu0 %2479
        %2481 = vrot.lane.b32.xlu0 %v2087, 96
        %v2482 = vpop.permute.xlu0 %2481
        %2483 = vrot.lane.b32.xlu0 %v2088, 96
        %v2484 = vpop.permute.xlu0 %2483
        %2485 = vrot.lane.b32.xlu0 %v2089, 96
        %v2486 = vpop.permute.xlu0 %2485
        %2487 = vrot.lane.b32.xlu0 %v2331, 32
        %v2488 = vpop.permute.xlu0 %2487
        %2489 = vrot.lane.b32.xlu0 %v2334, 32
        %v2490 = vpop.permute.xlu0 %2489
        %2491 = vrot.lane.b32.xlu0 %v2337, 32
        %v2492 = vpop.permute.xlu0 %2491
        %2493 = vrot.lane.b32.xlu0 %v2340, 32
        %v2494 = vpop.permute.xlu0 %2493
        %2495 = vrot.lane.b32.xlu0 %v2343, 32
        %v2496 = vpop.permute.xlu0 %2495
        %2497 = vrot.lane.b32.xlu0 %v2346, 32
        %v2498 = vpop.permute.xlu0 %2497
        %2499 = vrot.lane.b32.xlu0 %v2349, 32
        %v2500 = vpop.permute.xlu0 %2499
        %2501 = vrot.lane.b32.xlu0 %v2352, 32
        %v2502 = vpop.permute.xlu0 %2501
        %2503 = vrot.lane.b32.xlu0 %v2355, 32
        %v2504 = vpop.permute.xlu0 %2503
        %2505 = vrot.lane.b32.xlu0 %v2358, 32
        %v2506 = vpop.permute.xlu0 %2505
        %2507 = vrot.lane.b32.xlu0 %v2361, 32
        %v2508 = vpop.permute.xlu0 %2507
        %2509 = vrot.lane.b32.xlu0 %v2364, 32
        %v2510 = vpop.permute.xlu0 %2509
        %2511 = vrot.lane.b32.xlu0 %v2367, 32
        %v2512 = vpop.permute.xlu0 %2511
        %2513 = vrot.lane.b32.xlu0 %v2370, 32
        %v2514 = vpop.permute.xlu0 %2513
        %2515 = vrot.lane.b32.xlu0 %v2373, 32
        %v2516 = vpop.permute.xlu0 %2515
        %2517 = vrot.lane.b32.xlu0 %v2390, 32
        %v2518 = vpop.permute.xlu0 %2517
        %2519 = vrot.lane.b32.xlu0 %v2075, 64
        %v2520 = vpop.permute.xlu0 %2519
        %2521 = vrot.lane.b32.xlu0 %v2076, 64
        %v2522 = vpop.permute.xlu0 %2521
        %2523 = vrot.lane.b32.xlu0 %v2077, 64
        %v2524 = vpop.permute.xlu0 %2523
        %2525 = vrot.lane.b32.xlu0 %v2078, 64
        %v2526 = vpop.permute.xlu0 %2525
        %2527 = vrot.lane.b32.xlu0 %v2079, 64
        %v2528 = vpop.permute.xlu0 %2527
        %2529 = vrot.lane.b32.xlu0 %v2080, 64
        %v2530 = vpop.permute.xlu0 %2529
        %2531 = vrot.lane.b32.xlu0 %v2081, 64
        %v2532 = vpop.permute.xlu0 %2531
        %2533 = vrot.lane.b32.xlu0 %v2082, 64
        %v2534 = vpop.permute.xlu0 %2533
        %2535 = vrot.lane.b32.xlu0 %v2083, 64
        %v2536 = vpop.permute.xlu0 %2535
        %2537 = vrot.lane.b32.xlu0 %v2084, 64
        %v2538 = vpop.permute.xlu0 %2537
        %2539 = vrot.lane.b32.xlu0 %v2085, 64
        %v2540 = vpop.permute.xlu0 %2539
        %2541 = vrot.lane.b32.xlu0 %v2086, 64
        %v2542 = vpop.permute.xlu0 %2541
        %2543 = vrot.lane.b32.xlu0 %v2087, 64
        %v2544 = vpop.permute.xlu0 %2543
        %2545 = vrot.lane.b32.xlu0 %v2088, 64
        %v2546 = vpop.permute.xlu0 %2545
        %2547 = vrot.lane.b32.xlu0 %v2089, 64
        %v2548 = vpop.permute.xlu0 %2547
        %2549 = vrot.lane.b32.xlu0 0, 64
        %v2550 = vpop.permute.xlu0 %2549
        %2551 = vrot.lane.b32.xlu0 %v2138, 96
        %v2552 = vpop.permute.xlu0 %2551
        %2553 = vrot.lane.b32.xlu0 %v2150, 96
        %v2554 = vpop.permute.xlu0 %2553
        %2555 = vrot.lane.b32.xlu0 %v2162, 96
        %v2556 = vpop.permute.xlu0 %2555
        %2557 = vrot.lane.b32.xlu0 %v2174, 96
        %v2558 = vpop.permute.xlu0 %2557
        %2559 = vrot.lane.b32.xlu0 %v2186, 96
        %v2560 = vpop.permute.xlu0 %2559
        %2561 = vrot.lane.b32.xlu0 %v2198, 96
        %v2562 = vpop.permute.xlu0 %2561
        %2563 = vrot.lane.b32.xlu0 %v2210, 96
        %v2564 = vpop.permute.xlu0 %2563
        %2565 = vrot.lane.b32.xlu0 %v2222, 96
        %v2566 = vpop.permute.xlu0 %2565
        %2567 = vrot.lane.b32.xlu0 %v2234, 96
        %v2568 = vpop.permute.xlu0 %2567
        %2569 = vrot.lane.b32.xlu0 %v2246, 96
        %v2570 = vpop.permute.xlu0 %2569
        %2571 = vrot.lane.b32.xlu0 %v2258, 96
        %v2572 = vpop.permute.xlu0 %2571
        %2573 = vrot.lane.b32.xlu0 %v2270, 96
        %v2574 = vpop.permute.xlu0 %2573
        %2575 = vrot.lane.b32.xlu0 %v2282, 96
        %v2576 = vpop.permute.xlu0 %2575
        %2577 = vrot.lane.b32.xlu0 %v2294, 96
        %v2578 = vpop.permute.xlu0 %2577
        %2579 = vrot.lane.b32.xlu0 %v2385, 96
        %v2580 = vpop.permute.xlu0 %2579
        %2581 = vrot.lane.b32.xlu0 %v2114, 96
        %v2582 = vpop.permute.xlu0 %2581
        %v2584 = vsel %vm815, 0, %v2392
        %v2586 = vsel %vm815, %v2074, %v2394
        %v2588 = vsel %vm815, %v2075, %v2396
        %v2590 = vsel %vm815, %v2076, %v2398
        %v2592 = vsel %vm815, %v2077, %v2400
        %v2594 = vsel %vm815, %v2078, %v2402
        %v2596 = vsel %vm815, %v2079, %v2404
        %v2598 = vsel %vm815, %v2080, %v2406
        %v2600 = vsel %vm815, %v2081, %v2408
        %v2602 = vsel %vm815, %v2082, %v2410
        %v2604 = vsel %vm815, %v2083, %v2412
        %v2606 = vsel %vm815, %v2084, %v2414
        %v2608 = vsel %vm815, %v2085, %v2416
        %v2610 = vsel %vm815, %v2086, %v2418
        %v2612 = vsel %vm815, %v2087, %v2420
        %v2614 = vsel %vm815, %v2088, %v2422
        %v2616 = vsel %vm560, %v2584, %v2424
        %v2618 = vsel %vm560, %v2586, %v2426
        %v2620 = vsel %vm560, %v2588, %v2428
        %v2622 = vsel %vm560, %v2590, %v2430
        %v2624 = vsel %vm560, %v2592, %v2432
        %v2626 = vsel %vm560, %v2594, %v2434
        %v2628 = vsel %vm560, %v2596, %v2436
        %v2630 = vsel %vm560, %v2598, %v2438
        %v2632 = vsel %vm560, %v2600, %v2440
        %v2634 = vsel %vm560, %v2602, %v2442
        %v2636 = vsel %vm560, %v2604, %v2444
        %v2638 = vsel %vm560, %v2606, %v2446
        %v2640 = vsel %vm560, %v2608, %v2448
        %v2642 = vsel %vm560, %v2610, %v2450
        %v2644 = vsel %vm560, %v2612, %v2452
        %v2646 = vsel %vm560, %v2614, %v2454
        %vm2647 = vcmask 785408
        %v2649 = vsel %vm2647, %v2616, %v2456
        %v2652 = vsel %vm2647, %v2618, %v2458
        %v2655 = vsel %vm2647, %v2620, %v2460
        %v2658 = vsel %vm2647, %v2622, %v2462
        %v2661 = vsel %vm2647, %v2624, %v2464
        %v2664 = vsel %vm2647, %v2626, %v2466
        %v2667 = vsel %vm2647, %v2628, %v2468
        %v2670 = vsel %vm2647, %v2630, %v2470
        %v2673 = vsel %vm2647, %v2632, %v2472
        %v2676 = vsel %vm2647, %v2634, %v2474
        %v2679 = vsel %vm2647, %v2636, %v2476
        %v2682 = vsel %vm2647, %v2638, %v2478
        %v2685 = vsel %vm2647, %v2640, %v2480
        %v2688 = vsel %vm2647, %v2642, %v2482
        %v2691 = vsel %vm2647, %v2644, %v2484
        %v2694 = vsel %vm2647, %v2646, %v2486
        %v2698 = vsel %vm815, %v2126, %v2488
        %v2701 = vsel %vm815, %v2138, %v2490
        %v2704 = vsel %vm815, %v2150, %v2492
        %v2707 = vsel %vm815, %v2162, %v2494
        %v2710 = vsel %vm815, %v2174, %v2496
        %v2713 = vsel %vm815, %v2186, %v2498
        %v2716 = vsel %vm815, %v2198, %v2500
        %v2719 = vsel %vm815, %v2210, %v2502
        %v2722 = vsel %vm815, %v2222, %v2504
        %v2725 = vsel %vm815, %v2234, %v2506
        %v2728 = vsel %vm815, %v2246, %v2508
        %v2731 = vsel %vm815, %v2258, %v2510
        %v2734 = vsel %vm815, %v2270, %v2512
        %v2737 = vsel %vm815, %v2282, %v2514
        %v2740 = vsel %vm815, %v2294, %v2516
        %v2743 = vsel %vm815, %v2385, %v2518
        %v2745 = vsel %vm560, %v2698, %v2520
        %v2747 = vsel %vm560, %v2701, %v2522
        %v2749 = vsel %vm560, %v2704, %v2524
        %v2751 = vsel %vm560, %v2707, %v2526
        %v2753 = vsel %vm560, %v2710, %v2528
        %v2755 = vsel %vm560, %v2713, %v2530
        %v2757 = vsel %vm560, %v2716, %v2532
        %v2759 = vsel %vm560, %v2719, %v2534
        %v2761 = vsel %vm560, %v2722, %v2536
        %v2763 = vsel %vm560, %v2725, %v2538
        %v2765 = vsel %vm560, %v2728, %v2540
        %v2767 = vsel %vm560, %v2731, %v2542
        %v2769 = vsel %vm560, %v2734, %v2544
        %v2771 = vsel %vm560, %v2737, %v2546
        %v2773 = vsel %vm560, %v2740, %v2548
        %v2775 = vsel %vm560, %v2743, %v2550
        %v2777 = vsel %vm2647, %v2745, %v2552
        %v2780 = vsel %vm2647, %v2747, %v2554
        %v2783 = vsel %vm2647, %v2749, %v2556
        %v2786 = vsel %vm2647, %v2751, %v2558
        %v2789 = vsel %vm2647, %v2753, %v2560
        %v2792 = vsel %vm2647, %v2755, %v2562
        %v2795 = vsel %vm2647, %v2757, %v2564
        %v2798 = vsel %vm2647, %v2759, %v2566
        %v2801 = vsel %vm2647, %v2761, %v2568
        %v2804 = vsel %vm2647, %v2763, %v2570
        %v2807 = vsel %vm2647, %v2765, %v2572
        %v2810 = vsel %vm2647, %v2767, %v2574
        %v2813 = vsel %vm2647, %v2769, %v2576
        %v2816 = vsel %vm2647, %v2771, %v2578
        %v2819 = vsel %vm2647, %v2773, %v2580
        %v2822 = vsel %vm2647, %v2775, %v2582
        %v2824 = vld [vmem:[%s10] sm:$0xf]
        %v2825 = vld [vmem:[%s10 + $0x4] sm:$0xf]
        %v2826 = vld [vmem:[%s10 + $0x8] sm:$0xf]
        %v2827 = vld [vmem:[%s10 + $0xc] sm:$0xf]
        %v2828 = vld [vmem:[%s10 + $0x10] sm:$0xf]
        %v2829 = vld [vmem:[%s10 + $0x14] sm:$0xf]
        %v2830 = vld [vmem:[%s10 + $0x18] sm:$0xf]
        %v2831 = vld [vmem:[%s10 + $0x1c] sm:$0xf]
        %v2832 = vld [vmem:[%s10 + $0x20] sm:$0xf]
        %v2833 = vld [vmem:[%s10 + $0x24] sm:$0xf]
        %v2834 = vld [vmem:[%s10 + $0x28] sm:$0xf]
        %v2835 = vld [vmem:[%s10 + $0x2c] sm:$0xf]
        %v2836 = vld [vmem:[%s10 + $0x30] sm:$0xf]
        %v2837 = vld [vmem:[%s10 + $0x34] sm:$0xf]
        %v2838 = vld [vmem:[%s10 + $0x38] sm:$0xf]
        %v2839 = vld [vmem:[%s10 + $0x3c] sm:$0xf]
        %v2840 = vld [vmem:[%s10 + $0x40] sm:$0xf]
        %v2841 = vld [vmem:[%s10 + $0x44] sm:$0xf]
        %v2842 = vld [vmem:[%s10 + $0x48] sm:$0xf]
        %v2843 = vld [vmem:[%s10 + $0x4c] sm:$0xf]
        %v2844 = vld [vmem:[%s10 + $0x50] sm:$0xf]
        %v2845 = vld [vmem:[%s10 + $0x54] sm:$0xf]
        %v2846 = vld [vmem:[%s10 + $0x58] sm:$0xf]
        %v2847 = vld [vmem:[%s10 + $0x5c] sm:$0xf]
        %v2848 = vld [vmem:[%s10 + $0x60] sm:$0xf]
        %v2849 = vld [vmem:[%s10 + $0x64] sm:$0xf]
        %v2850 = vld [vmem:[%s10 + $0x68] sm:$0xf]
        %v2851 = vld [vmem:[%s10 + $0x6c] sm:$0xf]
        %v2852 = vld [vmem:[%s10 + $0x70] sm:$0xf]
        %v2853 = vld [vmem:[%s10 + $0x74] sm:$0xf]
        %v2854 = vld [vmem:[%s10 + $0x78] sm:$0xf]
        %v2855 = vld [vmem:[%s10 + $0x7c] sm:$0xf]
        %v2856 = vld [vmem:[%s10 + $0x80] sm:$0xf]
        %v2857 = vld [vmem:[%s10 + $0x84] sm:$0xf]
        %v2858 = vld [vmem:[%s10 + $0x88] sm:$0xf]
        %v2859 = vld [vmem:[%s10 + $0x8c] sm:$0xf]
        %v2896 = vunpack.c.l.b16 %v2824
        %v2897 = vunpack.c.l.b16 %v2825
        %v2898 = vunpack.c.l.b16 %v2826
        %v2899 = vunpack.c.l.b16 %v2827
        %v2900 = vunpack.c.l.b16 %v2828
        %v2901 = vunpack.c.l.b16 %v2829
        %v2902 = vunpack.c.l.b16 %v2830
        %v2903 = vunpack.c.l.b16 %v2831
        %v2904 = vunpack.c.l.b16 %v2832
        %v2905 = vunpack.c.l.b16 %v2833
        %v2906 = vunpack.c.l.b16 %v2834
        %v2907 = vunpack.c.l.b16 %v2835
        %v2908 = vunpack.c.l.b16 %v2836
        %v2909 = vunpack.c.l.b16 %v2837
        %v2910 = vunpack.c.l.b16 %v2838
        %v2911 = vunpack.c.l.b16 %v2839
        %v2912 = vunpack.c.l.b16 %v2840
        %v2913 = vunpack.c.l.b16 %v2841
        %v2914 = vunpack.c.l.b16 %v2842
        %v2915 = vunpack.c.l.b16 %v2843
        %v2916 = vunpack.c.l.b16 %v2844
        %v2917 = vunpack.c.l.b16 %v2845
        %v2918 = vunpack.c.l.b16 %v2846
        %v2919 = vunpack.c.l.b16 %v2847
        %v2920 = vunpack.c.l.b16 %v2848
        %v2921 = vunpack.c.l.b16 %v2849
        %v2922 = vunpack.c.l.b16 %v2850
        %v2923 = vunpack.c.l.b16 %v2851
        %v2924 = vunpack.c.l.b16 %v2852
        %v2925 = vunpack.c.l.b16 %v2853
        %v2926 = vunpack.c.l.b16 %v2854
        %v2927 = vunpack.c.l.b16 %v2855
        %v2928 = vunpack.c.l.b16 %v2856
        %v2929 = vunpack.c.l.b16 %v2857
        %v2930 = vunpack.c.l.b16 %v2858
        %v2931 = vunpack.c.l.b16 %v2859
        %v2932 = vpack.c.b16 %v2897, %v2896
        %v2933 = vpack.c.b16 %v2899, %v2898
        %v2934 = vpack.c.b16 %v2901, %v2900
        %v2935 = vpack.c.b16 %v2903, %v2902
        %v2936 = vpack.c.b16 %v2905, %v2904
        %v2937 = vpack.c.b16 %v2907, %v2906
        %v2938 = vpack.c.b16 %v2909, %v2908
        %v2939 = vpack.c.b16 %v2911, %v2910
        %v2940 = vpack.c.b16 %v2913, %v2912
        %v2941 = vpack.c.b16 %v2915, %v2914
        %v2942 = vpack.c.b16 %v2917, %v2916
        %v2943 = vpack.c.b16 %v2919, %v2918
        %v2944 = vpack.c.b16 %v2921, %v2920
        %v2945 = vpack.c.b16 %v2923, %v2922
        %v2946 = vpack.c.b16 %v2925, %v2924
        %v2947 = vpack.c.b16 %v2927, %v2926
        %v2948 = vpack.c.b16 %v2929, %v2928
        %v2949 = vpack.c.b16 %v2931, %v2930
        %v2969 = vsel %vm815, %v2334, 0
        %v2972 = vsel %vm815, %v2337, 0
        %v2975 = vsel %vm815, %v2340, 0
        %v2978 = vsel %vm815, %v2343, 0
        %v2981 = vsel %vm815, %v2346, 0
        %v2984 = vsel %vm815, %v2349, 0
        %v2987 = vsel %vm815, %v2352, 0
        %v2990 = vsel %vm815, %v2355, 0
        %v2993 = vsel %vm815, %v2358, 0
        %v2996 = vsel %vm815, %v2361, 0
        %v2999 = vsel %vm815, %v2364, 0
        %v3002 = vsel %vm815, %v2367, 0
        %v3005 = vsel %vm815, %v2370, 0
        %v3008 = vsel %vm815, %v2373, 0
        %v3011 = vsel %vm815, %v2390, 0
        %v3014 = vsel %vm815, %v2328, 0
        %3016 = vmatprep.subr.bf16.mxu0 0
        %3017 = vmatpush1.bf16.msra.mxu0 %v2939
        %3018 = vmatprep.subr.bf16.mxu0 0
        %3019 = vmatpush1.bf16.msra.mxu0 %v2938
        %3020 = vmatprep.subr.bf16.mxu0 0
        %3021 = vmatpush1.bf16.msra.mxu0 %v2937
        %3022 = vmatprep.subr.bf16.mxu0 0
        %3023 = vmatpush1.bf16.msra.mxu0 %v2936
        %3024 = vmatprep.subr.bf16.mxu0 0
        %3025 = vmatpush1.bf16.msra.mxu0 %v2935
        %3026 = vmatprep.subr.bf16.mxu0 0
        %3027 = vmatpush1.bf16.msra.mxu0 %v2934
        %3028 = vmatprep.subr.bf16.mxu0 0
        %3029 = vmatpush1.bf16.msra.mxu0 %v2933
        %3030 = vmatprep.subr.bf16.mxu0 0
        %3031 = vmatpush1.bf16.msra.mxu0 %v2932
        %3032 = vmatprep.subr.bf16.mxu0 0
        %3033 = vmatpush2.bf16.msra.mxu0 %v2947
        %3034 = vmatprep.subr.bf16.mxu0 0
        %3035 = vmatpush2.bf16.msra.mxu0 %v2946
        %3036 = vmatprep.subr.bf16.mxu0 0
        %3037 = vmatpush2.bf16.msra.mxu0 %v2945
        %3038 = vmatprep.subr.bf16.mxu0 0
        %3039 = vmatpush2.bf16.msra.mxu0 %v2944
        %3040 = vmatprep.subr.bf16.mxu0 0
        %3041 = vmatpush2.bf16.msra.mxu0 %v2943
        %3042 = vmatprep.subr.bf16.mxu0 0
        %3043 = vmatpush2.bf16.msra.mxu0 %v2942
        %3044 = vmatprep.subr.bf16.mxu0 0
        %3045 = vmatpush2.bf16.msra.mxu0 %v2941
        %3046 = vmatprep.subr.bf16.mxu0 0
        %3047 = vmatpush2.bf16.msra.mxu0 %v2940
        %3048 = vmatprep.mubr.bf16.mxu0 %v2777
        %3049 = vmatmul.mubr.bf16.gmra.mxu0 %v2649
        %v3050 = vpop.f32.mrf.mxu0
        %v3051 = vadd.f32 0.0, %v3050
        %v3052 = vpop.f32.mrf.mxu0
        %v3053 = vpop.f32.mrf.mxu0
        %v3054 = vadd.f32 0.0, %v3053
        %v3055 = vpop.f32.mrf.mxu0
        %3056 = vmatprep.mubr.bf16.mxu0 %v2780
        %3057 = vmatmul.mubr.bf16.gmra.mxu0 %v2652
        %v3058 = vpop.f32.mrf.mxu0
        %v3059 = vadd.f32 0.0, %v3058
        %v3060 = vpop.f32.mrf.mxu0
        %v3061 = vpop.f32.mrf.mxu0
        %v3062 = vadd.f32 0.0, %v3061
        %v3063 = vpop.f32.mrf.mxu0
        %3064 = vmatprep.mubr.bf16.mxu0 %v2783
        %3065 = vmatmul.mubr.bf16.gmra.mxu0 %v2655
        %v3066 = vpop.f32.mrf.mxu0
        %v3067 = vadd.f32 0.0, %v3066
        %v3068 = vpop.f32.mrf.mxu0
        %v3069 = vpop.f32.mrf.mxu0
        %v3070 = vadd.f32 0.0, %v3069
        %v3071 = vpop.f32.mrf.mxu0
        %3072 = vmatprep.mubr.bf16.mxu0 %v2786
        %3073 = vmatmul.mubr.bf16.gmra.mxu0 %v2658
        %v3074 = vpop.f32.mrf.mxu0
        %v3075 = vadd.f32 0.0, %v3074
        %v3076 = vpop.f32.mrf.mxu0
        %v3077 = vpop.f32.mrf.mxu0
        %v3078 = vadd.f32 0.0, %v3077
        %v3079 = vpop.f32.mrf.mxu0
        %3080 = vmatprep.mubr.bf16.mxu0 %v2789
        %3081 = vmatmul.mubr.bf16.gmra.mxu0 %v2661
        %v3082 = vpop.f32.mrf.mxu0
        %v3083 = vadd.f32 0.0, %v3082
        %v3084 = vpop.f32.mrf.mxu0
        %v3085 = vpop.f32.mrf.mxu0
        %v3086 = vadd.f32 0.0, %v3085
        %v3087 = vpop.f32.mrf.mxu0
        %3088 = vmatprep.mubr.bf16.mxu0 %v2792
        %3089 = vmatmul.mubr.bf16.gmra.mxu0 %v2664
        %v3090 = vpop.f32.mrf.mxu0
        %v3091 = vadd.f32 0.0, %v3090
        %v3092 = vpop.f32.mrf.mxu0
        %v3093 = vpop.f32.mrf.mxu0
        %v3094 = vadd.f32 0.0, %v3093
        %v3095 = vpop.f32.mrf.mxu0
        %3096 = vmatprep.mubr.bf16.mxu0 %v2795
        %3097 = vmatmul.mubr.bf16.gmra.mxu0 %v2667
        %v3098 = vpop.f32.mrf.mxu0
        %v3099 = vadd.f32 0.0, %v3098
        %v3100 = vpop.f32.mrf.mxu0
        %v3101 = vpop.f32.mrf.mxu0
        %v3102 = vadd.f32 0.0, %v3101
        %v3103 = vpop.f32.mrf.mxu0
        %3104 = vmatprep.mubr.bf16.mxu0 %v2798
        %3105 = vmatmul.mubr.bf16.gmra.mxu0 %v2670
        %v3106 = vpop.f32.mrf.mxu0
        %v3107 = vadd.f32 0.0, %v3106
        %v3108 = vpop.f32.mrf.mxu0
        %v3109 = vpop.f32.mrf.mxu0
        %v3110 = vadd.f32 0.0, %v3109
        %v3111 = vpop.f32.mrf.mxu0
        %3112 = vmatprep.mubr.bf16.mxu0 %v2801
        %3113 = vmatmul.mubr.bf16.gmra.mxu0 %v2673
        %v3114 = vpop.f32.mrf.mxu0
        %v3115 = vadd.f32 0.0, %v3114
        %v3116 = vpop.f32.mrf.mxu0
        %v3117 = vpop.f32.mrf.mxu0
        %v3118 = vadd.f32 0.0, %v3117
        %v3119 = vpop.f32.mrf.mxu0
        %3120 = vmatprep.mubr.bf16.mxu0 %v2804
        %3121 = vmatmul.mubr.bf16.gmra.mxu0 %v2676
        %v3122 = vpop.f32.mrf.mxu0
        %v3123 = vadd.f32 0.0, %v3122
        %v3124 = vpop.f32.mrf.mxu0
        %v3125 = vpop.f32.mrf.mxu0
        %v3126 = vadd.f32 0.0, %v3125
        %v3127 = vpop.f32.mrf.mxu0
        %3128 = vmatprep.mubr.bf16.mxu0 %v2807
        %3129 = vmatmul.mubr.bf16.gmra.mxu0 %v2679
        %v3130 = vpop.f32.mrf.mxu0
        %v3131 = vadd.f32 0.0, %v3130
        %v3132 = vpop.f32.mrf.mxu0
        %v3133 = vpop.f32.mrf.mxu0
        %v3134 = vadd.f32 0.0, %v3133
        %v3135 = vpop.f32.mrf.mxu0
        %3136 = vmatprep.mubr.bf16.mxu0 %v2810
        %3137 = vmatmul.mubr.bf16.gmra.mxu0 %v2682
        %v3138 = vpop.f32.mrf.mxu0
        %v3139 = vadd.f32 0.0, %v3138
        %v3140 = vpop.f32.mrf.mxu0
        %v3141 = vpop.f32.mrf.mxu0
        %v3142 = vadd.f32 0.0, %v3141
        %v3143 = vpop.f32.mrf.mxu0
        %3144 = vmatprep.mubr.bf16.mxu0 %v2813
        %3145 = vmatmul.mubr.bf16.gmra.mxu0 %v2685
        %v3146 = vpop.f32.mrf.mxu0
        %v3147 = vadd.f32 0.0, %v3146
        %v3148 = vpop.f32.mrf.mxu0
        %v3149 = vpop.f32.mrf.mxu0
        %v3150 = vadd.f32 0.0, %v3149
        %v3151 = vpop.f32.mrf.mxu0
        %3152 = vmatprep.mubr.bf16.mxu0 %v2816
        %3153 = vmatmul.mubr.bf16.gmra.mxu0 %v2688
        %v3154 = vpop.f32.mrf.mxu0
        %v3155 = vadd.f32 0.0, %v3154
        %v3156 = vpop.f32.mrf.mxu0
        %v3157 = vpop.f32.mrf.mxu0
        %v3158 = vadd.f32 0.0, %v3157
        %v3159 = vpop.f32.mrf.mxu0
        %3160 = vmatprep.mubr.bf16.mxu0 %v2819
        %3161 = vmatmul.mubr.bf16.gmra.mxu0 %v2691
        %v3162 = vpop.f32.mrf.mxu0
        %v3163 = vadd.f32 0.0, %v3162
        %v3164 = vpop.f32.mrf.mxu0
        %v3165 = vpop.f32.mrf.mxu0
        %v3166 = vadd.f32 0.0, %v3165
        %v3167 = vpop.f32.mrf.mxu0
        %3168 = vmatprep.mubr.bf16.mxu0 %v2822
        %3169 = vmatmul.mubr.bf16.gmra.mxu0 %v2694
        %v3170 = vpop.f32.mrf.mxu0
        %v3171 = vadd.f32 0.0, %v3170
        %v3172 = vpop.f32.mrf.mxu0
        %v3173 = vpop.f32.mrf.mxu0
        %v3174 = vadd.f32 0.0, %v3173
        %v3175 = vpop.f32.mrf.mxu0
        %3176 = vdwg.mxu0
        %3177 = vmatprep.subr.bf16.mxu0 0
        %3178 = vmatpush1.bf16.msra.mxu0 0
        %3179 = vmatprep.subr.bf16.mxu0 0
        %3180 = vmatpush1.bf16.msra.mxu0 0
        %3181 = vmatprep.subr.bf16.mxu0 0
        %3182 = vmatpush1.bf16.msra.mxu0 0
        %3183 = vmatprep.subr.bf16.mxu0 0
        %3184 = vmatpush1.bf16.msra.mxu0 0
        %3185 = vmatprep.subr.bf16.mxu0 0
        %3186 = vmatpush1.bf16.msra.mxu0 0
        %3187 = vmatprep.subr.bf16.mxu0 0
        %3188 = vmatpush1.bf16.msra.mxu0 0
        %3189 = vmatprep.subr.bf16.mxu0 0
        %3190 = vmatpush1.bf16.msra.mxu0 %v2949
        %3191 = vmatprep.subr.bf16.mxu0 0
        %3192 = vmatpush1.bf16.msra.mxu0 %v2948
        %3193 = vmatprep.subr.bf16.mxu0 0
        %3194 = vmatpush2.bf16.msra.mxu0 0
        %3195 = vmatprep.subr.bf16.mxu0 0
        %3196 = vmatpush2.bf16.msra.mxu0 0
        %3197 = vmatprep.subr.bf16.mxu0 0
        %3198 = vmatpush2.bf16.msra.mxu0 0
        %3199 = vmatprep.subr.bf16.mxu0 0
        %3200 = vmatpush2.bf16.msra.mxu0 0
        %3201 = vmatprep.subr.bf16.mxu0 0
        %3202 = vmatpush2.bf16.msra.mxu0 0
        %3203 = vmatprep.subr.bf16.mxu0 0
        %3204 = vmatpush2.bf16.msra.mxu0 0
        %3205 = vmatprep.subr.bf16.mxu0 0
        %3206 = vmatpush2.bf16.msra.mxu0 0
        %3207 = vmatprep.subr.bf16.mxu0 0
        %3208 = vmatpush2.bf16.msra.mxu0 0
        %3209 = vmatprep.mubr.bf16.mxu0 0
        %3210 = vmatmul.mubr.bf16.gmra.mxu0 %v2969
        %v3211 = vpop.f32.mrf.mxu0
        %v3212 = vadd.f32 %v3051, %v3211
        %v3213 = vpop.f32.mrf.mxu0
        %v3214 = vpop.f32.mrf.mxu0
        %v3215 = vadd.f32 %v3054, %v3214
        %v3216 = vpop.f32.mrf.mxu0
        %3217 = vmatprep.mubr.bf16.mxu0 0
        %3218 = vmatmul.mubr.bf16.gmra.mxu0 %v2972
        %v3219 = vpop.f32.mrf.mxu0
        %v3220 = vadd.f32 %v3059, %v3219
        %v3221 = vpop.f32.mrf.mxu0
        %v3222 = vpop.f32.mrf.mxu0
        %v3223 = vadd.f32 %v3062, %v3222
        %v3224 = vpop.f32.mrf.mxu0
        %3225 = vmatprep.mubr.bf16.mxu0 0
        %3226 = vmatmul.mubr.bf16.gmra.mxu0 %v2975
        %v3227 = vpop.f32.mrf.mxu0
        %v3228 = vadd.f32 %v3067, %v3227
        %v3229 = vpop.f32.mrf.mxu0
        %v3230 = vpop.f32.mrf.mxu0
        %v3231 = vadd.f32 %v3070, %v3230
        %v3232 = vpop.f32.mrf.mxu0
        %3233 = vmatprep.mubr.bf16.mxu0 0
        %3234 = vmatmul.mubr.bf16.gmra.mxu0 %v2978
        %v3235 = vpop.f32.mrf.mxu0
        %v3236 = vadd.f32 %v3075, %v3235
        %v3237 = vpop.f32.mrf.mxu0
        %v3238 = vpop.f32.mrf.mxu0
        %v3239 = vadd.f32 %v3078, %v3238
        %v3240 = vpop.f32.mrf.mxu0
        %3241 = vmatprep.mubr.bf16.mxu0 0
        %3242 = vmatmul.mubr.bf16.gmra.mxu0 %v2981
        %v3243 = vpop.f32.mrf.mxu0
        %v3244 = vadd.f32 %v3083, %v3243
        %v3245 = vpop.f32.mrf.mxu0
        %v3246 = vpop.f32.mrf.mxu0
        %v3247 = vadd.f32 %v3086, %v3246
        %v3248 = vpop.f32.mrf.mxu0
        %3249 = vmatprep.mubr.bf16.mxu0 0
        %3250 = vmatmul.mubr.bf16.gmra.mxu0 %v2984
        %v3251 = vpop.f32.mrf.mxu0
        %v3252 = vadd.f32 %v3091, %v3251
        %v3253 = vpop.f32.mrf.mxu0
        %v3254 = vpop.f32.mrf.mxu0
        %v3255 = vadd.f32 %v3094, %v3254
        %v3256 = vpop.f32.mrf.mxu0
        %3257 = vmatprep.mubr.bf16.mxu0 0
        %3258 = vmatmul.mubr.bf16.gmra.mxu0 %v2987
        %v3259 = vpop.f32.mrf.mxu0
        %v3260 = vadd.f32 %v3099, %v3259
        %v3261 = vpop.f32.mrf.mxu0
        %v3262 = vpop.f32.mrf.mxu0
        %v3263 = vadd.f32 %v3102, %v3262
        %v3264 = vpop.f32.mrf.mxu0
        %3265 = vmatprep.mubr.bf16.mxu0 0
        %3266 = vmatmul.mubr.bf16.gmra.mxu0 %v2990
        %v3267 = vpop.f32.mrf.mxu0
        %v3268 = vadd.f32 %v3107, %v3267
        %v3269 = vpop.f32.mrf.mxu0
        %v3270 = vpop.f32.mrf.mxu0
        %v3271 = vadd.f32 %v3110, %v3270
        %v3272 = vpop.f32.mrf.mxu0
        %3273 = vmatprep.mubr.bf16.mxu0 0
        %3274 = vmatmul.mubr.bf16.gmra.mxu0 %v2993
        %v3275 = vpop.f32.mrf.mxu0
        %v3276 = vadd.f32 %v3115, %v3275
        %v3277 = vpop.f32.mrf.mxu0
        %v3278 = vpop.f32.mrf.mxu0
        %v3279 = vadd.f32 %v3118, %v3278
        %v3280 = vpop.f32.mrf.mxu0
        %3281 = vmatprep.mubr.bf16.mxu0 0
        %3282 = vmatmul.mubr.bf16.gmra.mxu0 %v2996
        %v3283 = vpop.f32.mrf.mxu0
        %v3284 = vadd.f32 %v3123, %v3283
        %v3285 = vpop.f32.mrf.mxu0
        %v3286 = vpop.f32.mrf.mxu0
        %v3287 = vadd.f32 %v3126, %v3286
        %v3288 = vpop.f32.mrf.mxu0
        %3289 = vmatprep.mubr.bf16.mxu0 0
        %3290 = vmatmul.mubr.bf16.gmra.mxu0 %v2999
        %v3291 = vpop.f32.mrf.mxu0
        %v3292 = vadd.f32 %v3131, %v3291
        %v3293 = vpop.f32.mrf.mxu0
        %v3294 = vpop.f32.mrf.mxu0
        %v3295 = vadd.f32 %v3134, %v3294
        %v3296 = vpop.f32.mrf.mxu0
        %3297 = vmatprep.mubr.bf16.mxu0 0
        %3298 = vmatmul.mubr.bf16.gmra.mxu0 %v3002
        %v3299 = vpop.f32.mrf.mxu0
        %v3300 = vadd.f32 %v3139, %v3299
        %v3301 = vpop.f32.mrf.mxu0
        %v3302 = vpop.f32.mrf.mxu0
        %v3303 = vadd.f32 %v3142, %v3302
        %v3304 = vpop.f32.mrf.mxu0
        %3305 = vmatprep.mubr.bf16.mxu0 0
        %3306 = vmatmul.mubr.bf16.gmra.mxu0 %v3005
        %v3307 = vpop.f32.mrf.mxu0
        %v3308 = vadd.f32 %v3147, %v3307
        %v3309 = vpop.f32.mrf.mxu0
        %v3310 = vpop.f32.mrf.mxu0
        %v3311 = vadd.f32 %v3150, %v3310
        %v3312 = vpop.f32.mrf.mxu0
        %3313 = vmatprep.mubr.bf16.mxu0 0
        %3314 = vmatmul.mubr.bf16.gmra.mxu0 %v3008
        %v3315 = vpop.f32.mrf.mxu0
        %v3316 = vadd.f32 %v3155, %v3315
        %v3317 = vpop.f32.mrf.mxu0
        %v3318 = vpop.f32.mrf.mxu0
        %v3319 = vadd.f32 %v3158, %v3318
        %v3320 = vpop.f32.mrf.mxu0
        %3321 = vmatprep.mubr.bf16.mxu0 0
        %3322 = vmatmul.mubr.bf16.gmra.mxu0 %v3011
        %v3323 = vpop.f32.mrf.mxu0
        %v3324 = vadd.f32 %v3163, %v3323
        %v3325 = vpop.f32.mrf.mxu0
        %v3326 = vpop.f32.mrf.mxu0
        %v3327 = vadd.f32 %v3166, %v3326
        %v3328 = vpop.f32.mrf.mxu0
        %3329 = vmatprep.mubr.bf16.mxu0 0
        %3330 = vmatmul.mubr.bf16.gmra.mxu0 %v3014
        %v3331 = vpop.f32.mrf.mxu0
        %v3332 = vadd.f32 %v3171, %v3331
        %v3333 = vpop.f32.mrf.mxu0
        %v3334 = vpop.f32.mrf.mxu0
        %v3335 = vadd.f32 %v3174, %v3334
        %v3336 = vpop.f32.mrf.mxu0
        %3337 = vdwg.mxu0
        %v3338 = vld [vmem:[%s11] sm:$0x1]
        %v3339 = vld [vmem:[%s12] sm:$0x1]
        %v3340 = vsel %vm815, %v3212, 0.0
        %v3341 = vsel %vm815, %v3215, 0.0
        %v3342 = vadd.f32 %v3340, %v3341
        %v3343 = vsel %vm815, %v3220, 0.0
        %v3344 = vadd.f32 %v3342, %v3343
        %v3345 = vsel %vm815, %v3223, 0.0
        %v3346 = vadd.f32 %v3344, %v3345
        %v3347 = vsel %vm815, %v3228, 0.0
        %v3348 = vadd.f32 %v3346, %v3347
        %v3349 = vsel %vm815, %v3231, 0.0
        %v3350 = vadd.f32 %v3348, %v3349
        %v3351 = vsel %vm815, %v3236, 0.0
        %v3352 = vadd.f32 %v3350, %v3351
        %v3353 = vsel %vm815, %v3239, 0.0
        %v3354 = vadd.f32 %v3352, %v3353
        %v3355 = vsel %vm815, %v3244, 0.0
        %v3356 = vadd.f32 %v3354, %v3355
        %v3357 = vsel %vm815, %v3247, 0.0
        %v3358 = vadd.f32 %v3356, %v3357
        %v3359 = vsel %vm815, %v3252, 0.0
        %v3360 = vadd.f32 %v3358, %v3359
        %v3361 = vsel %vm815, %v3255, 0.0
        %v3362 = vadd.f32 %v3360, %v3361
        %v3363 = vsel %vm815, %v3260, 0.0
        %v3364 = vadd.f32 %v3362, %v3363
        %v3365 = vsel %vm815, %v3263, 0.0
        %v3366 = vadd.f32 %v3364, %v3365
        %v3367 = vsel %vm815, %v3268, 0.0
        %v3368 = vadd.f32 %v3366, %v3367
        %v3369 = vsel %vm815, %v3271, 0.0
        %v3370 = vadd.f32 %v3368, %v3369
        %v3371 = vsel %vm815, %v3276, 0.0
        %v3372 = vadd.f32 %v3370, %v3371
        %v3373 = vsel %vm815, %v3279, 0.0
        %v3374 = vadd.f32 %v3372, %v3373
        %v3375 = vsel %vm815, %v3284, 0.0
        %v3376 = vadd.f32 %v3374, %v3375
        %v3377 = vsel %vm815, %v3287, 0.0
        %v3378 = vadd.f32 %v3376, %v3377
        %v3379 = vsel %vm815, %v3292, 0.0
        %v3380 = vadd.f32 %v3378, %v3379
        %v3381 = vsel %vm815, %v3295, 0.0
        %v3382 = vadd.f32 %v3380, %v3381
        %v3383 = vsel %vm815, %v3300, 0.0
        %v3384 = vadd.f32 %v3382, %v3383
        %v3385 = vsel %vm815, %v3303, 0.0
        %v3386 = vadd.f32 %v3384, %v3385
        %v3387 = vsel %vm815, %v3308, 0.0
        %v3388 = vadd.f32 %v3386, %v3387
        %v3389 = vsel %vm815, %v3311, 0.0
        %v3390 = vadd.f32 %v3388, %v3389
        %v3391 = vsel %vm815, %v3316, 0.0
        %v3392 = vadd.f32 %v3390, %v3391
        %v3393 = vsel %vm815, %v3319, 0.0
        %v3394 = vadd.f32 %v3392, %v3393
        %v3395 = vsel %vm815, %v3324, 0.0
        %v3396 = vadd.f32 %v3394, %v3395
        %v3397 = vsel %vm815, %v3327, 0.0
        %v3398 = vadd.f32 %v3396, %v3397
        %v3399 = vsel %vm815, %v3332, 0.0
        %v3400 = vadd.f32 %v3398, %v3399
        %v3401 = vsel %vm815, %v3335, 0.0
        %v3402 = vadd.f32 %v3400, %v3401
        %v3403 = vrot.slane %v3402, 4
        %v3404 = vadd.f32 %v3402, %v3403
        %v3405 = vrot.slane %v3404, 2
        %v3406 = vadd.f32 %v3404, %v3405
        %v3407 = vrot.slane %v3406, 1
        %v3408 = vadd.f32 %v3406, %v3407
        %v3409 = vmul.f32 %v3212, %v3212
        %v3410 = vmul.f32 %v3215, %v3215
        %v3411 = vmul.f32 %v3220, %v3220
        %v3412 = vmul.f32 %v3223, %v3223
        %v3413 = vmul.f32 %v3228, %v3228
        %v3414 = vmul.f32 %v3231, %v3231
        %v3415 = vmul.f32 %v3236, %v3236
        %v3416 = vmul.f32 %v3239, %v3239
        %v3417 = vmul.f32 %v3244, %v3244
        %v3418 = vmul.f32 %v3247, %v3247
        %v3419 = vmul.f32 %v3252, %v3252
        %v3420 = vmul.f32 %v3255, %v3255
        %v3421 = vmul.f32 %v3260, %v3260
        %v3422 = vmul.f32 %v3263, %v3263
        %v3423 = vmul.f32 %v3268, %v3268
        %v3424 = vmul.f32 %v3271, %v3271
        %v3425 = vmul.f32 %v3276, %v3276
        %v3426 = vmul.f32 %v3279, %v3279
        %v3427 = vmul.f32 %v3284, %v3284
        %v3428 = vmul.f32 %v3287, %v3287
        %v3429 = vmul.f32 %v3292, %v3292
        %v3430 = vmul.f32 %v3295, %v3295
        %v3431 = vmul.f32 %v3300, %v3300
        %v3432 = vmul.f32 %v3303, %v3303
        %v3433 = vmul.f32 %v3308, %v3308
        %v3434 = vmul.f32 %v3311, %v3311
        %v3435 = vmul.f32 %v3316, %v3316
        %v3436 = vmul.f32 %v3319, %v3319
        %v3437 = vmul.f32 %v3324, %v3324
        %v3438 = vmul.f32 %v3327, %v3327
        %v3439 = vmul.f32 %v3332, %v3332
        %v3440 = vmul.f32 %v3335, %v3335
        %v3441 = vsel %vm815, %v3409, 0.0
        %v3442 = vsel %vm815, %v3410, 0.0
        %v3443 = vadd.f32 %v3441, %v3442
        %v3444 = vsel %vm815, %v3411, 0.0
        %v3445 = vadd.f32 %v3443, %v3444
        %v3446 = vsel %vm815, %v3412, 0.0
        %v3447 = vadd.f32 %v3445, %v3446
        %v3448 = vsel %vm815, %v3413, 0.0
        %v3449 = vadd.f32 %v3447, %v3448
        %v3450 = vsel %vm815, %v3414, 0.0
        %v3451 = vadd.f32 %v3449, %v3450
        %v3452 = vsel %vm815, %v3415, 0.0
        %v3453 = vadd.f32 %v3451, %v3452
        %v3454 = vsel %vm815, %v3416, 0.0
        %v3455 = vadd.f32 %v3453, %v3454
        %v3456 = vsel %vm815, %v3417, 0.0
        %v3457 = vadd.f32 %v3455, %v3456
        %v3458 = vsel %vm815, %v3418, 0.0
        %v3459 = vadd.f32 %v3457, %v3458
        %v3460 = vsel %vm815, %v3419, 0.0
        %v3461 = vadd.f32 %v3459, %v3460
        %v3462 = vsel %vm815, %v3420, 0.0
        %v3463 = vadd.f32 %v3461, %v3462
        %v3464 = vsel %vm815, %v3421, 0.0
        %v3465 = vadd.f32 %v3463, %v3464
        %v3466 = vsel %vm815, %v3422, 0.0
        %v3467 = vadd.f32 %v3465, %v3466
        %v3468 = vsel %vm815, %v3423, 0.0
        %v3469 = vadd.f32 %v3467, %v3468
        %v3470 = vsel %vm815, %v3424, 0.0
        %v3471 = vadd.f32 %v3469, %v3470
        %v3472 = vsel %vm815, %v3425, 0.0
        %v3473 = vadd.f32 %v3471, %v3472
        %v3474 = vsel %vm815, %v3426, 0.0
        %v3475 = vadd.f32 %v3473, %v3474
        %v3476 = vsel %vm815, %v3427, 0.0
        %v3477 = vadd.f32 %v3475, %v3476
        %v3478 = vsel %vm815, %v3428, 0.0
        %v3479 = vadd.f32 %v3477, %v3478
        %v3480 = vsel %vm815, %v3429, 0.0
        %v3481 = vadd.f32 %v3479, %v3480
        %v3482 = vsel %vm815, %v3430, 0.0
        %v3483 = vadd.f32 %v3481, %v3482
        %v3484 = vsel %vm815, %v3431, 0.0
        %v3485 = vadd.f32 %v3483, %v3484
        %v3486 = vsel %vm815, %v3432, 0.0
        %v3487 = vadd.f32 %v3485, %v3486
        %v3488 = vsel %vm815, %v3433, 0.0
        %v3489 = vadd.f32 %v3487, %v3488
        %v3490 = vsel %vm815, %v3434, 0.0
        %v3491 = vadd.f32 %v3489, %v3490
        %v3492 = vsel %vm815, %v3435, 0.0
        %v3493 = vadd.f32 %v3491, %v3492
        %v3494 = vsel %vm815, %v3436, 0.0
        %v3495 = vadd.f32 %v3493, %v3494
        %v3496 = vsel %vm815, %v3437, 0.0
        %v3497 = vadd.f32 %v3495, %v3496
        %v3498 = vsel %vm815, %v3438, 0.0
        %v3499 = vadd.f32 %v3497, %v3498
        %v3500 = vsel %vm815, %v3439, 0.0
        %v3501 = vadd.f32 %v3499, %v3500
        %v3502 = vsel %vm815, %v3440, 0.0
        %v3503 = vadd.f32 %v3501, %v3502
        %v3504 = vrot.slane %v3503, 4
        %v3505 = vadd.f32 %v3503, %v3504
        %v3506 = vrot.slane %v3505, 2
        %v3507 = vadd.f32 %v3505, %v3506
        %v3508 = vrot.slane %v3507, 1
        %v3509 = vadd.f32 %v3507, %v3508
        %v3510 = vsel %vm731, %v3408, %v3509
        %v3512 = vsel %vm815, %v3510, 0
        %3514 = vmatprep.subr.mxu0 0.0
        %3515 = vmatpush1.msra.mxu0 0.0
        %3516 = vmatprep.subr.mxu0 0.0
        %3517 = vmatpush1.msra.mxu0 0.0
        %3518 = vmatprep.subr.mxu0 0.0
        %3519 = vmatpush1.msra.mxu0 0.0
        %3520 = vmatprep.subr.mxu0 0.0
        %3521 = vmatpush1.msra.mxu0 0.0
        %3522 = vmatprep.subr.mxu0 0.0
        %3523 = vmatpush1.msra.mxu0 0.0
        %3524 = vmatprep.subr.mxu0 0.0
        %3525 = vmatpush1.msra.mxu0 0.0
        %3526 = vmatprep.subr.mxu0 0.0
        %3527 = vmatpush1.msra.mxu0 0.0
        %3528 = vmatprep.subr.mxu0 0.0
        %3529 = vmatpush1.msra.mxu0 0.0
        %3530 = vmatprep.subr.mxu0 0.0
        %3531 = vmatpush1.msra.mxu0 0.0
        %3532 = vmatprep.subr.mxu0 0.0
        %3533 = vmatpush1.msra.mxu0 0.0
        %3534 = vmatprep.subr.mxu0 0.0
        %3535 = vmatpush1.msra.mxu0 0.0
        %3536 = vmatprep.subr.mxu0 0.0
        %3537 = vmatpush1.msra.mxu0 0.0
        %3538 = vmatprep.subr.mxu0 0.0
        %3539 = vmatpush1.msra.mxu0 %v1460
        %3540 = vmatprep.subr.mxu0 0.0
        %3541 = vmatpush1.msra.mxu0 %v1459
        %3542 = vmatprep.subr.mxu0 0.0
        %3543 = vmatpush1.msra.mxu0 %v1458
        %3544 = vmatprep.subr.mxu0 0.0
        %3545 = vmatpush1.msra.mxu0 %v1457
        %3546 = vmatprep.subr.mxu0 0.0
        %3547 = vmatpush2.msra.mxu0 0.0
        %3548 = vmatprep.subr.mxu0 0.0
        %3549 = vmatpush2.msra.mxu0 0.0
        %3550 = vmatprep.subr.mxu0 0.0
        %3551 = vmatpush2.msra.mxu0 0.0
        %3552 = vmatprep.subr.mxu0 0.0
        %3553 = vmatpush2.msra.mxu0 0.0
        %3554 = vmatprep.subr.mxu0 0.0
        %3555 = vmatpush2.msra.mxu0 0.0
        %3556 = vmatprep.subr.mxu0 0.0
        %3557 = vmatpush2.msra.mxu0 0.0
        %3558 = vmatprep.subr.mxu0 0.0
        %3559 = vmatpush2.msra.mxu0 0.0
        %3560 = vmatprep.subr.mxu0 0.0
        %3561 = vmatpush2.msra.mxu0 0.0
        %3562 = vmatprep.subr.mxu0 0.0
        %3563 = vmatpush2.msra.mxu0 0.0
        %3564 = vmatprep.subr.mxu0 0.0
        %3565 = vmatpush2.msra.mxu0 0.0
        %3566 = vmatprep.subr.mxu0 0.0
        %3567 = vmatpush2.msra.mxu0 0.0
        %3568 = vmatprep.subr.mxu0 0.0
        %3569 = vmatpush2.msra.mxu0 0.0
        %3570 = vmatprep.subr.mxu0 0.0
        %3571 = vmatpush2.msra.mxu0 0.0
        %3572 = vmatprep.subr.mxu0 0.0
        %3573 = vmatpush2.msra.mxu0 0.0
        %3574 = vmatprep.subr.mxu0 0.0
        %3575 = vmatpush2.msra.mxu0 0.0
        %3576 = vmatprep.subr.mxu0 0.0
        %3577 = vmatpush2.msra.mxu0 0.0
        %3578 = vmatprep.mubr.f32.mxu0 0.0
        %3579 = vmatmul.mubr.f32.gmra.mxu0 %v3512
        %v3580 = vpop.f32.mrf.mxu0
        %v3581 = vadd.f32 0.0, %v3580
        %v3582 = vpop.f32.mrf.mxu0
        %3583 = vdwg.mxu0
        %v3584 = vmul.f32 %v3581, 0.00390625
        %v3585 = vmul.f32 %v3584, %v3584
        %v3587 = vrot.slane %v3585, 7
        %v3589 = vsub.f32 %v3584, %v3587
        %v3590 = vadd.f32 %v3589, 1e-05
        %v3591 = vrsqrt.pop %v3590
        %v3592 = vsel %vm731, %v3584, %v3591
        %v3594 = vsel %vm815, %v3592, 0
        %3596 = vmatprep.subr.mxu0 0.0
        %3597 = vmatpush1.msra.mxu0 0.0
        %3598 = vmatprep.subr.mxu0 0.0
        %3599 = vmatpush1.msra.mxu0 0.0
        %3600 = vmatprep.subr.mxu0 0.0
        %3601 = vmatpush1.msra.mxu0 0.0
        %3602 = vmatprep.subr.mxu0 0.0
        %3603 = vmatpush1.msra.mxu0 0.0
        %3604 = vmatprep.subr.mxu0 0.0
        %3605 = vmatpush1.msra.mxu0 0.0
        %3606 = vmatprep.subr.mxu0 0.0
        %3607 = vmatpush1.msra.mxu0 0.0
        %3608 = vmatprep.subr.mxu0 0.0
        %3609 = vmatpush1.msra.mxu0 0.0
        %3610 = vmatprep.subr.mxu0 0.0
        %3611 = vmatpush1.msra.mxu0 0.0
        %3612 = vmatprep.subr.mxu0 0.0
        %3613 = vmatpush1.msra.mxu0 0.0
        %3614 = vmatprep.subr.mxu0 0.0
        %3615 = vmatpush1.msra.mxu0 0.0
        %3616 = vmatprep.subr.mxu0 0.0
        %3617 = vmatpush1.msra.mxu0 0.0
        %3618 = vmatprep.subr.mxu0 0.0
        %3619 = vmatpush1.msra.mxu0 0.0
        %3620 = vmatprep.subr.mxu0 0.0
        %3621 = vmatpush1.msra.mxu0 %v1464
        %3622 = vmatprep.subr.mxu0 0.0
        %3623 = vmatpush1.msra.mxu0 %v1463
        %3624 = vmatprep.subr.mxu0 0.0
        %3625 = vmatpush1.msra.mxu0 %v1462
        %3626 = vmatprep.subr.mxu0 0.0
        %3627 = vmatpush1.msra.mxu0 %v1461
        %3628 = vmatprep.subr.mxu0 0.0
        %3629 = vmatpush2.msra.mxu0 0.0
        %3630 = vmatprep.subr.mxu0 0.0
        %3631 = vmatpush2.msra.mxu0 0.0
        %3632 = vmatprep.subr.mxu0 0.0
        %3633 = vmatpush2.msra.mxu0 0.0
        %3634 = vmatprep.subr.mxu0 0.0
        %3635 = vmatpush2.msra.mxu0 0.0
        %3636 = vmatprep.subr.mxu0 0.0
        %3637 = vmatpush2.msra.mxu0 0.0
        %3638 = vmatprep.subr.mxu0 0.0
        %3639 = vmatpush2.msra.mxu0 0.0
        %3640 = vmatprep.subr.mxu0 0.0
        %3641 = vmatpush2.msra.mxu0 0.0
        %3642 = vmatprep.subr.mxu0 0.0
        %3643 = vmatpush2.msra.mxu0 0.0
        %3644 = vmatprep.subr.mxu0 0.0
        %3645 = vmatpush2.msra.mxu0 0.0
        %3646 = vmatprep.subr.mxu0 0.0
        %3647 = vmatpush2.msra.mxu0 0.0
        %3648 = vmatprep.subr.mxu0 0.0
        %3649 = vmatpush2.msra.mxu0 0.0
        %3650 = vmatprep.subr.mxu0 0.0
        %3651 = vmatpush2.msra.mxu0 0.0
        %3652 = vmatprep.subr.mxu0 0.0
        %3653 = vmatpush2.msra.mxu0 0.0
        %3654 = vmatprep.subr.mxu0 0.0
        %3655 = vmatpush2.msra.mxu0 0.0
        %3656 = vmatprep.subr.mxu0 0.0
        %3657 = vmatpush2.msra.mxu0 0.0
        %3658 = vmatprep.subr.mxu0 0.0
        %3659 = vmatpush2.msra.mxu0 0.0
        %3660 = vmatprep.mubr.f32.mxu0 0.0
        %3661 = vmatmul.mubr.f32.gmra.mxu0 %v3594
        %v3662 = vpop.f32.mrf.mxu0
        %v3663 = vadd.f32 0.0, %v3662
        %v3664 = vpop.f32.mrf.mxu0
        %3665 = vdwg.mxu0
        %v3667 = vlaneseq
        %v3668 = vshrl.u32 %v3667, 7
        %v3669 = vsub.s32 0, %v3668
        %v3670 = vrot.slane %v3338, %v3669
        %v3672 = vmul.f32 %v3663, %v3670
        %v3674 = vrot.slane %v3672, 1
        %v3676 = vmul.f32 %v3663, %v3674
        %v3677 = vsub.f32 %v3339, %v3676
        %v3678 = vlaneseq
        %v3679 = vshrl.u32 %v3678, 7
        %v3680 = vsub.s32 1, %v3679
        %v3681 = vrot.slane %v3672, %v3680
        %v3682 = vmul.f32 %v3212, %v3681
        %v3683 = vmul.f32 %v3215, %v3681
        %v3684 = vmul.f32 %v3220, %v3681
        %v3685 = vmul.f32 %v3223, %v3681
        %v3686 = vmul.f32 %v3228, %v3681
        %v3687 = vmul.f32 %v3231, %v3681
        %v3688 = vmul.f32 %v3236, %v3681
        %v3689 = vmul.f32 %v3239, %v3681
        %v3690 = vmul.f32 %v3244, %v3681
        %v3691 = vmul.f32 %v3247, %v3681
        %v3692 = vmul.f32 %v3252, %v3681
        %v3693 = vmul.f32 %v3255, %v3681
        %v3694 = vmul.f32 %v3260, %v3681
        %v3695 = vmul.f32 %v3263, %v3681
        %v3696 = vmul.f32 %v3268, %v3681
        %v3697 = vmul.f32 %v3271, %v3681
        %v3698 = vmul.f32 %v3276, %v3681
        %v3699 = vmul.f32 %v3279, %v3681
        %v3700 = vmul.f32 %v3284, %v3681
        %v3701 = vmul.f32 %v3287, %v3681
        %v3702 = vmul.f32 %v3292, %v3681
        %v3703 = vmul.f32 %v3295, %v3681
        %v3704 = vmul.f32 %v3300, %v3681
        %v3705 = vmul.f32 %v3303, %v3681
        %v3706 = vmul.f32 %v3308, %v3681
        %v3707 = vmul.f32 %v3311, %v3681
        %v3708 = vmul.f32 %v3316, %v3681
        %v3709 = vmul.f32 %v3319, %v3681
        %v3710 = vmul.f32 %v3324, %v3681
        %v3711 = vmul.f32 %v3327, %v3681
        %v3712 = vmul.f32 %v3332, %v3681
        %v3713 = vmul.f32 %v3335, %v3681
        %v3715 = vlaneseq
        %v3716 = vshrl.u32 %v3715, 7
        %v3717 = vsub.s32 0, %v3716
        %v3718 = vrot.slane %v3677, %v3717
        %v3720 = vadd.f32 %v3682, %v3718
        %v3721 = vadd.f32 %v3683, %v3718
        %v3722 = vadd.f32 %v3684, %v3718
        %v3723 = vadd.f32 %v3685, %v3718
        %v3724 = vadd.f32 %v3686, %v3718
        %v3725 = vadd.f32 %v3687, %v3718
        %v3726 = vadd.f32 %v3688, %v3718
        %v3727 = vadd.f32 %v3689, %v3718
        %v3728 = vadd.f32 %v3690, %v3718
        %v3729 = vadd.f32 %v3691, %v3718
        %v3730 = vadd.f32 %v3692, %v3718
        %v3731 = vadd.f32 %v3693, %v3718
        %v3732 = vadd.f32 %v3694, %v3718
        %v3733 = vadd.f32 %v3695, %v3718
        %v3734 = vadd.f32 %v3696, %v3718
        %v3735 = vadd.f32 %v3697, %v3718
        %v3736 = vadd.f32 %v3698, %v3718
        %v3737 = vadd.f32 %v3699, %v3718
        %v3738 = vadd.f32 %v3700, %v3718
        %v3739 = vadd.f32 %v3701, %v3718
        %v3740 = vadd.f32 %v3702, %v3718
        %v3741 = vadd.f32 %v3703, %v3718
        %v3742 = vadd.f32 %v3704, %v3718
        %v3743 = vadd.f32 %v3705, %v3718
        %v3744 = vadd.f32 %v3706, %v3718
        %v3745 = vadd.f32 %v3707, %v3718
        %v3746 = vadd.f32 %v3708, %v3718
        %v3747 = vadd.f32 %v3709, %v3718
        %v3748 = vadd.f32 %v3710, %v3718
        %v3749 = vadd.f32 %v3711, %v3718
        %v3750 = vadd.f32 %v3712, %v3718
        %v3751 = vadd.f32 %v3713, %v3718
        %v3752 = vmax.f32 %v3720, 0.0
        %v3753 = vmax.f32 %v3721, 0.0
        %v3754 = vmax.f32 %v3722, 0.0
        %v3755 = vmax.f32 %v3723, 0.0
        %v3756 = vmax.f32 %v3724, 0.0
        %v3757 = vmax.f32 %v3725, 0.0
        %v3758 = vmax.f32 %v3726, 0.0
        %v3759 = vmax.f32 %v3727, 0.0
        %v3760 = vmax.f32 %v3728, 0.0
        %v3761 = vmax.f32 %v3729, 0.0
        %v3762 = vmax.f32 %v3730, 0.0
        %v3763 = vmax.f32 %v3731, 0.0
        %v3764 = vmax.f32 %v3732, 0.0
        %v3765 = vmax.f32 %v3733, 0.0
        %v3766 = vmax.f32 %v3734, 0.0
        %v3767 = vmax.f32 %v3735, 0.0
        %v3768 = vmax.f32 %v3736, 0.0
        %v3769 = vmax.f32 %v3737, 0.0
        %v3770 = vmax.f32 %v3738, 0.0
        %v3771 = vmax.f32 %v3739, 0.0
        %v3772 = vmax.f32 %v3740, 0.0
        %v3773 = vmax.f32 %v3741, 0.0
        %v3774 = vmax.f32 %v3742, 0.0
        %v3775 = vmax.f32 %v3743, 0.0
        %v3776 = vmax.f32 %v3744, 0.0
        %v3777 = vmax.f32 %v3745, 0.0
        %v3778 = vmax.f32 %v3746, 0.0
        %v3779 = vmax.f32 %v3747, 0.0
        %v3780 = vmax.f32 %v3748, 0.0
        %v3781 = vmax.f32 %v3749, 0.0
        %v3782 = vmax.f32 %v3750, 0.0
        %v3783 = vmax.f32 %v3751, 0.0
        %v3784 = vpack.c.bf16 %v3753, %v3752
        %v3785 = vpack.c.bf16 %v3755, %v3754
        %v3786 = vpack.c.bf16 %v3757, %v3756
        %v3787 = vpack.c.bf16 %v3759, %v3758
        %v3788 = vpack.c.bf16 %v3761, %v3760
        %v3789 = vpack.c.bf16 %v3763, %v3762
        %v3790 = vpack.c.bf16 %v3765, %v3764
        %v3791 = vpack.c.bf16 %v3767, %v3766
        %v3792 = vpack.c.bf16 %v3769, %v3768
        %v3793 = vpack.c.bf16 %v3771, %v3770
        %v3794 = vpack.c.bf16 %v3773, %v3772
        %v3795 = vpack.c.bf16 %v3775, %v3774
        %v3796 = vpack.c.bf16 %v3777, %v3776
        %v3797 = vpack.c.bf16 %v3779, %v3778
        %v3798 = vpack.c.bf16 %v3781, %v3780
        %v3799 = vpack.c.bf16 %v3783, %v3782
        %v3800 = vld [vmem:[%s13] sm:$0xf]
        %v3801 = vld [vmem:[%s13 + $0x4] sm:$0xf]
        %v3802 = vld [vmem:[%s13 + $0x8] sm:$0xf]
        %v3803 = vld [vmem:[%s13 + $0xc] sm:$0xf]
        %v3808 = vunpack.c.l.b16 %v3800
        %v3809 = vunpack.c.l.b16 %v3801
        %v3810 = vunpack.c.l.b16 %v3802
        %v3811 = vunpack.c.l.b16 %v3803
        %v3812 = vpack.c.b16 %v3809, %v3808
        %v3813 = vpack.c.b16 %v3811, %v3810
        %v3817 = vsel %vm815, %v3784, 0
        %v3820 = vsel %vm815, %v3785, 0
        %v3823 = vsel %vm815, %v3786, 0
        %v3826 = vsel %vm815, %v3787, 0
        %v3829 = vsel %vm815, %v3788, 0
        %v3832 = vsel %vm815, %v3789, 0
        %v3835 = vsel %vm815, %v3790, 0
        %v3838 = vsel %vm815, %v3791, 0
        %v3841 = vsel %vm815, %v3792, 0
        %v3844 = vsel %vm815, %v3793, 0
        %v3847 = vsel %vm815, %v3794, 0
        %v3850 = vsel %vm815, %v3795, 0
        %v3853 = vsel %vm815, %v3796, 0
        %v3856 = vsel %vm815, %v3797, 0
        %v3859 = vsel %vm815, %v3798, 0
        %v3862 = vsel %vm815, %v3799, 0
        %3864 = vmatprep.subr.bf16.mxu0 0
        %3865 = vmatpush1.bf16.msra.mxu0 0
        %3866 = vmatprep.subr.bf16.mxu0 0
        %3867 = vmatpush1.bf16.msra.mxu0 0
        %3868 = vmatprep.subr.bf16.mxu0 0
        %3869 = vmatpush1.bf16.msra.mxu0 0
        %3870 = vmatprep.subr.bf16.mxu0 0
        %3871 = vmatpush1.bf16.msra.mxu0 0
        %3872 = vmatprep.subr.bf16.mxu0 0
        %3873 = vmatpush1.bf16.msra.mxu0 0
        %3874 = vmatprep.subr.bf16.mxu0 0
        %3875 = vmatpush1.bf16.msra.mxu0 0
        %3876 = vmatprep.subr.bf16.mxu0 0
        %3877 = vmatpush1.bf16.msra.mxu0 %v3813
        %3878 = vmatprep.subr.bf16.mxu0 0
        %3879 = vmatpush1.bf16.msra.mxu0 %v3812
        %3880 = vmatprep.subr.bf16.mxu0 0
        %3881 = vmatpush2.bf16.msra.mxu0 0
        %3882 = vmatprep.subr.bf16.mxu0 0
        %3883 = vmatpush2.bf16.msra.mxu0 0
        %3884 = vmatprep.subr.bf16.mxu0 0
        %3885 = vmatpush2.bf16.msra.mxu0 0
        %3886 = vmatprep.subr.bf16.mxu0 0
        %3887 = vmatpush2.bf16.msra.mxu0 0
        %3888 = vmatprep.subr.bf16.mxu0 0
        %3889 = vmatpush2.bf16.msra.mxu0 0
        %3890 = vmatprep.subr.bf16.mxu0 0
        %3891 = vmatpush2.bf16.msra.mxu0 0
        %3892 = vmatprep.subr.bf16.mxu0 0
        %3893 = vmatpush2.bf16.msra.mxu0 0
        %3894 = vmatprep.subr.bf16.mxu0 0
        %3895 = vmatpush2.bf16.msra.mxu0 0
        %3896 = vmatprep.mubr.bf16.mxu0 0
        %3897 = vmatmul.mubr.bf16.gmra.mxu0 %v3817
        %v3898 = vpop.f32.mrf.mxu0
        %v3899 = vadd.f32 %v1138, %v3898
        %v3900 = vpop.f32.mrf.mxu0
        %v3901 = vpop.f32.mrf.mxu0
        %v3902 = vadd.f32 %v1141, %v3901
        %v3903 = vpop.f32.mrf.mxu0
        %3904 = vmatprep.mubr.bf16.mxu0 0
        %3905 = vmatmul.mubr.bf16.gmra.mxu0 %v3820
        %v3906 = vpop.f32.mrf.mxu0
        %v3907 = vadd.f32 %v1146, %v3906
        %v3908 = vpop.f32.mrf.mxu0
        %v3909 = vpop.f32.mrf.mxu0
        %v3910 = vadd.f32 %v1149, %v3909
        %v3911 = vpop.f32.mrf.mxu0
        %3912 = vmatprep.mubr.bf16.mxu0 0
        %3913 = vmatmul.mubr.bf16.gmra.mxu0 %v3823
        %v3914 = vpop.f32.mrf.mxu0
        %v3915 = vadd.f32 %v1154, %v3914
        %v3916 = vpop.f32.mrf.mxu0
        %v3917 = vpop.f32.mrf.mxu0
        %v3918 = vadd.f32 %v1157, %v3917
        %v3919 = vpop.f32.mrf.mxu0
        %3920 = vmatprep.mubr.bf16.mxu0 0
        %3921 = vmatmul.mubr.bf16.gmra.mxu0 %v3826
        %v3922 = vpop.f32.mrf.mxu0
        %v3923 = vadd.f32 %v1162, %v3922
        %v3924 = vpop.f32.mrf.mxu0
        %v3925 = vpop.f32.mrf.mxu0
        %v3926 = vadd.f32 %v1165, %v3925
        %v3927 = vpop.f32.mrf.mxu0
        %3928 = vmatprep.mubr.bf16.mxu0 0
        %3929 = vmatmul.mubr.bf16.gmra.mxu0 %v3829
        %v3930 = vpop.f32.mrf.mxu0
        %v3931 = vadd.f32 %v1170, %v3930
        %v3932 = vpop.f32.mrf.mxu0
        %v3933 = vpop.f32.mrf.mxu0
        %v3934 = vadd.f32 %v1173, %v3933
        %v3935 = vpop.f32.mrf.mxu0
        %3936 = vmatprep.mubr.bf16.mxu0 0
        %3937 = vmatmul.mubr.bf16.gmra.mxu0 %v3832
        %v3938 = vpop.f32.mrf.mxu0
        %v3939 = vadd.f32 %v1178, %v3938
        %v3940 = vpop.f32.mrf.mxu0
        %v3941 = vpop.f32.mrf.mxu0
        %v3942 = vadd.f32 %v1181, %v3941
        %v3943 = vpop.f32.mrf.mxu0
        %3944 = vmatprep.mubr.bf16.mxu0 0
        %3945 = vmatmul.mubr.bf16.gmra.mxu0 %v3835
        %v3946 = vpop.f32.mrf.mxu0
        %v3947 = vadd.f32 %v1186, %v3946
        %v3948 = vpop.f32.mrf.mxu0
        %v3949 = vpop.f32.mrf.mxu0
        %v3950 = vadd.f32 %v1189, %v3949
        %v3951 = vpop.f32.mrf.mxu0
        %3952 = vmatprep.mubr.bf16.mxu0 0
        %3953 = vmatmul.mubr.bf16.gmra.mxu0 %v3838
        %v3954 = vpop.f32.mrf.mxu0
        %v3955 = vadd.f32 %v1194, %v3954
        %v3956 = vpop.f32.mrf.mxu0
        %v3957 = vpop.f32.mrf.mxu0
        %v3958 = vadd.f32 %v1197, %v3957
        %v3959 = vpop.f32.mrf.mxu0
        %3960 = vmatprep.mubr.bf16.mxu0 0
        %3961 = vmatmul.mubr.bf16.gmra.mxu0 %v3841
        %v3962 = vpop.f32.mrf.mxu0
        %v3963 = vadd.f32 %v1202, %v3962
        %v3964 = vpop.f32.mrf.mxu0
        %v3965 = vpop.f32.mrf.mxu0
        %v3966 = vadd.f32 %v1205, %v3965
        %v3967 = vpop.f32.mrf.mxu0
        %3968 = vmatprep.mubr.bf16.mxu0 0
        %3969 = vmatmul.mubr.bf16.gmra.mxu0 %v3844
        %v3970 = vpop.f32.mrf.mxu0
        %v3971 = vadd.f32 %v1210, %v3970
        %v3972 = vpop.f32.mrf.mxu0
        %v3973 = vpop.f32.mrf.mxu0
        %v3974 = vadd.f32 %v1213, %v3973
        %v3975 = vpop.f32.mrf.mxu0
        %3976 = vmatprep.mubr.bf16.mxu0 0
        %3977 = vmatmul.mubr.bf16.gmra.mxu0 %v3847
        %v3978 = vpop.f32.mrf.mxu0
        %v3979 = vadd.f32 %v1218, %v3978
        %v3980 = vpop.f32.mrf.mxu0
        %v3981 = vpop.f32.mrf.mxu0
        %v3982 = vadd.f32 %v1221, %v3981
        %v3983 = vpop.f32.mrf.mxu0
        %3984 = vmatprep.mubr.bf16.mxu0 0
        %3985 = vmatmul.mubr.bf16.gmra.mxu0 %v3850
        %v3986 = vpop.f32.mrf.mxu0
        %v3987 = vadd.f32 %v1226, %v3986
        %v3988 = vpop.f32.mrf.mxu0
        %v3989 = vpop.f32.mrf.mxu0
        %v3990 = vadd.f32 %v1229, %v3989
        %v3991 = vpop.f32.mrf.mxu0
        %3992 = vmatprep.mubr.bf16.mxu0 0
        %3993 = vmatmul.mubr.bf16.gmra.mxu0 %v3853
        %v3994 = vpop.f32.mrf.mxu0
        %v3995 = vadd.f32 %v1234, %v3994
        %v3996 = vpop.f32.mrf.mxu0
        %v3997 = vpop.f32.mrf.mxu0
        %v3998 = vadd.f32 %v1237, %v3997
        %v3999 = vpop.f32.mrf.mxu0
        %4000 = vmatprep.mubr.bf16.mxu0 0
        %4001 = vmatmul.mubr.bf16.gmra.mxu0 %v3856
        %v4002 = vpop.f32.mrf.mxu0
        %v4003 = vadd.f32 %v1242, %v4002
        %v4004 = vpop.f32.mrf.mxu0
        %v4005 = vpop.f32.mrf.mxu0
        %v4006 = vadd.f32 %v1245, %v4005
        %v4007 = vpop.f32.mrf.mxu0
        %4008 = vmatprep.mubr.bf16.mxu0 0
        %4009 = vmatmul.mubr.bf16.gmra.mxu0 %v3859
        %v4010 = vpop.f32.mrf.mxu0
        %v4011 = vadd.f32 %v1250, %v4010
        %v4012 = vpop.f32.mrf.mxu0
        %v4013 = vpop.f32.mrf.mxu0
        %v4014 = vadd.f32 %v1253, %v4013
        %v4015 = vpop.f32.mrf.mxu0
        %4016 = vmatprep.mubr.bf16.mxu0 0
        %4017 = vmatmul.mubr.bf16.gmra.mxu0 %v3862
        %v4018 = vpop.f32.mrf.mxu0
        %v4019 = vadd.f32 %v1258, %v4018
        %v4020 = vpop.f32.mrf.mxu0
        %v4021 = vpop.f32.mrf.mxu0
        %v4022 = vadd.f32 %v1261, %v4021
        %v4023 = vpop.f32.mrf.mxu0
        %4024 = vdwg.mxu0
        %4025 = vst [vmem:[%s512] sm:$0xff] %v3899
        %4026 = vst [vmem:[%s512 + $0x8] sm:$0xff] %v3902
        %4027 = vst [vmem:[%s512 + $0x10] sm:$0xff] %v3907
        %4028 = vst [vmem:[%s512 + $0x18] sm:$0xff] %v3910
        %4029 = vst [vmem:[%s512 + $0x20] sm:$0xff] %v3915
        %4030 = vst [vmem:[%s512 + $0x28] sm:$0xff] %v3918
        %4031 = vst [vmem:[%s512 + $0x30] sm:$0xff] %v3923
        %4032 = vst [vmem:[%s512 + $0x38] sm:$0xff] %v3926
        %4033 = vst [vmem:[%s512 + $0x40] sm:$0xff] %v3931
        %4034 = vst [vmem:[%s512 + $0x48] sm:$0xff] %v3934
        %4035 = vst [vmem:[%s512 + $0x50] sm:$0xff] %v3939
        %4036 = vst [vmem:[%s512 + $0x58] sm:$0xff] %v3942
        %4037 = vst [vmem:[%s512 + $0x60] sm:$0xff] %v3947
        %4038 = vst [vmem:[%s512 + $0x68] sm:$0xff] %v3950
        %4039 = vst [vmem:[%s512 + $0x70] sm:$0xff] %v3955
        %4040 = vst [vmem:[%s512 + $0x78] sm:$0xff] %v3958
        %4041 = vst [vmem:[%s512 + $0x80] sm:$0xff] %v3963
        %4042 = vst [vmem:[%s512 + $0x88] sm:$0xff] %v3966
        %4043 = vst [vmem:[%s512 + $0x90] sm:$0xff] %v3971
        %4044 = vst [vmem:[%s512 + $0x98] sm:$0xff] %v3974
        %4045 = vst [vmem:[%s512 + $0xa0] sm:$0xff] %v3979
        %4046 = vst [vmem:[%s512 + $0xa8] sm:$0xff] %v3982
        %4047 = vst [vmem:[%s512 + $0xb0] sm:$0xff] %v3987
        %4048 = vst [vmem:[%s512 + $0xb8] sm:$0xff] %v3990
        %4049 = vst [vmem:[%s512 + $0xc0] sm:$0xff] %v3995
        %4050 = vst [vmem:[%s512 + $0xc8] sm:$0xff] %v3998
        %4051 = vst [vmem:[%s512 + $0xd0] sm:$0xff] %v4003
        %4052 = vst [vmem:[%s512 + $0xd8] sm:$0xff] %v4006
        %4053 = vst [vmem:[%s512 + $0xe0] sm:$0xff] %v4011
        %4054 = vst [vmem:[%s512 + $0xe8] sm:$0xff] %v4014
        %4055 = vst [vmem:[%s512 + $0xf0] sm:$0xff] %v4019
        %4056 = vst [vmem:[%s512 + $0xf8] sm:$0xff] %v4022
        %s4057 = sand.u32 %s360, 1
        %s4058 = scalar_lea.sflag [#allocation4], %s4057
        %s4059 = sand.u32 %s360, 1
        %s4060 = smul.addr %s4059, 256
        %s4061 = scalar_lea.vmem [#allocation5], %s4060
        // Predicated region
        $region85: #{tpu_custom_call.1} parent=79 // pred_check
          %p4062 = pneg %p370
        $region86: #{tpu_custom_call.1} parent=79 // pred_check_branch
          %4064 = sbr.rel (%p4062) target = $region88
        $region87: #{tpu_custom_call.1} parent=79 // pred_region
          %s4066 = ssub.s32 4096, 4096
          %4067 = vsyncadd %s4058, %s4066
          %s4068 = smul.addr %s32, 32
          %s4069 = smul.addr %s4068, 128
          %s4070 = scalar_lea.hbm %s15, %s4069
          %s4071 = sshll.u32 %s4061, 4
          %s4072 = int_to_ptr.vmem [resolvable:$true] %s4071
          %4077 = dma.vmem_to_hbm [thread:$0]  %s4072, 4096, %s4070, %s4058, 128, 128, 8
        $region88: #{tpu_custom_call.1} parent=79 // pred_fallthru
          _
      $region80: #{tpu_custom_call.1} parent=5 // pred_fallthru
        _
      %p4078 = scmp.le.s32.totalorder 2, %s27
      // Predicated region
      $region89: #{tpu_custom_call.1} parent=5 // pred_check
        %p4079 = pneg %p4078
      $region90: #{tpu_custom_call.1} parent=5 // pred_check_branch
        %4081 = sbr.rel (%p4079) target = $region92
      $region91: #{tpu_custom_call.1} parent=5 // pred_region
        %s4082 = ssub.s32 %s27, 2
        // Predicated region
        $region93: #{tpu_custom_call.1} parent=91 // pred_check
          %p4083 = pneg %p376
        $region94: #{tpu_custom_call.1} parent=91 // pred_check_branch
          %4085 = sbr.rel (%p4083) target = $region96
        $region95: #{tpu_custom_call.1} parent=91 // pred_region
          %s4086 = sand.u32 %s361, 1
          %s4087 = scalar_lea.sflag [#allocation4], %s4086
          %s4088 = sand.u32 %s361, 1
          %s4089 = smul.addr %s4088, 256
          %s4090 = scalar_lea.vmem [#allocation5], %s4089
          %4091 = dma.done %s4087, 4096
        $region96: #{tpu_custom_call.1} parent=91 // pred_fallthru
          _
      $region92: #{tpu_custom_call.1} parent=5 // pred_fallthru
        _
    $region6: #{tpu_custom_call.1} parent=1 // loop_footer
      %s31 = sadd.s32 1, %s27
    $region7: #{tpu_custom_call.1} parent=1 // loop_footer_branch
      %26 = sbr.rel target = $region3
    $region8: #{tpu_custom_call.1} parent=1 // loop_exit
      _
    %4092 = vsyncpa [#allocation3], 1
    %s4093 = scalar_lea.sflag [#allocation3], 1
    %4094 = vsyncpa %s4093, 1
    %4095 = vsyncpa [#allocation4], 1
    %s4096 = scalar_lea.sflag [#allocation4], 1
    %4097 = vsyncpa %s4096, 1

</llo_original>
